<compile_context>
chip_gen: v6e
topology: v6e:2x2x1
jax: 0.10.0
libtpu: 0.0.40
codegen_flags: <defaults>
</compile_context>

<pallas_src>
import functools
import math

import jax
import jax.numpy as jnp
import numpy as np
from jax.experimental import pallas as pl
from jax.experimental.pallas import tpu as pltpu

LANE = 128  # lane-dense channel padding multiple


def _rup(n, m=LANE):
    return -(-n // m) * m


def _elu(x):
    # ELU with alpha = 1.0 (PyTorch default): x if x > 0 else exp(x) - 1
    return jnp.where(x > 0.0, x, jnp.exp(jnp.minimum(x, 0.0)) - 1.0)


# ---------------------------------------------------------------------------
# Padding math (faithful port of audiocraft pad1d / get_extra_padding_for_conv1d)
# ---------------------------------------------------------------------------
def _conv_pads(T, k, stride, dilation, causal):
    k_eff = (k - 1) * dilation + 1
    padding_total = k_eff - stride
    n_frames = (T - k_eff + padding_total) / stride + 1
    ideal_length = (math.ceil(n_frames) - 1) * stride + (k_eff - padding_total)
    extra_padding = ideal_length - T
    if causal:
        return padding_total, extra_padding
    pad_r = padding_total // 2
    pad_l = padding_total - pad_r
    return pad_l, pad_r + extra_padding


def _pad1d_btc(x, pad_left, pad_right, mode):
    """x: (B, T, C). Faithful port of audiocraft pad1d (reflect small-length handling)."""
    T = x.shape[1]
    if mode == "reflect":
        max_pad = max(pad_left, pad_right)
        extra = 0
        if T <= max_pad:
            extra = max_pad - T + 1
            x = jnp.pad(x, ((0, 0), (0, extra), (0, 0)))
        padded = jnp.pad(x, ((0, 0), (pad_left, pad_right), (0, 0)), mode="reflect")
        end = padded.shape[1] - extra
        return padded[:, :end, :]
    return jnp.pad(x, ((0, 0), (pad_left, pad_right), (0, 0)))


# ---------------------------------------------------------------------------
# Pallas kernels
# ---------------------------------------------------------------------------
def _conv_kernel(x_ref, w_ref, b_ref, o_ref, *, taps, dil, apply_elu):
    """Fused (optional) ELU + tap-loop conv + bias for one batch item.

    x_ref: (1, L, Kin)   padded activations (stride already folded by polyphase)
    w_ref: (taps, Kin, Cout_p), b_ref: (1, Cout_p), o_ref: (1, T_out, Cout_p)
    """
    t_out = o_ref.shape[1]
    cout = o_ref.shape[2]
    x = x_ref[0]                      # (L, Kin)
    if apply_elu:
        x = _elu(x)                   # ELU once per element (EUP exp, cheap)
    # Bias folded into the accumulator init (saves one full-tile add at the end).
    acc = jnp.broadcast_to(b_ref[...].astype(jnp.float32), (t_out, cout))
    for j in range(taps):             # static unrolled tap loop, one MXU matmul per tap
        acc = acc + jnp.dot(x[j * dil:j * dil + t_out, :], w_ref[j],
                            preferred_element_type=jnp.float32)
    o_ref[0] = acc


def _resblock_kernel(x_ref, w1_ref, b1_ref, w2_ref, b2_ref, o_ref, *, k1, d1, pad_l):
    """Fused SEANetResnetBlock (true_skip): y = x + conv2(ELU(conv1(ELU(x)))).

    x_ref: (1, L, Cp) raw (pre-ELU) input, already reflect-padded for conv1.
    The hidden activation stays in VMEM/vregs; only the final sum is stored.
    """
    t_out = o_ref.shape[1]
    hidden = w1_ref.shape[2]
    cout = o_ref.shape[2]
    x = x_ref[0]                      # raw padded input (also provides the skip)
    xe = _elu(x)
    h = jnp.broadcast_to(b1_ref[...].astype(jnp.float32), (t_out, hidden))
    for j in range(k1):
        h = h + jnp.dot(xe[j * d1:j * d1 + t_out, :], w1_ref[j],
                        preferred_element_type=jnp.float32)
    h = _elu(h)
    y = jnp.dot(h, w2_ref[0], preferred_element_type=jnp.float32) + b2_ref[...]
    o_ref[0] = y + x[pad_l:pad_l + t_out, :]   # true-skip: raw (un-ELU'd) x


# ---------------------------------------------------------------------------
# Layer wrappers (reflect padding + polyphase reshape + pallas_call)
# ---------------------------------------------------------------------------
def conv_layer_pallas(x_btc, w_packed, b_packed, *, k, stride, dilation, apply_elu,
                      causal=False, pad_mode="reflect"):
    """x_btc: (B, T, Cin_p) lane-padded activations -> (B, T_out, Cout_p)."""
    B, T, cp = x_btc.shape
    k_eff = (k - 1) * dilation + 1
    pad_l, pad_r = _conv_pads(T, k, stride, dilation, causal)
    x_pad = _pad1d_btc(x_btc, pad_l, pad_r, pad_mode)
    L = x_pad.shape[1]
    t_out = (L - k_eff) // stride + 1

    if stride > 1:
        # Polyphase: stride-s conv == ceil(k/s) stride-1 taps over s interleaved
        # channel groups.  The reshape below is the only data-layout change and is
        # done once per layer in the wrapper (no in-kernel strided loads).
        assert dilation == 1
        lc = -(-L // stride) * stride
        if lc > L:
            x_pad = jnp.pad(x_pad, ((0, 0), (0, lc - L), (0, 0)))
        x_pad = x_pad.reshape(B, lc // stride, stride * cp)
        dil = 1
    else:
        dil = dilation

    taps, kin, cout_p = w_packed.shape
    Lk = x_pad.shape[1]
    assert x_pad.shape[2] == kin

    flops = 2 * B * t_out * kin * cout_p * taps
    transcend = B * Lk * kin if apply_elu else 0
    bytes_acc = 4 * (x_pad.size + w_packed.size + b_packed.size + B * t_out * cout_p)

    return pl.pallas_call(
        functools.partial(_conv_kernel, taps=taps, dil=dil, apply_elu=apply_elu),
        grid=(B,),
        in_specs=[
            pl.BlockSpec((1, Lk, kin), lambda b: (b, 0, 0)),
            pl.BlockSpec((taps, kin, cout_p), lambda b: (0, 0, 0)),
            pl.BlockSpec((1, cout_p), lambda b: (0, 0)),
        ],
        out_specs=pl.BlockSpec((1, t_out, cout_p), lambda b: (b, 0, 0)),
        out_shape=jax.ShapeDtypeStruct((B, t_out, cout_p), jnp.float32),
        compiler_params=pltpu.CompilerParams(dimension_semantics=("parallel",)),
        cost_estimate=pl.CostEstimate(flops=int(flops), transcendentals=int(transcend),
                                      bytes_accessed=int(bytes_acc)),
    )(x_pad, w_packed, b_packed)


def resblock_pallas(x_btc, w1, b1, w2, b2, *, k1, d1, causal=False, pad_mode="reflect"):
    """Fused SEANet residual block. x_btc: (B, T, Cp) -> (B, T, Cp)."""
    B, T, cp = x_btc.shape
    pad_l, pad_r = _conv_pads(T, k1, 1, d1, causal)
    x_pad = _pad1d_btc(x_btc, pad_l, pad_r, pad_mode)
    L = x_pad.shape[1]
    hp = w1.shape[2]
    cout_p = w2.shape[2]

    flops = 2 * B * T * (cp * hp * k1 + hp * cout_p)
    transcend = B * (L * cp + T * hp)
    bytes_acc = 4 * (x_pad.size + w1.size + b1.size + w2.size + b2.size + B * T * cout_p)

    return pl.pallas_call(
        functools.partial(_resblock_kernel, k1=k1, d1=d1, pad_l=pad_l),
        grid=(B,),
        in_specs=[
            pl.BlockSpec((1, L, cp), lambda b: (b, 0, 0)),
            pl.BlockSpec((k1, cp, hp), lambda b: (0, 0, 0)),
            pl.BlockSpec((1, hp), lambda b: (0, 0)),
            pl.BlockSpec((1, hp, cout_p), lambda b: (0, 0, 0)),
            pl.BlockSpec((1, cout_p), lambda b: (0, 0)),
        ],
        out_specs=pl.BlockSpec((1, T, cout_p), lambda b: (b, 0, 0)),
        out_shape=jax.ShapeDtypeStruct((B, T, cout_p), jnp.float32),
        compiler_params=pltpu.CompilerParams(dimension_semantics=("parallel",)),
        cost_estimate=pl.CostEstimate(flops=int(flops), transcendentals=int(transcend),
                                      bytes_accessed=int(bytes_acc)),
    )(x_pad, w1, b1, w2, b2)


# ---------------------------------------------------------------------------
# Parameter construction (weights pre-packed once, kernel-ready)
# ---------------------------------------------------------------------------
def _init_conv_params(key, cin, cout, k):
    kw, kb = jax.random.split(key)
    scale = 1.0 / np.sqrt(cin * k)
    w = jax.random.uniform(kw, (cout, cin, k), minval=-scale, maxval=scale, dtype=jnp.float32)
    b = jax.random.uniform(kb, (cout,), minval=-scale, maxval=scale, dtype=jnp.float32)
    return w, b


def _prep_conv(w, b, stride=1):
    """(Cout, Cin, K) torch layout -> lane-padded, polyphase-packed kernel weights."""
    cout, cin, k = w.shape
    cin_p, cout_p = _rup(cin), _rup(cout)
    wt = jnp.transpose(w, (2, 1, 0))                              # (K, Cin, Cout)
    wt = jnp.pad(wt, ((0, 0), (0, cin_p - cin), (0, cout_p - cout)))
    if stride > 1:
        taps = -(-k // stride)                                    # ceil(k / stride)
        wt = jnp.pad(wt, ((0, taps * stride - k), (0, 0), (0, 0)))
        wt = wt.reshape(taps, stride * cin_p, cout_p)             # polyphase pack
    bp = jnp.pad(b.reshape(1, cout), ((0, 0), (0, cout_p - cout)))
    return wt, bp


def build_seanet_encoder_params(key, *, channels=1, dimension=16, n_filters=4,
                                n_residual_layers=1, ratios=(4, 2), kernel_size=7,
                                last_kernel_size=7, residual_kernel_size=3,
                                dilation_base=2, compress=2):
    # norm='none', causal=False, pad_mode='reflect', true_skip=True, lstm=0
    enc_ratios = list(reversed(list(ratios)))
    keys = iter(jax.random.split(key, 64))
    layers = []
    mult = 1

    def conv_layer(kk, cin, cout, ksz, stride, elu):
        w, b = _init_conv_params(kk, cin, cout, ksz)
        wp, bp = _prep_conv(w, b, stride)
        return dict(type="conv", w=wp, b=bp, w_raw=w, b_raw=b,
                    k=ksz, stride=stride, dilation=1, elu=elu)

    layers.append(conv_layer(next(keys), channels, mult * n_filters, kernel_size, 1, False))
    for ratio in enc_ratios:
        dim = mult * n_filters
        hidden = dim // compress
        for j in range(n_residual_layers):
            w1, b1 = _init_conv_params(next(keys), dim, hidden, residual_kernel_size)
            w2, b2 = _init_conv_params(next(keys), hidden, dim, 1)
            w1p, b1p = _prep_conv(w1, b1, 1)
            w2p, b2p = _prep_conv(w2, b2, 1)
            layers.append(dict(type="resblock", w1=w1p, b1=b1p, w2=w2p, b2=b2p,
                               w1_raw=w1, b1_raw=b1, w2_raw=w2, b2_raw=b2,
                               k1=residual_kernel_size, d1=dilation_base ** j))
        layers.append(conv_layer(next(keys), dim, mult * 2 * n_filters, ratio * 2, ratio, True))
        mult *= 2
    layers.append(conv_layer(next(keys), mult * n_filters, dimension, last_kernel_size, 1, True))
    return layers


# ---------------------------------------------------------------------------
# Forward passes
# ---------------------------------------------------------------------------
def seanet_encoder_forward(x_bct, layers, dimension):
    """Input/output in PyTorch NCT layout; internal compute is (B, T, C_padded)."""
    B, C, T = x_bct.shape
    x = jnp.transpose(x_bct, (0, 2, 1)).astype(jnp.float32)
    x = jnp.pad(x, ((0, 0), (0, 0), (0, _rup(C) - C)))           # lane-dense channels
    # TODO(synk): for realistic audio lengths the first layer's input could keep a
    # narrow channel pad (channels -> 8) instead of 128 to avoid inflating the raw
    # input DMA; negligible at the demo size so the proven lane-dense path is kept.
    for lyr in layers:
        if lyr["type"] == "conv":
            x = conv_layer_pallas(x, lyr["w"], lyr["b"], k=lyr["k"], stride=lyr["stride"],
                                  dilation=lyr["dilation"], apply_elu=lyr["elu"])
        else:
            x = resblock_pallas(x, lyr["w1"], lyr["b1"], lyr["w2"], lyr["b2"],
                                k1=lyr["k1"], d1=lyr["d1"])
    # TODO(synk): fusing the whole encoder into a single pallas_call (reflect padding
    # done in-kernel) would also keep the tiny inter-layer activations out of HBM.
    return jnp.transpose(x[:, :, :dimension], (0, 2, 1))


# Pure-JAX reference (high-precision einsum) for an in-script numerical check.
def _ref_streamable_conv1d(x_btc, w, b, *, stride=1, dilation=1, causal=False,
                           pad_mode="reflect"):
    B, T, _ = x_btc.shape
    cout, cin, k = w.shape
    k_eff = (k - 1) * dilation + 1
    pad_l, pad_r = _conv_pads(T, k, stride, dilation, causal)
    xp = _pad1d_btc(x_btc, pad_l, pad_r, pad_mode)
    L = xp.shape[1]
    t_out = (L - k_eff) // stride + 1
    idx = np.arange(t_out)[:, None] * stride + np.arange(k)[None, :] * dilation
    xc = xp[:, idx, :]                                            # (B, t_out, k, Cin)
    out = jnp.einsum("btkc,ock->bto", xc, w, precision=jax.lax.Precision.HIGHEST)
    return out + b.reshape(1, 1, cout)


def seanet_encoder_reference(x_bct, layers):
    x = jnp.transpose(x_bct, (0, 2, 1)).astype(jnp.float32)
    for lyr in layers:
        if lyr["type"] == "conv":
            xin = _elu(x) if lyr["elu"] else x
            x = _ref_streamable_conv1d(xin, lyr["w_raw"], lyr["b_raw"],
                                       stride=lyr["stride"], dilation=lyr["dilation"])
        else:
            h = _ref_streamable_conv1d(_elu(x), lyr["w1_raw"], lyr["b1_raw"],
                                       stride=1, dilation=lyr["d1"])
            y = _ref_streamable_conv1d(_elu(h), lyr["w2_raw"], lyr["b2_raw"],
                                       stride=1, dilation=1)
            x = x + y
    return jnp.transpose(x, (0, 2, 1))


# TODO(synk): LSTM tail (lstm>0) and weight_norm/group-norm variants are not exercised
# by the default config (lstm=0, norm='none') and are not implemented.

if __name__ == "__main__":
    key = jax.random.PRNGKey(0)
    k_params, k_input = jax.random.split(key)

    # Small config: channels=1, dimension=16, n_filters=4, n_residual_layers=1,
    # ratios=[4, 2] -> encoder downsamples by 2 then 4 (hop_length = 8).
    layers = build_seanet_encoder_params(
        k_params, channels=1, dimension=16, n_filters=4, n_residual_layers=1,
        ratios=(4, 2), kernel_size=7, last_kernel_size=7,
        residual_kernel_size=3, dilation_base=2, compress=2)

    B, C, T = 2, 1, 64
    x = jax.random.normal(k_input, (B, C, T), dtype=jnp.float32)

    fwd = jax.jit(functools.partial(seanet_encoder_forward, layers=layers, dimension=16))
    out = jax.block_until_ready(fwd(x))

    expected = (B, 16, T // 8)  # (batch, dimension, T / hop_length)
    assert out.shape == expected, (out.shape, expected)
    assert bool(jnp.all(jnp.isfinite(out)))

    ref = jax.block_until_ready(seanet_encoder_reference(x, layers))
    np.testing.assert_allclose(np.asarray(out), np.asarray(ref), atol=5e-2, rtol=5e-2)

    print("KERNEL_OK")
</pallas_src>

<mosaic_0001>
module attributes {stable_mosaic.version = 11 : i64} {
  func.func @_conv_kernel(%arg0: i32, %arg1: memref<1x70x128xf32, #tpu.memory_space<vmem>>, %arg2: memref<7x128x128xf32, #tpu.memory_space<vmem>>, %arg3: memref<1x128xf32, #tpu.memory_space<vmem>>, %arg4: memref<1x64x128xf32, #tpu.memory_space<vmem>>) attributes {dimension_semantics = [#tpu.dimension_semantics<parallel>], iteration_bounds = array<i64: 2>, scalar_prefetch = 0 : i64, scratch_operands = 0 : i64, tpu.core_type = #tpu.core_type<tc>, window_params = [{transform_indices = @transform_0, window_bounds = array<i64: 1, 70, 128>}, {pipeline_mode = #tpu.pipeline_mode<synchronous>, transform_indices = @transform_1, window_bounds = array<i64: 7, 128, 128>}, {pipeline_mode = #tpu.pipeline_mode<synchronous>, transform_indices = @transform_2, window_bounds = array<i64: 1, 128>}, {transform_indices = @transform_3, window_bounds = array<i64: 1, 64, 128>}]} {
    %c0 = arith.constant 0 : index
    %c0_0 = arith.constant 0 : index
    %c0_1 = arith.constant 0 : index
    %0 = vector.load %arg1[%c0, %c0_0, %c0_1] : memref<1x70x128xf32, #tpu.memory_space<vmem>>, vector<1x70x128xf32>
    %1 = vector.shape_cast %0 : vector<1x70x128xf32> to vector<70x128xf32>
    %c0_2 = arith.constant 0 : index
    %c0_3 = arith.constant 0 : index
    %2 = vector.load %arg3[%c0_2, %c0_3] : memref<1x128xf32, #tpu.memory_space<vmem>>, vector<1x128xf32>
    %3 = vector.shape_cast %2 : vector<1x128xf32> to vector<1x128xf32>
    %4 = vector.broadcast %3 : vector<1x128xf32> to vector<64x128xf32>
    %5 = vector.extract_strided_slice %1 {offsets = [0, 0], sizes = [64, 128], strides = [1, 1]} : vector<70x128xf32> to vector<64x128xf32>
    %c0_4 = arith.constant 0 : index
    %c0_5 = arith.constant 0 : index
    %c0_6 = arith.constant 0 : index
    %6 = vector.load %arg2[%c0_4, %c0_5, %c0_6] : memref<7x128x128xf32, #tpu.memory_space<vmem>>, vector<1x128x128xf32>
    %7 = vector.shape_cast %6 : vector<1x128x128xf32> to vector<128x128xf32>
    %cst = arith.constant dense<0.000000e+00> : vector<64x128xf32>
    %8 = tpu.matmul %5, %7, %cst {dimension_numbers = #tpu.dot_dimension_numbers<[1], [0], [0], [1], [0, 0, 1, 1], [], []>} : vector<64x128xf32>, vector<128x128xf32>, vector<64x128xf32> -> vector<64x128xf32>
    %9 = arith.addf %4, %8 : vector<64x128xf32>
    %10 = vector.extract_strided_slice %1 {offsets = [1, 0], sizes = [64, 128], strides = [1, 1]} : vector<70x128xf32> to vector<64x128xf32>
    %c1 = arith.constant 1 : index
    %c0_7 = arith.constant 0 : index
    %c0_8 = arith.constant 0 : index
    %11 = vector.load %arg2[%c1, %c0_7, %c0_8] : memref<7x128x128xf32, #tpu.memory_space<vmem>>, vector<1x128x128xf32>
    %12 = vector.shape_cast %11 : vector<1x128x128xf32> to vector<128x128xf32>
    %cst_9 = arith.constant dense<0.000000e+00> : vector<64x128xf32>
    %13 = tpu.matmul %10, %12, %cst_9 {dimension_numbers = #tpu.dot_dimension_numbers<[1], [0], [0], [1], [0, 0, 1, 1], [], []>} : vector<64x128xf32>, vector<128x128xf32>, vector<64x128xf32> -> vector<64x128xf32>
    %14 = arith.addf %9, %13 : vector<64x128xf32>
    %15 = vector.extract_strided_slice %1 {offsets = [2, 0], sizes = [64, 128], strides = [1, 1]} : vector<70x128xf32> to vector<64x128xf32>
    %c2 = arith.constant 2 : index
    %c0_10 = arith.constant 0 : index
    %c0_11 = arith.constant 0 : index
    %16 = vector.load %arg2[%c2, %c0_10, %c0_11] : memref<7x128x128xf32, #tpu.memory_space<vmem>>, vector<1x128x128xf32>
    %17 = vector.shape_cast %16 : vector<1x128x128xf32> to vector<128x128xf32>
    %cst_12 = arith.constant dense<0.000000e+00> : vector<64x128xf32>
    %18 = tpu.matmul %15, %17, %cst_12 {dimension_numbers = #tpu.dot_dimension_numbers<[1], [0], [0], [1], [0, 0, 1, 1], [], []>} : vector<64x128xf32>, vector<128x128xf32>, vector<64x128xf32> -> vector<64x128xf32>
    %19 = arith.addf %14, %18 : vector<64x128xf32>
    %20 = vector.extract_strided_slice %1 {offsets = [3, 0], sizes = [64, 128], strides = [1, 1]} : vector<70x128xf32> to vector<64x128xf32>
    %c3 = arith.constant 3 : index
    %c0_13 = arith.constant 0 : index
    %c0_14 = arith.constant 0 : index
    %21 = vector.load %arg2[%c3, %c0_13, %c0_14] : memref<7x128x128xf32, #tpu.memory_space<vmem>>, vector<1x128x128xf32>
    %22 = vector.shape_cast %21 : vector<1x128x128xf32> to vector<128x128xf32>
    %cst_15 = arith.constant dense<0.000000e+00> : vector<64x128xf32>
    %23 = tpu.matmul %20, %22, %cst_15 {dimension_numbers = #tpu.dot_dimension_numbers<[1], [0], [0], [1], [0, 0, 1, 1], [], []>} : vector<64x128xf32>, vector<128x128xf32>, vector<64x128xf32> -> vector<64x128xf32>
    %24 = arith.addf %19, %23 : vector<64x128xf32>
    %25 = vector.extract_strided_slice %1 {offsets = [4, 0], sizes = [64, 128], strides = [1, 1]} : vector<70x128xf32> to vector<64x128xf32>
    %c4 = arith.constant 4 : index
    %c0_16 = arith.constant 0 : index
    %c0_17 = arith.constant 0 : index
    %26 = vector.load %arg2[%c4, %c0_16, %c0_17] : memref<7x128x128xf32, #tpu.memory_space<vmem>>, vector<1x128x128xf32>
    %27 = vector.shape_cast %26 : vector<1x128x128xf32> to vector<128x128xf32>
    %cst_18 = arith.constant dense<0.000000e+00> : vector<64x128xf32>
    %28 = tpu.matmul %25, %27, %cst_18 {dimension_numbers = #tpu.dot_dimension_numbers<[1], [0], [0], [1], [0, 0, 1, 1], [], []>} : vector<64x128xf32>, vector<128x128xf32>, vector<64x128xf32> -> vector<64x128xf32>
    %29 = arith.addf %24, %28 : vector<64x128xf32>
    %30 = vector.extract_strided_slice %1 {offsets = [5, 0], sizes = [64, 128], strides = [1, 1]} : vector<70x128xf32> to vector<64x128xf32>
    %c5 = arith.constant 5 : index
    %c0_19 = arith.constant 0 : index
    %c0_20 = arith.constant 0 : index
    %31 = vector.load %arg2[%c5, %c0_19, %c0_20] : memref<7x128x128xf32, #tpu.memory_space<vmem>>, vector<1x128x128xf32>
    %32 = vector.shape_cast %31 : vector<1x128x128xf32> to vector<128x128xf32>
    %cst_21 = arith.constant dense<0.000000e+00> : vector<64x128xf32>
    %33 = tpu.matmul %30, %32, %cst_21 {dimension_numbers = #tpu.dot_dimension_numbers<[1], [0], [0], [1], [0, 0, 1, 1], [], []>} : vector<64x128xf32>, vector<128x128xf32>, vector<64x128xf32> -> vector<64x128xf32>
    %34 = arith.addf %29, %33 : vector<64x128xf32>
    %35 = vector.extract_strided_slice %1 {offsets = [6, 0], sizes = [64, 128], strides = [1, 1]} : vector<70x128xf32> to vector<64x128xf32>
    %c6 = arith.constant 6 : index
    %c0_22 = arith.constant 0 : index
    %c0_23 = arith.constant 0 : index
    %36 = vector.load %arg2[%c6, %c0_22, %c0_23] : memref<7x128x128xf32, #tpu.memory_space<vmem>>, vector<1x128x128xf32>
    %37 = vector.shape_cast %36 : vector<1x128x128xf32> to vector<128x128xf32>
    %cst_24 = arith.constant dense<0.000000e+00> : vector<64x128xf32>
    %38 = tpu.matmul %35, %37, %cst_24 {dimension_numbers = #tpu.dot_dimension_numbers<[1], [0], [0], [1], [0, 0, 1, 1], [], []>} : vector<64x128xf32>, vector<128x128xf32>, vector<64x128xf32> -> vector<64x128xf32>
    %39 = arith.addf %34, %38 : vector<64x128xf32>
    %c0_25 = arith.constant 0 : index
    %c0_26 = arith.constant 0 : index
    %c0_27 = arith.constant 0 : index
    %40 = vector.load %arg4[%c0_25, %c0_26, %c0_27] : memref<1x64x128xf32, #tpu.memory_space<vmem>>, vector<1x64x128xf32>
    %41 = vector.shape_cast %40 : vector<1x64x128xf32> to vector<64x128xf32>
    %42 = vector.shape_cast %39 : vector<64x128xf32> to vector<1x64x128xf32>
    tpu.vector_store %arg4[%c0_25, %c0_26, %c0_27], %42 {strides = array<i32>} : memref<1x64x128xf32, #tpu.memory_space<vmem>>, vector<1x64x128xf32>,
    return
  }
  func.func @transform_0(%arg0: i32) -> (i32, i32, i32) {
    %c0_i32 = arith.constant 0 : i32
    %c0_i32_0 = arith.constant 0 : i32
    %c0_i32_1 = arith.constant 0 : i32
    return %arg0, %c0_i32, %c0_i32_0 : i32, i32, i32
  }
  func.func @transform_1(%arg0: i32) -> (i32, i32, i32) {
    %c0_i32 = arith.constant 0 : i32
    %c0_i32_0 = arith.constant 0 : i32
    %c0_i32_1 = arith.constant 0 : i32
    %c0_i32_2 = arith.constant 0 : i32
    return %c0_i32, %c0_i32_0, %c0_i32_1 : i32, i32, i32
  }
  func.func @transform_2(%arg0: i32) -> (i32, i32) {
    %c0_i32 = arith.constant 0 : i32
    %c0_i32_0 = arith.constant 0 : i32
    %c0_i32_1 = arith.constant 0 : i32
    return %c0_i32, %c0_i32_0 : i32, i32
  }
  func.func @transform_3(%arg0: i32) -> (i32, i32, i32) {
    %c0_i32 = arith.constant 0 : i32
    %c0_i32_0 = arith.constant 0 : i32
    %c0_i32_1 = arith.constant 0 : i32
    return %arg0, %c0_i32, %c0_i32_0 : i32, i32, i32
  }
}

module attributes {stable_mosaic.version = 11 : i64} {
  func.func @_resblock_kernel(%arg0: i32, %arg1: memref<1x66x128xf32, #tpu.memory_space<vmem>>, %arg2: memref<3x128x128xf32, #tpu.memory_space<vmem>>, %arg3: memref<1x128xf32, #tpu.memory_space<vmem>>, %arg4: memref<1x128x128xf32, #tpu.memory_space<vmem>>, %arg5: memref<1x128xf32, #tpu.memory_space<vmem>>, %arg6: memref<1x64x128xf32, #tpu.memory_space<vmem>>) attributes {dimension_semantics = [#tpu.dimension_semantics<parallel>], iteration_bounds = array<i64: 2>, scalar_prefetch = 0 : i64, scratch_operands = 0 : i64, tpu.core_type = #tpu.core_type<tc>, window_params = [{transform_indices = @transform_0, window_bounds = array<i64: 1, 66, 128>}, {pipeline_mode = #tpu.pipeline_mode<synchronous>, transform_indices = @transform_1, window_bounds = array<i64: 3, 128, 128>}, {pipeline_mode = #tpu.pipeline_mode<synchronous>, transform_indices = @transform_2, window_bounds = array<i64: 1, 128>}, {pipeline_mode = #tpu.pipeline_mode<synchronous>, transform_indices = @transform_3, window_bounds = array<i64: 1, 128, 128>}, {pipeline_mode = #tpu.pipeline_mode<synchronous>, transform_indices = @transform_4, window_bounds = array<i64: 1, 128>}, {transform_indices = @transform_5, window_bounds = array<i64: 1, 64, 128>}]} {
    %c0 = arith.constant 0 : index
    %c0_0 = arith.constant 0 : index
    %c0_1 = arith.constant 0 : index
    %0 = vector.load %arg1[%c0, %c0_0, %c0_1] : memref<1x66x128xf32, #tpu.memory_space<vmem>>, vector<1x66x128xf32>
    %1 = vector.shape_cast %0 : vector<1x66x128xf32> to vector<66x128xf32>
    %cst = arith.constant 0.000000e+00 : f32
    %2 = vector.broadcast %cst : f32 to vector<66x128xf32>
    %3 = arith.cmpf ogt, %1, %2 : vector<66x128xf32>
    %cst_2 = arith.constant 0.000000e+00 : f32
    %4 = vector.broadcast %cst_2 : f32 to vector<66x128xf32>
    %5 = arith.minimumf %1, %4 : vector<66x128xf32>
    %6 = math.exp %5 : vector<66x128xf32>
    %cst_3 = arith.constant 1.000000e+00 : f32
    %7 = vector.broadcast %cst_3 : f32 to vector<66x128xf32>
    %8 = arith.subf %6, %7 : vector<66x128xf32>
    %9 = arith.select %3, %1, %8 : vector<66x128xi1>, vector<66x128xf32>
    %c0_4 = arith.constant 0 : index
    %c0_5 = arith.constant 0 : index
    %10 = vector.load %arg3[%c0_4, %c0_5] : memref<1x128xf32, #tpu.memory_space<vmem>>, vector<1x128xf32>
    %11 = vector.shape_cast %10 : vector<1x128xf32> to vector<1x128xf32>
    %12 = vector.broadcast %11 : vector<1x128xf32> to vector<64x128xf32>
    %13 = vector.extract_strided_slice %9 {offsets = [0, 0], sizes = [64, 128], strides = [1, 1]} : vector<66x128xf32> to vector<64x128xf32>
    %c0_6 = arith.constant 0 : index
    %c0_7 = arith.constant 0 : index
    %c0_8 = arith.constant 0 : index
    %14 = vector.load %arg2[%c0_6, %c0_7, %c0_8] : memref<3x128x128xf32, #tpu.memory_space<vmem>>, vector<1x128x128xf32>
    %15 = vector.shape_cast %14 : vector<1x128x128xf32> to vector<128x128xf32>
    %cst_9 = arith.constant dense<0.000000e+00> : vector<64x128xf32>
    %16 = tpu.matmul %13, %15, %cst_9 {dimension_numbers = #tpu.dot_dimension_numbers<[1], [0], [0], [1], [0, 0, 1, 1], [], []>} : vector<64x128xf32>, vector<128x128xf32>, vector<64x128xf32> -> vector<64x128xf32>
    %17 = arith.addf %12, %16 : vector<64x128xf32>
    %18 = vector.extract_strided_slice %9 {offsets = [1, 0], sizes = [64, 128], strides = [1, 1]} : vector<66x128xf32> to vector<64x128xf32>
    %c1 = arith.constant 1 : index
    %c0_10 = arith.constant 0 : index
    %c0_11 = arith.constant 0 : index
    %19 = vector.load %arg2[%c1, %c0_10, %c0_11] : memref<3x128x128xf32, #tpu.memory_space<vmem>>, vector<1x128x128xf32>
    %20 = vector.shape_cast %19 : vector<1x128x128xf32> to vector<128x128xf32>
    %cst_12 = arith.constant dense<0.000000e+00> : vector<64x128xf32>
    %21 = tpu.matmul %18, %20, %cst_12 {dimension_numbers = #tpu.dot_dimension_numbers<[1], [0], [0], [1], [0, 0, 1, 1], [], []>} : vector<64x128xf32>, vector<128x128xf32>, vector<64x128xf32> -> vector<64x128xf32>
    %22 = arith.addf %17, %21 : vector<64x128xf32>
    %23 = vector.extract_strided_slice %9 {offsets = [2, 0], sizes = [64, 128], strides = [1, 1]} : vector<66x128xf32> to vector<64x128xf32>
    %c2 = arith.constant 2 : index
    %c0_13 = arith.constant 0 : index
    %c0_14 = arith.constant 0 : index
    %24 = vector.load %arg2[%c2, %c0_13, %c0_14] : memref<3x128x128xf32, #tpu.memory_space<vmem>>, vector<1x128x128xf32>
    %25 = vector.shape_cast %24 : vector<1x128x128xf32> to vector<128x128xf32>
    %cst_15 = arith.constant dense<0.000000e+00> : vector<64x128xf32>
    %26 = tpu.matmul %23, %25, %cst_15 {dimension_numbers = #tpu.dot_dimension_numbers<[1], [0], [0], [1], [0, 0, 1, 1], [], []>} : vector<64x128xf32>, vector<128x128xf32>, vector<64x128xf32> -> vector<64x128xf32>
    %27 = arith.addf %22, %26 : vector<64x128xf32>
    %cst_16 = arith.constant 0.000000e+00 : f32
    %28 = vector.broadcast %cst_16 : f32 to vector<64x128xf32>
    %29 = arith.cmpf ogt, %27, %28 : vector<64x128xf32>
    %cst_17 = arith.constant 0.000000e+00 : f32
    %30 = vector.broadcast %cst_17 : f32 to vector<64x128xf32>
    %31 = arith.minimumf %27, %30 : vector<64x128xf32>
    %32 = math.exp %31 : vector<64x128xf32>
    %cst_18 = arith.constant 1.000000e+00 : f32
    %33 = vector.broadcast %cst_18 : f32 to vector<64x128xf32>
    %34 = arith.subf %32, %33 : vector<64x128xf32>
    %35 = arith.select %29, %27, %34 : vector<64x128xi1>, vector<64x128xf32>
    %c0_19 = arith.constant 0 : index
    %c0_20 = arith.constant 0 : index
    %c0_21 = arith.constant 0 : index
    %36 = vector.load %arg4[%c0_19, %c0_20, %c0_21] : memref<1x128x128xf32, #tpu.memory_space<vmem>>, vector<1x128x128xf32>
    %37 = vector.shape_cast %36 : vector<1x128x128xf32> to vector<128x128xf32>
    %cst_22 = arith.constant dense<0.000000e+00> : vector<64x128xf32>
    %38 = tpu.matmul %35, %37, %cst_22 {dimension_numbers = #tpu.dot_dimension_numbers<[1], [0], [0], [1], [0, 0, 1, 1], [], []>} : vector<64x128xf32>, vector<128x128xf32>, vector<64x128xf32> -> vector<64x128xf32>
    %c0_23 = arith.constant 0 : index
    %c0_24 = arith.constant 0 : index
    %39 = vector.load %arg5[%c0_23, %c0_24] : memref<1x128xf32, #tpu.memory_space<vmem>>, vector<1x128xf32>
    %40 = vector.broadcast %39 : vector<1x128xf32> to vector<64x128xf32>
    %41 = arith.addf %38, %40 : vector<64x128xf32>
    %42 = vector.extract_strided_slice %1 {offsets = [1, 0], sizes = [64, 128], strides = [1, 1]} : vector<66x128xf32> to vector<64x128xf32>
    %43 = arith.addf %41, %42 : vector<64x128xf32>
    %c0_25 = arith.constant 0 : index
    %c0_26 = arith.constant 0 : index
    %c0_27 = arith.constant 0 : index
    %44 = vector.load %arg6[%c0_25, %c0_26, %c0_27] : memref<1x64x128xf32, #tpu.memory_space<vmem>>, vector<1x64x128xf32>
    %45 = vector.shape_cast %44 : vector<1x64x128xf32> to vector<64x128xf32>
    %46 = vector.shape_cast %43 : vector<64x128xf32> to vector<1x64x128xf32>
    tpu.vector_store %arg6[%c0_25, %c0_26, %c0_27], %46 {strides = array<i32>} : memref<1x64x128xf32, #tpu.memory_space<vmem>>, vector<1x64x128xf32>,
    return
  }
  func.func @transform_0(%arg0: i32) -> (i32, i32, i32) {
    %c0_i32 = arith.constant 0 : i32
    %c0_i32_0 = arith.constant 0 : i32
    %c0_i32_1 = arith.constant 0 : i32
    return %arg0, %c0_i32, %c0_i32_0 : i32, i32, i32
  }
  func.func @transform_1(%arg0: i32) -> (i32, i32, i32) {
    %c0_i32 = arith.constant 0 : i32
    %c0_i32_0 = arith.constant 0 : i32
    %c0_i32_1 = arith.constant 0 : i32
    %c0_i32_2 = arith.constant 0 : i32
    return %c0_i32, %c0_i32_0, %c0_i32_1 : i32, i32, i32
  }
  func.func @transform_2(%arg0: i32) -> (i32, i32) {
    %c0_i32 = arith.constant 0 : i32
    %c0_i32_0 = arith.constant 0 : i32
    %c0_i32_1 = arith.constant 0 : i32
    return %c0_i32, %c0_i32_0 : i32, i32
  }
  func.func @transform_3(%arg0: i32) -> (i32, i32, i32) {
    %c0_i32 = arith.constant 0 : i32
    %c0_i32_0 = arith.constant 0 : i32
    %c0_i32_1 = arith.constant 0 : i32
    %c0_i32_2 = arith.constant 0 : i32
    return %c0_i32, %c0_i32_0, %c0_i32_1 : i32, i32, i32
  }
  func.func @transform_4(%arg0: i32) -> (i32, i32) {
    %c0_i32 = arith.constant 0 : i32
    %c0_i32_0 = arith.constant 0 : i32
    %c0_i32_1 = arith.constant 0 : i32
    return %c0_i32, %c0_i32_0 : i32, i32
  }
  func.func @transform_5(%arg0: i32) -> (i32, i32, i32) {
    %c0_i32 = arith.constant 0 : i32
    %c0_i32_0 = arith.constant 0 : i32
    %c0_i32_1 = arith.constant 0 : i32
    return %arg0, %c0_i32, %c0_i32_0 : i32, i32, i32
  }
}

module attributes {stable_mosaic.version = 11 : i64} {
  func.func @_conv_kernel(%arg0: i32, %arg1: memref<1x33x256xf32, #tpu.memory_space<vmem>>, %arg2: memref<2x256x128xf32, #tpu.memory_space<vmem>>, %arg3: memref<1x128xf32, #tpu.memory_space<vmem>>, %arg4: memref<1x32x128xf32, #tpu.memory_space<vmem>>) attributes {dimension_semantics = [#tpu.dimension_semantics<parallel>], iteration_bounds = array<i64: 2>, scalar_prefetch = 0 : i64, scratch_operands = 0 : i64, tpu.core_type = #tpu.core_type<tc>, window_params = [{transform_indices = @transform_0, window_bounds = array<i64: 1, 33, 256>}, {pipeline_mode = #tpu.pipeline_mode<synchronous>, transform_indices = @transform_1, window_bounds = array<i64: 2, 256, 128>}, {pipeline_mode = #tpu.pipeline_mode<synchronous>, transform_indices = @transform_2, window_bounds = array<i64: 1, 128>}, {transform_indices = @transform_3, window_bounds = array<i64: 1, 32, 128>}]} {
    %c0 = arith.constant 0 : index
    %c0_0 = arith.constant 0 : index
    %c0_1 = arith.constant 0 : index
    %0 = vector.load %arg1[%c0, %c0_0, %c0_1] : memref<1x33x256xf32, #tpu.memory_space<vmem>>, vector<1x33x256xf32>
    %1 = vector.shape_cast %0 : vector<1x33x256xf32> to vector<33x256xf32>
    %cst = arith.constant 0.000000e+00 : f32
    %2 = vector.broadcast %cst : f32 to vector<33x256xf32>
    %3 = arith.cmpf ogt, %1, %2 : vector<33x256xf32>
    %cst_2 = arith.constant 0.000000e+00 : f32
    %4 = vector.broadcast %cst_2 : f32 to vector<33x256xf32>
    %5 = arith.minimumf %1, %4 : vector<33x256xf32>
    %6 = math.exp %5 : vector<33x256xf32>
    %cst_3 = arith.constant 1.000000e+00 : f32
    %7 = vector.broadcast %cst_3 : f32 to vector<33x256xf32>
    %8 = arith.subf %6, %7 : vector<33x256xf32>
    %9 = arith.select %3, %1, %8 : vector<33x256xi1>, vector<33x256xf32>
    %c0_4 = arith.constant 0 : index
    %c0_5 = arith.constant 0 : index
    %10 = vector.load %arg3[%c0_4, %c0_5] : memref<1x128xf32, #tpu.memory_space<vmem>>, vector<1x128xf32>
    %11 = vector.shape_cast %10 : vector<1x128xf32> to vector<1x128xf32>
    %12 = vector.broadcast %11 : vector<1x128xf32> to vector<32x128xf32>
    %13 = vector.extract_strided_slice %9 {offsets = [0, 0], sizes = [32, 256], strides = [1, 1]} : vector<33x256xf32> to vector<32x256xf32>
    %c0_6 = arith.constant 0 : index
    %c0_7 = arith.constant 0 : index
    %c0_8 = arith.constant 0 : index
    %14 = vector.load %arg2[%c0_6, %c0_7, %c0_8] : memref<2x256x128xf32, #tpu.memory_space<vmem>>, vector<1x256x128xf32>
    %15 = vector.shape_cast %14 : vector<1x256x128xf32> to vector<256x128xf32>
    %cst_9 = arith.constant dense<0.000000e+00> : vector<32x128xf32>
    %16 = tpu.matmul %13, %15, %cst_9 {dimension_numbers = #tpu.dot_dimension_numbers<[1], [0], [0], [1], [0, 0, 1, 1], [], []>} : vector<32x256xf32>, vector<256x128xf32>, vector<32x128xf32> -> vector<32x128xf32>
    %17 = arith.addf %12, %16 : vector<32x128xf32>
    %18 = vector.extract_strided_slice %9 {offsets = [1, 0], sizes = [32, 256], strides = [1, 1]} : vector<33x256xf32> to vector<32x256xf32>
    %c1 = arith.constant 1 : index
    %c0_10 = arith.constant 0 : index
    %c0_11 = arith.constant 0 : index
    %19 = vector.load %arg2[%c1, %c0_10, %c0_11] : memref<2x256x128xf32, #tpu.memory_space<vmem>>, vector<1x256x128xf32>
    %20 = vector.shape_cast %19 : vector<1x256x128xf32> to vector<256x128xf32>
    %cst_12 = arith.constant dense<0.000000e+00> : vector<32x128xf32>
    %21 = tpu.matmul %18, %20, %cst_12 {dimension_numbers = #tpu.dot_dimension_numbers<[1], [0], [0], [1], [0, 0, 1, 1], [], []>} : vector<32x256xf32>, vector<256x128xf32>, vector<32x128xf32> -> vector<32x128xf32>
    %22 = arith.addf %17, %21 : vector<32x128xf32>
    %c0_13 = arith.constant 0 : index
    %c0_14 = arith.constant 0 : index
    %c0_15 = arith.constant 0 : index
    %23 = vector.load %arg4[%c0_13, %c0_14, %c0_15] : memref<1x32x128xf32, #tpu.memory_space<vmem>>, vector<1x32x128xf32>
    %24 = vector.shape_cast %23 : vector<1x32x128xf32> to vector<32x128xf32>
    %25 = vector.shape_cast %22 : vector<32x128xf32> to vector<1x32x128xf32>
    tpu.vector_store %arg4[%c0_13, %c0_14, %c0_15], %25 {strides = array<i32>} : memref<1x32x128xf32, #tpu.memory_space<vmem>>, vector<1x32x128xf32>,
    return
  }
  func.func @transform_0(%arg0: i32) -> (i32, i32, i32) {
    %c0_i32 = arith.constant 0 : i32
    %c0_i32_0 = arith.constant 0 : i32
    %c0_i32_1 = arith.constant 0 : i32
    return %arg0, %c0_i32, %c0_i32_0 : i32, i32, i32
  }
  func.func @transform_1(%arg0: i32) -> (i32, i32, i32) {
    %c0_i32 = arith.constant 0 : i32
    %c0_i32_0 = arith.constant 0 : i32
    %c0_i32_1 = arith.constant 0 : i32
    %c0_i32_2 = arith.constant 0 : i32
    return %c0_i32, %c0_i32_0, %c0_i32_1 : i32, i32, i32
  }
  func.func @transform_2(%arg0: i32) -> (i32, i32) {
    %c0_i32 = arith.constant 0 : i32
    %c0_i32_0 = arith.constant 0 : i32
    %c0_i32_1 = arith.constant 0 : i32
    return %c0_i32, %c0_i32_0 : i32, i32
  }
  func.func @transform_3(%arg0: i32) -> (i32, i32, i32) {
    %c0_i32 = arith.constant 0 : i32
    %c0_i32_0 = arith.constant 0 : i32
    %c0_i32_1 = arith.constant 0 : i32
    return %arg0, %c0_i32, %c0_i32_0 : i32, i32, i32
  }
}

module attributes {stable_mosaic.version = 11 : i64} {
  func.func @_resblock_kernel(%arg0: i32, %arg1: memref<1x34x128xf32, #tpu.memory_space<vmem>>, %arg2: memref<3x128x128xf32, #tpu.memory_space<vmem>>, %arg3: memref<1x128xf32, #tpu.memory_space<vmem>>, %arg4: memref<1x128x128xf32, #tpu.memory_space<vmem>>, %arg5: memref<1x128xf32, #tpu.memory_space<vmem>>, %arg6: memref<1x32x128xf32, #tpu.memory_space<vmem>>) attributes {dimension_semantics = [#tpu.dimension_semantics<parallel>], iteration_bounds = array<i64: 2>, scalar_prefetch = 0 : i64, scratch_operands = 0 : i64, tpu.core_type = #tpu.core_type<tc>, window_params = [{transform_indices = @transform_0, window_bounds = array<i64: 1, 34, 128>}, {pipeline_mode = #tpu.pipeline_mode<synchronous>, transform_indices = @transform_1, window_bounds = array<i64: 3, 128, 128>}, {pipeline_mode = #tpu.pipeline_mode<synchronous>, transform_indices = @transform_2, window_bounds = array<i64: 1, 128>}, {pipeline_mode = #tpu.pipeline_mode<synchronous>, transform_indices = @transform_3, window_bounds = array<i64: 1, 128, 128>}, {pipeline_mode = #tpu.pipeline_mode<synchronous>, transform_indices = @transform_4, window_bounds = array<i64: 1, 128>}, {transform_indices = @transform_5, window_bounds = array<i64: 1, 32, 128>}]} {
    %c0 = arith.constant 0 : index
    %c0_0 = arith.constant 0 : index
    %c0_1 = arith.constant 0 : index
    %0 = vector.load %arg1[%c0, %c0_0, %c0_1] : memref<1x34x128xf32, #tpu.memory_space<vmem>>, vector<1x34x128xf32>
    %1 = vector.shape_cast %0 : vector<1x34x128xf32> to vector<34x128xf32>
    %cst = arith.constant 0.000000e+00 : f32
    %2 = vector.broadcast %cst : f32 to vector<34x128xf32>
    %3 = arith.cmpf ogt, %1, %2 : vector<34x128xf32>
    %cst_2 = arith.constant 0.000000e+00 : f32
    %4 = vector.broadcast %cst_2 : f32 to vector<34x128xf32>
    %5 = arith.minimumf %1, %4 : vector<34x128xf32>
    %6 = math.exp %5 : vector<34x128xf32>
    %cst_3 = arith.constant 1.000000e+00 : f32
    %7 = vector.broadcast %cst_3 : f32 to vector<34x128xf32>
    %8 = arith.subf %6, %7 : vector<34x128xf32>
    %9 = arith.select %3, %1, %8 : vector<34x128xi1>, vector<34x128xf32>
    %c0_4 = arith.constant 0 : index
    %c0_5 = arith.constant 0 : index
    %10 = vector.load %arg3[%c0_4, %c0_5] : memref<1x128xf32, #tpu.memory_space<vmem>>, vector<1x128xf32>
    %11 = vector.shape_cast %10 : vector<1x128xf32> to vector<1x128xf32>
    %12 = vector.broadcast %11 : vector<1x128xf32> to vector<32x128xf32>
    %13 = vector.extract_strided_slice %9 {offsets = [0, 0], sizes = [32, 128], strides = [1, 1]} : vector<34x128xf32> to vector<32x128xf32>
    %c0_6 = arith.constant 0 : index
    %c0_7 = arith.constant 0 : index
    %c0_8 = arith.constant 0 : index
    %14 = vector.load %arg2[%c0_6, %c0_7, %c0_8] : memref<3x128x128xf32, #tpu.memory_space<vmem>>, vector<1x128x128xf32>
    %15 = vector.shape_cast %14 : vector<1x128x128xf32> to vector<128x128xf32>
    %cst_9 = arith.constant dense<0.000000e+00> : vector<32x128xf32>
    %16 = tpu.matmul %13, %15, %cst_9 {dimension_numbers = #tpu.dot_dimension_numbers<[1], [0], [0], [1], [0, 0, 1, 1], [], []>} : vector<32x128xf32>, vector<128x128xf32>, vector<32x128xf32> -> vector<32x128xf32>
    %17 = arith.addf %12, %16 : vector<32x128xf32>
    %18 = vector.extract_strided_slice %9 {offsets = [1, 0], sizes = [32, 128], strides = [1, 1]} : vector<34x128xf32> to vector<32x128xf32>
    %c1 = arith.constant 1 : index
    %c0_10 = arith.constant 0 : index
    %c0_11 = arith.constant 0 : index
    %19 = vector.load %arg2[%c1, %c0_10, %c0_11] : memref<3x128x128xf32, #tpu.memory_space<vmem>>, vector<1x128x128xf32>
    %20 = vector.shape_cast %19 : vector<1x128x128xf32> to vector<128x128xf32>
    %cst_12 = arith.constant dense<0.000000e+00> : vector<32x128xf32>
    %21 = tpu.matmul %18, %20, %cst_12 {dimension_numbers = #tpu.dot_dimension_numbers<[1], [0], [0], [1], [0, 0, 1, 1], [], []>} : vector<32x128xf32>, vector<128x128xf32>, vector<32x128xf32> -> vector<32x128xf32>
    %22 = arith.addf %17, %21 : vector<32x128xf32>
    %23 = vector.extract_strided_slice %9 {offsets = [2, 0], sizes = [32, 128], strides = [1, 1]} : vector<34x128xf32> to vector<32x128xf32>
    %c2 = arith.constant 2 : index
    %c0_13 = arith.constant 0 : index
    %c0_14 = arith.constant 0 : index
    %24 = vector.load %arg2[%c2, %c0_13, %c0_14] : memref<3x128x128xf32, #tpu.memory_space<vmem>>, vector<1x128x128xf32>
    %25 = vector.shape_cast %24 : vector<1x128x128xf32> to vector<128x128xf32>
    %cst_15 = arith.constant dense<0.000000e+00> : vector<32x128xf32>
    %26 = tpu.matmul %23, %25, %cst_15 {dimension_numbers = #tpu.dot_dimension_numbers<[1], [0], [0], [1], [0, 0, 1, 1], [], []>} : vector<32x128xf32>, vector<128x128xf32>, vector<32x128xf32> -> vector<32x128xf32>
    %27 = arith.addf %22, %26 : vector<32x128xf32>
    %cst_16 = arith.constant 0.000000e+00 : f32
    %28 = vector.broadcast %cst_16 : f32 to vector<32x128xf32>
    %29 = arith.cmpf ogt, %27, %28 : vector<32x128xf32>
    %cst_17 = arith.constant 0.000000e+00 : f32
    %30 = vector.broadcast %cst_17 : f32 to vector<32x128xf32>
    %31 = arith.minimumf %27, %30 : vector<32x128xf32>
    %32 = math.exp %31 : vector<32x128xf32>
    %cst_18 = arith.constant 1.000000e+00 : f32
    %33 = vector.broadcast %cst_18 : f32 to vector<32x128xf32>
    %34 = arith.subf %32, %33 : vector<32x128xf32>
    %35 = arith.select %29, %27, %34 : vector<32x128xi1>, vector<32x128xf32>
    %c0_19 = arith.constant 0 : index
    %c0_20 = arith.constant 0 : index
    %c0_21 = arith.constant 0 : index
    %36 = vector.load %arg4[%c0_19, %c0_20, %c0_21] : memref<1x128x128xf32, #tpu.memory_space<vmem>>, vector<1x128x128xf32>
    %37 = vector.shape_cast %36 : vector<1x128x128xf32> to vector<128x128xf32>
    %cst_22 = arith.constant dense<0.000000e+00> : vector<32x128xf32>
    %38 = tpu.matmul %35, %37, %cst_22 {dimension_numbers = #tpu.dot_dimension_numbers<[1], [0], [0], [1], [0, 0, 1, 1], [], []>} : vector<32x128xf32>, vector<128x128xf32>, vector<32x128xf32> -> vector<32x128xf32>
    %c0_23 = arith.constant 0 : index
    %c0_24 = arith.constant 0 : index
    %39 = vector.load %arg5[%c0_23, %c0_24] : memref<1x128xf32, #tpu.memory_space<vmem>>, vector<1x128xf32>
    %40 = vector.broadcast %39 : vector<1x128xf32> to vector<32x128xf32>
    %41 = arith.addf %38, %40 : vector<32x128xf32>
    %42 = vector.extract_strided_slice %1 {offsets = [1, 0], sizes = [32, 128], strides = [1, 1]} : vector<34x128xf32> to vector<32x128xf32>
    %43 = arith.addf %41, %42 : vector<32x128xf32>
    %c0_25 = arith.constant 0 : index
    %c0_26 = arith.constant 0 : index
    %c0_27 = arith.constant 0 : index
    %44 = vector.load %arg6[%c0_25, %c0_26, %c0_27] : memref<1x32x128xf32, #tpu.memory_space<vmem>>, vector<1x32x128xf32>
    %45 = vector.shape_cast %44 : vector<1x32x128xf32> to vector<32x128xf32>
    %46 = vector.shape_cast %43 : vector<32x128xf32> to vector<1x32x128xf32>
    tpu.vector_store %arg6[%c0_25, %c0_26, %c0_27], %46 {strides = array<i32>} : memref<1x32x128xf32, #tpu.memory_space<vmem>>, vector<1x32x128xf32>,
    return
  }
  func.func @transform_0(%arg0: i32) -> (i32, i32, i32) {
    %c0_i32 = arith.constant 0 : i32
    %c0_i32_0 = arith.constant 0 : i32
    %c0_i32_1 = arith.constant 0 : i32
    return %arg0, %c0_i32, %c0_i32_0 : i32, i32, i32
  }
  func.func @transform_1(%arg0: i32) -> (i32, i32, i32) {
    %c0_i32 = arith.constant 0 : i32
    %c0_i32_0 = arith.constant 0 : i32
    %c0_i32_1 = arith.constant 0 : i32
    %c0_i32_2 = arith.constant 0 : i32
    return %c0_i32, %c0_i32_0, %c0_i32_1 : i32, i32, i32
  }
  func.func @transform_2(%arg0: i32) -> (i32, i32) {
    %c0_i32 = arith.constant 0 : i32
    %c0_i32_0 = arith.constant 0 : i32
    %c0_i32_1 = arith.constant 0 : i32
    return %c0_i32, %c0_i32_0 : i32, i32
  }
  func.func @transform_3(%arg0: i32) -> (i32, i32, i32) {
    %c0_i32 = arith.constant 0 : i32
    %c0_i32_0 = arith.constant 0 : i32
    %c0_i32_1 = arith.constant 0 : i32
    %c0_i32_2 = arith.constant 0 : i32
    return %c0_i32, %c0_i32_0, %c0_i32_1 : i32, i32, i32
  }
  func.func @transform_4(%arg0: i32) -> (i32, i32) {
    %c0_i32 = arith.constant 0 : i32
    %c0_i32_0 = arith.constant 0 : i32
    %c0_i32_1 = arith.constant 0 : i32
    return %c0_i32, %c0_i32_0 : i32, i32
  }
  func.func @transform_5(%arg0: i32) -> (i32, i32, i32) {
    %c0_i32 = arith.constant 0 : i32
    %c0_i32_0 = arith.constant 0 : i32
    %c0_i32_1 = arith.constant 0 : i32
    return %arg0, %c0_i32, %c0_i32_0 : i32, i32, i32
  }
}

module attributes {stable_mosaic.version = 11 : i64} {
  func.func @_conv_kernel(%arg0: i32, %arg1: memref<1x9x512xf32, #tpu.memory_space<vmem>>, %arg2: memref<2x512x128xf32, #tpu.memory_space<vmem>>, %arg3: memref<1x128xf32, #tpu.memory_space<vmem>>, %arg4: memref<1x8x128xf32, #tpu.memory_space<vmem>>) attributes {dimension_semantics = [#tpu.dimension_semantics<parallel>], iteration_bounds = array<i64: 2>, scalar_prefetch = 0 : i64, scratch_operands = 0 : i64, tpu.core_type = #tpu.core_type<tc>, window_params = [{transform_indices = @transform_0, window_bounds = array<i64: 1, 9, 512>}, {pipeline_mode = #tpu.pipeline_mode<synchronous>, transform_indices = @transform_1, window_bounds = array<i64: 2, 512, 128>}, {pipeline_mode = #tpu.pipeline_mode<synchronous>, transform_indices = @transform_2, window_bounds = array<i64: 1, 128>}, {transform_indices = @transform_3, window_bounds = array<i64: 1, 8, 128>}]} {
    %c0 = arith.constant 0 : index
    %c0_0 = arith.constant 0 : index
    %c0_1 = arith.constant 0 : index
    %0 = vector.load %arg1[%c0, %c0_0, %c0_1] : memref<1x9x512xf32, #tpu.memory_space<vmem>>, vector<1x9x512xf32>
    %1 = vector.shape_cast %0 : vector<1x9x512xf32> to vector<9x512xf32>
    %cst = arith.constant 0.000000e+00 : f32
    %2 = vector.broadcast %cst : f32 to vector<9x512xf32>
    %3 = arith.cmpf ogt, %1, %2 : vector<9x512xf32>
    %cst_2 = arith.constant 0.000000e+00 : f32
    %4 = vector.broadcast %cst_2 : f32 to vector<9x512xf32>
    %5 = arith.minimumf %1, %4 : vector<9x512xf32>
    %6 = math.exp %5 : vector<9x512xf32>
    %cst_3 = arith.constant 1.000000e+00 : f32
    %7 = vector.broadcast %cst_3 : f32 to vector<9x512xf32>
    %8 = arith.subf %6, %7 : vector<9x512xf32>
    %9 = arith.select %3, %1, %8 : vector<9x512xi1>, vector<9x512xf32>
    %c0_4 = arith.constant 0 : index
    %c0_5 = arith.constant 0 : index
    %10 = vector.load %arg3[%c0_4, %c0_5] : memref<1x128xf32, #tpu.memory_space<vmem>>, vector<1x128xf32>
    %11 = vector.shape_cast %10 : vector<1x128xf32> to vector<1x128xf32>
    %12 = vector.broadcast %11 : vector<1x128xf32> to vector<8x128xf32>
    %13 = vector.extract_strided_slice %9 {offsets = [0, 0], sizes = [8, 512], strides = [1, 1]} : vector<9x512xf32> to vector<8x512xf32>
    %c0_6 = arith.constant 0 : index
    %c0_7 = arith.constant 0 : index
    %c0_8 = arith.constant 0 : index
    %14 = vector.load %arg2[%c0_6, %c0_7, %c0_8] : memref<2x512x128xf32, #tpu.memory_space<vmem>>, vector<1x512x128xf32>
    %15 = vector.shape_cast %14 : vector<1x512x128xf32> to vector<512x128xf32>
    %cst_9 = arith.constant dense<0.000000e+00> : vector<8x128xf32>
    %16 = tpu.matmul %13, %15, %cst_9 {dimension_numbers = #tpu.dot_dimension_numbers<[1], [0], [0], [1], [0, 0, 1, 1], [], []>} : vector<8x512xf32>, vector<512x128xf32>, vector<8x128xf32> -> vector<8x128xf32>
    %17 = arith.addf %12, %16 : vector<8x128xf32>
    %18 = vector.extract_strided_slice %9 {offsets = [1, 0], sizes = [8, 512], strides = [1, 1]} : vector<9x512xf32> to vector<8x512xf32>
    %c1 = arith.constant 1 : index
    %c0_10 = arith.constant 0 : index
    %c0_11 = arith.constant 0 : index
    %19 = vector.load %arg2[%c1, %c0_10, %c0_11] : memref<2x512x128xf32, #tpu.memory_space<vmem>>, vector<1x512x128xf32>
    %20 = vector.shape_cast %19 : vector<1x512x128xf32> to vector<512x128xf32>
    %cst_12 = arith.constant dense<0.000000e+00> : vector<8x128xf32>
    %21 = tpu.matmul %18, %20, %cst_12 {dimension_numbers = #tpu.dot_dimension_numbers<[1], [0], [0], [1], [0, 0, 1, 1], [], []>} : vector<8x512xf32>, vector<512x128xf32>, vector<8x128xf32> -> vector<8x128xf32>
    %22 = arith.addf %17, %21 : vector<8x128xf32>
    %c0_13 = arith.constant 0 : index
    %c0_14 = arith.constant 0 : index
    %c0_15 = arith.constant 0 : index
    %23 = vector.load %arg4[%c0_13, %c0_14, %c0_15] : memref<1x8x128xf32, #tpu.memory_space<vmem>>, vector<1x8x128xf32>
    %24 = vector.shape_cast %23 : vector<1x8x128xf32> to vector<8x128xf32>
    %25 = vector.shape_cast %22 : vector<8x128xf32> to vector<1x8x128xf32>
    tpu.vector_store %arg4[%c0_13, %c0_14, %c0_15], %25 {strides = array<i32>} : memref<1x8x128xf32, #tpu.memory_space<vmem>>, vector<1x8x128xf32>,
    return
  }
  func.func @transform_0(%arg0: i32) -> (i32, i32, i32) {
    %c0_i32 = arith.constant 0 : i32
    %c0_i32_0 = arith.constant 0 : i32
    %c0_i32_1 = arith.constant 0 : i32
    return %arg0, %c0_i32, %c0_i32_0 : i32, i32, i32
  }
  func.func @transform_1(%arg0: i32) -> (i32, i32, i32) {
    %c0_i32 = arith.constant 0 : i32
    %c0_i32_0 = arith.constant 0 : i32
    %c0_i32_1 = arith.constant 0 : i32
    %c0_i32_2 = arith.constant 0 : i32
    return %c0_i32, %c0_i32_0, %c0_i32_1 : i32, i32, i32
  }
  func.func @transform_2(%arg0: i32) -> (i32, i32) {
    %c0_i32 = arith.constant 0 : i32
    %c0_i32_0 = arith.constant 0 : i32
    %c0_i32_1 = arith.constant 0 : i32
    return %c0_i32, %c0_i32_0 : i32, i32
  }
  func.func @transform_3(%arg0: i32) -> (i32, i32, i32) {
    %c0_i32 = arith.constant 0 : i32
    %c0_i32_0 = arith.constant 0 : i32
    %c0_i32_1 = arith.constant 0 : i32
    return %arg0, %c0_i32, %c0_i32_0 : i32, i32, i32
  }
}

module attributes {stable_mosaic.version = 11 : i64} {
  func.func @_conv_kernel(%arg0: i32, %arg1: memref<1x14x128xf32, #tpu.memory_space<vmem>>, %arg2: memref<7x128x128xf32, #tpu.memory_space<vmem>>, %arg3: memref<1x128xf32, #tpu.memory_space<vmem>>, %arg4: memref<1x8x128xf32, #tpu.memory_space<vmem>>) attributes {dimension_semantics = [#tpu.dimension_semantics<parallel>], iteration_bounds = array<i64: 2>, scalar_prefetch = 0 : i64, scratch_operands = 0 : i64, tpu.core_type = #tpu.core_type<tc>, window_params = [{transform_indices = @transform_0, window_bounds = array<i64: 1, 14, 128>}, {pipeline_mode = #tpu.pipeline_mode<synchronous>, transform_indices = @transform_1, window_bounds = array<i64: 7, 128, 128>}, {pipeline_mode = #tpu.pipeline_mode<synchronous>, transform_indices = @transform_2, window_bounds = array<i64: 1, 128>}, {transform_indices = @transform_3, window_bounds = array<i64: 1, 8, 128>}]} {
    %c0 = arith.constant 0 : index
    %c0_0 = arith.constant 0 : index
    %c0_1 = arith.constant 0 : index
    %0 = vector.load %arg1[%c0, %c0_0, %c0_1] : memref<1x14x128xf32, #tpu.memory_space<vmem>>, vector<1x14x128xf32>
    %1 = vector.shape_cast %0 : vector<1x14x128xf32> to vector<14x128xf32>
    %cst = arith.constant 0.000000e+00 : f32
    %2 = vector.broadcast %cst : f32 to vector<14x128xf32>
    %3 = arith.cmpf ogt, %1, %2 : vector<14x128xf32>
    %cst_2 = arith.constant 0.000000e+00 : f32
    %4 = vector.broadcast %cst_2 : f32 to vector<14x128xf32>
    %5 = arith.minimumf %1, %4 : vector<14x128xf32>
    %6 = math.exp %5 : vector<14x128xf32>
    %cst_3 = arith.constant 1.000000e+00 : f32
    %7 = vector.broadcast %cst_3 : f32 to vector<14x128xf32>
    %8 = arith.subf %6, %7 : vector<14x128xf32>
    %9 = arith.select %3, %1, %8 : vector<14x128xi1>, vector<14x128xf32>
    %c0_4 = arith.constant 0 : index
    %c0_5 = arith.constant 0 : index
    %10 = vector.load %arg3[%c0_4, %c0_5] : memref<1x128xf32, #tpu.memory_space<vmem>>, vector<1x128xf32>
    %11 = vector.shape_cast %10 : vector<1x128xf32> to vector<1x128xf32>
    %12 = vector.broadcast %11 : vector<1x128xf32> to vector<8x128xf32>
    %13 = vector.extract_strided_slice %9 {offsets = [0, 0], sizes = [8, 128], strides = [1, 1]} : vector<14x128xf32> to vector<8x128xf32>
    %c0_6 = arith.constant 0 : index
    %c0_7 = arith.constant 0 : index
    %c0_8 = arith.constant 0 : index
    %14 = vector.load %arg2[%c0_6, %c0_7, %c0_8] : memref<7x128x128xf32, #tpu.memory_space<vmem>>, vector<1x128x128xf32>
    %15 = vector.shape_cast %14 : vector<1x128x128xf32> to vector<128x128xf32>
    %cst_9 = arith.constant dense<0.000000e+00> : vector<8x128xf32>
    %16 = tpu.matmul %13, %15, %cst_9 {dimension_numbers = #tpu.dot_dimension_numbers<[1], [0], [0], [1], [0, 0, 1, 1], [], []>} : vector<8x128xf32>, vector<128x128xf32>, vector<8x128xf32> -> vector<8x128xf32>
    %17 = arith.addf %12, %16 : vector<8x128xf32>
    %18 = vector.extract_strided_slice %9 {offsets = [1, 0], sizes = [8, 128], strides = [1, 1]} : vector<14x128xf32> to vector<8x128xf32>
    %c1 = arith.constant 1 : index
    %c0_10 = arith.constant 0 : index
    %c0_11 = arith.constant 0 : index
    %19 = vector.load %arg2[%c1, %c0_10, %c0_11] : memref<7x128x128xf32, #tpu.memory_space<vmem>>, vector<1x128x128xf32>
    %20 = vector.shape_cast %19 : vector<1x128x128xf32> to vector<128x128xf32>
    %cst_12 = arith.constant dense<0.000000e+00> : vector<8x128xf32>
    %21 = tpu.matmul %18, %20, %cst_12 {dimension_numbers = #tpu.dot_dimension_numbers<[1], [0], [0], [1], [0, 0, 1, 1], [], []>} : vector<8x128xf32>, vector<128x128xf32>, vector<8x128xf32> -> vector<8x128xf32>
    %22 = arith.addf %17, %21 : vector<8x128xf32>
    %23 = vector.extract_strided_slice %9 {offsets = [2, 0], sizes = [8, 128], strides = [1, 1]} : vector<14x128xf32> to vector<8x128xf32>
    %c2 = arith.constant 2 : index
    %c0_13 = arith.constant 0 : index
    %c0_14 = arith.constant 0 : index
    %24 = vector.load %arg2[%c2, %c0_13, %c0_14] : memref<7x128x128xf32, #tpu.memory_space<vmem>>, vector<1x128x128xf32>
    %25 = vector.shape_cast %24 : vector<1x128x128xf32> to vector<128x128xf32>
    %cst_15 = arith.constant dense<0.000000e+00> : vector<8x128xf32>
    %26 = tpu.matmul %23, %25, %cst_15 {dimension_numbers = #tpu.dot_dimension_numbers<[1], [0], [0], [1], [0, 0, 1, 1], [], []>} : vector<8x128xf32>, vector<128x128xf32>, vector<8x128xf32> -> vector<8x128xf32>
    %27 = arith.addf %22, %26 : vector<8x128xf32>
    %28 = vector.extract_strided_slice %9 {offsets = [3, 0], sizes = [8, 128], strides = [1, 1]} : vector<14x128xf32> to vector<8x128xf32>
    %c3 = arith.constant 3 : index
    %c0_16 = arith.constant 0 : index
    %c0_17 = arith.constant 0 : index
    %29 = vector.load %arg2[%c3, %c0_16, %c0_17] : memref<7x128x128xf32, #tpu.memory_space<vmem>>, vector<1x128x128xf32>
    %30 = vector.shape_cast %29 : vector<1x128x128xf32> to vector<128x128xf32>
    %cst_18 = arith.constant dense<0.000000e+00> : vector<8x128xf32>
    %31 = tpu.matmul %28, %30, %cst_18 {dimension_numbers = #tpu.dot_dimension_numbers<[1], [0], [0], [1], [0, 0, 1, 1], [], []>} : vector<8x128xf32>, vector<128x128xf32>, vector<8x128xf32> -> vector<8x128xf32>
    %32 = arith.addf %27, %31 : vector<8x128xf32>
    %33 = vector.extract_strided_slice %9 {offsets = [4, 0], sizes = [8, 128], strides = [1, 1]} : vector<14x128xf32> to vector<8x128xf32>
    %c4 = arith.constant 4 : index
    %c0_19 = arith.constant 0 : index
    %c0_20 = arith.constant 0 : index
    %34 = vector.load %arg2[%c4, %c0_19, %c0_20] : memref<7x128x128xf32, #tpu.memory_space<vmem>>, vector<1x128x128xf32>
    %35 = vector.shape_cast %34 : vector<1x128x128xf32> to vector<128x128xf32>
    %cst_21 = arith.constant dense<0.000000e+00> : vector<8x128xf32>
    %36 = tpu.matmul %33, %35, %cst_21 {dimension_numbers = #tpu.dot_dimension_numbers<[1], [0], [0], [1], [0, 0, 1, 1], [], []>} : vector<8x128xf32>, vector<128x128xf32>, vector<8x128xf32> -> vector<8x128xf32>
    %37 = arith.addf %32, %36 : vector<8x128xf32>
    %38 = vector.extract_strided_slice %9 {offsets = [5, 0], sizes = [8, 128], strides = [1, 1]} : vector<14x128xf32> to vector<8x128xf32>
    %c5 = arith.constant 5 : index
    %c0_22 = arith.constant 0 : index
    %c0_23 = arith.constant 0 : index
    %39 = vector.load %arg2[%c5, %c0_22, %c0_23] : memref<7x128x128xf32, #tpu.memory_space<vmem>>, vector<1x128x128xf32>
    %40 = vector.shape_cast %39 : vector<1x128x128xf32> to vector<128x128xf32>
    %cst_24 = arith.constant dense<0.000000e+00> : vector<8x128xf32>
    %41 = tpu.matmul %38, %40, %cst_24 {dimension_numbers = #tpu.dot_dimension_numbers<[1], [0], [0], [1], [0, 0, 1, 1], [], []>} : vector<8x128xf32>, vector<128x128xf32>, vector<8x128xf32> -> vector<8x128xf32>
    %42 = arith.addf %37, %41 : vector<8x128xf32>
    %43 = vector.extract_strided_slice %9 {offsets = [6, 0], sizes = [8, 128], strides = [1, 1]} : vector<14x128xf32> to vector<8x128xf32>
    %c6 = arith.constant 6 : index
    %c0_25 = arith.constant 0 : index
    %c0_26 = arith.constant 0 : index
    %44 = vector.load %arg2[%c6, %c0_25, %c0_26] : memref<7x128x128xf32, #tpu.memory_space<vmem>>, vector<1x128x128xf32>
    %45 = vector.shape_cast %44 : vector<1x128x128xf32> to vector<128x128xf32>
    %cst_27 = arith.constant dense<0.000000e+00> : vector<8x128xf32>
    %46 = tpu.matmul %43, %45, %cst_27 {dimension_numbers = #tpu.dot_dimension_numbers<[1], [0], [0], [1], [0, 0, 1, 1], [], []>} : vector<8x128xf32>, vector<128x128xf32>, vector<8x128xf32> -> vector<8x128xf32>
    %47 = arith.addf %42, %46 : vector<8x128xf32>
    %c0_28 = arith.constant 0 : index
    %c0_29 = arith.constant 0 : index
    %c0_30 = arith.constant 0 : index
    %48 = vector.load %arg4[%c0_28, %c0_29, %c0_30] : memref<1x8x128xf32, #tpu.memory_space<vmem>>, vector<1x8x128xf32>
    %49 = vector.shape_cast %48 : vector<1x8x128xf32> to vector<8x128xf32>
    %50 = vector.shape_cast %47 : vector<8x128xf32> to vector<1x8x128xf32>
    tpu.vector_store %arg4[%c0_28, %c0_29, %c0_30], %50 {strides = array<i32>} : memref<1x8x128xf32, #tpu.memory_space<vmem>>, vector<1x8x128xf32>,
    return
  }
  func.func @transform_0(%arg0: i32) -> (i32, i32, i32) {
    %c0_i32 = arith.constant 0 : i32
    %c0_i32_0 = arith.constant 0 : i32
    %c0_i32_1 = arith.constant 0 : i32
    return %arg0, %c0_i32, %c0_i32_0 : i32, i32, i32
  }
  func.func @transform_1(%arg0: i32) -> (i32, i32, i32) {
    %c0_i32 = arith.constant 0 : i32
    %c0_i32_0 = arith.constant 0 : i32
    %c0_i32_1 = arith.constant 0 : i32
    %c0_i32_2 = arith.constant 0 : i32
    return %c0_i32, %c0_i32_0, %c0_i32_1 : i32, i32, i32
  }
  func.func @transform_2(%arg0: i32) -> (i32, i32) {
    %c0_i32 = arith.constant 0 : i32
    %c0_i32_0 = arith.constant 0 : i32
    %c0_i32_1 = arith.constant 0 : i32
    return %c0_i32, %c0_i32_0 : i32, i32
  }
  func.func @transform_3(%arg0: i32) -> (i32, i32, i32) {
    %c0_i32 = arith.constant 0 : i32
    %c0_i32_0 = arith.constant 0 : i32
    %c0_i32_1 = arith.constant 0 : i32
    return %arg0, %c0_i32, %c0_i32_0 : i32, i32, i32
  }
}

</mosaic_0001>

<llo_original>
// kernel: seanet_encoder_forward.8
$region0: #{seanet_encoder_forward.8}
  #allocation0 [shape = 'u32[]', space=smem, size = 0x4, offset = 0x4, fixed_abs, tag = 'smem constant byte address 0x4 - core index']
  #allocation1 [shape = 'u32[144,128]{1,0:T(1,128)}', space=vmem, size = 0x12000, scoped, tag = 'internal scratch']
  %s0 = inlined_call_operand.vmem [shape: f32[2,33,256], index: 0, kind: input, shape index: {}]
  %s1 = inlined_call_operand.vmem [shape: f32[2,256,128], index: 1, kind: input, shape index: {}]
  %s2 = inlined_call_operand.vmem [shape: f32[1,128], index: 2, kind: input, shape index: {}]
  %s3 = inlined_call_operand.vmem [shape: f32[2,32,128], index: 3, kind: output, shape index: {}]
  %s4 = sld [smem:[#allocation0]]
  $region45: #{seanet_encoder_forward.8} parent=0
    _
  %s6 = ssub.s32 1, %s4
  %s7 = scalar_select 0, %s6, %s4
  loop: start=0, step=1, limit=4
  $region2: #{seanet_encoder_forward.8} parent=0 // loop_pre_header
    _
  $region3: #{seanet_encoder_forward.8} parent=0 // loop_header
    %s9 = sphi 0, %s13
    %p10 = scmp.ge.s32.totalorder %s9, 4
    %s19 = sphi 0, %s21
    %s22 = sphi 0, %s19
    %s23 = sphi 0, %s22
    %s39 = sphi 0, %s23
    %s43 = sphi 0, %s43
    %s45 = sphi 0, %s43
    %s46 = sphi 0, %s45
    %s60 = sphi 0, %s46
    %s64 = sphi 0, %s64
    %s66 = sphi 0, %s64
    %s67 = sphi 0, %s66
    %s81 = sphi 0, %s67
    %s87 = sphi 0, %s89
    %s90 = sphi 0, %s87
    %s91 = sphi 0, %s90
    %s107 = sphi 0, %s91
  $region4: #{seanet_encoder_forward.8} parent=0 // loop_header_branch
    %12 = sbr.rel (%p10) target = $region8
  $region5: #{seanet_encoder_forward.8} parent=0 // loop_body
    %s14 = ssub.s32 %s9, 1
    %s15 = ssub.s32 %s9, 2
    %s16 = sadd.s32 %s9, 1
    %s17 = ssub.s32 %s9, %s16
    %p18 = scmp.eq.s32.totalorder %s17, 0
    %s20 = sadd.s32 %s19, 1
    %s21 = scalar_select %p18, %s19, %s20
    %p24 = pneg %p18
    %p25 = scmp.eq.s32.totalorder %s9, 1
    %p26 = por %p24, %p25
    %p27 = scmp.ne.s32.totalorder %s19, %s22
    %p28 = scmp.eq.s32.totalorder %s9, 0
    %p29 = por %p27, %p28
    %p30 = scmp.ne.s32.totalorder %s19, %s22
    %p31 = scmp.eq.s32.totalorder %s14, 1
    %p32 = por %p30, %p31
    %p33 = scmp.ne.s32.totalorder %s22, %s23
    %p34 = scmp.eq.s32.totalorder %s14, 0
    %p35 = por %p33, %p34
    %p36 = scmp.ne.s32.totalorder %s22, %s23
    %p37 = scmp.eq.s32.totalorder %s15, 1
    %p38 = por %p36, %p37
    %p40 = scmp.ne.s32.totalorder %s23, %s39
    %p41 = scmp.eq.s32.totalorder %s15, 0
    %p42 = por %p40, %p41
    %s44 = sadd.s32 %s43, 1
    %p47 = scmp.eq.s32.totalorder %s9, 1
    %p48 = scmp.ne.s32.totalorder %s43, %s45
    %p49 = scmp.eq.s32.totalorder %s9, 0
    %p50 = por %p48, %p49
    %p51 = scmp.ne.s32.totalorder %s43, %s45
    %p52 = scmp.eq.s32.totalorder %s14, 1
    %p53 = por %p51, %p52
    %p54 = scmp.ne.s32.totalorder %s45, %s46
    %p55 = scmp.eq.s32.totalorder %s14, 0
    %p56 = por %p54, %p55
    %p57 = scmp.ne.s32.totalorder %s45, %s46
    %p58 = scmp.eq.s32.totalorder %s15, 1
    %p59 = por %p57, %p58
    %p61 = scmp.ne.s32.totalorder %s46, %s60
    %p62 = scmp.eq.s32.totalorder %s15, 0
    %p63 = por %p61, %p62
    %s65 = sadd.s32 %s64, 1
    %p68 = scmp.eq.s32.totalorder %s9, 1
    %p69 = scmp.ne.s32.totalorder %s64, %s66
    %p70 = scmp.eq.s32.totalorder %s9, 0
    %p71 = por %p69, %p70
    %p72 = scmp.ne.s32.totalorder %s64, %s66
    %p73 = scmp.eq.s32.totalorder %s14, 1
    %p74 = por %p72, %p73
    %p75 = scmp.ne.s32.totalorder %s66, %s67
    %p76 = scmp.eq.s32.totalorder %s14, 0
    %p77 = por %p75, %p76
    %p78 = scmp.ne.s32.totalorder %s66, %s67
    %p79 = scmp.eq.s32.totalorder %s15, 1
    %p80 = por %p78, %p79
    %p82 = scmp.ne.s32.totalorder %s67, %s81
    %p83 = scmp.eq.s32.totalorder %s15, 0
    %p84 = por %p82, %p83
    %s85 = ssub.s32 %s9, %s16
    %p86 = scmp.eq.s32.totalorder %s85, 0
    %s88 = sadd.s32 %s87, 1
    %s89 = scalar_select %p86, %s87, %s88
    %p92 = pneg %p86
    %p93 = scmp.eq.s32.totalorder %s9, 1
    %p94 = por %p92, %p93
    %p95 = scmp.ne.s32.totalorder %s87, %s90
    %p96 = scmp.eq.s32.totalorder %s9, 0
    %p97 = por %p95, %p96
    %p98 = scmp.ne.s32.totalorder %s87, %s90
    %p99 = scmp.eq.s32.totalorder %s14, 1
    %p100 = por %p98, %p99
    %p101 = scmp.ne.s32.totalorder %s90, %s91
    %p102 = scmp.eq.s32.totalorder %s14, 0
    %p103 = por %p101, %p102
    %p104 = scmp.ne.s32.totalorder %s90, %s91
    %p105 = scmp.eq.s32.totalorder %s15, 1
    %p106 = por %p104, %p105
    %p108 = scmp.ne.s32.totalorder %s91, %s107
    %p109 = scmp.eq.s32.totalorder %s15, 0
    %p110 = por %p108, %p109
    %p111 = scmp.le.s32.totalorder 1, %s9
    %p112 = scmp.lt.s32.totalorder %s9, 3
    %p113 = pnand %p111, %p112
    %p114 = pneg %p113
    // Predicated region
    $region9: #{seanet_encoder_forward.8} parent=5 // pred_check
      _
    $region10: #{seanet_encoder_forward.8} parent=5 // pred_check_branch
      %116 = sbr.rel (%p113) target = $region12
    $region11: #{seanet_encoder_forward.8} parent=5 // pred_region
      %s117 = ssub.s32 %s9, 1
      // Predicated region
      $region13: #{seanet_encoder_forward.8} parent=11 // pred_check
        %p118 = pneg %p56
      $region14: #{seanet_encoder_forward.8} parent=11 // pred_check_branch
        %120 = sbr.rel (%p118) target = $region16
      $region15: #{seanet_encoder_forward.8} parent=11 // pred_region
        _
      $region16: #{seanet_encoder_forward.8} parent=11 // pred_fallthru
        _
      // Predicated region
      $region17: #{seanet_encoder_forward.8} parent=11 // pred_check
        %p121 = pneg %p77
      $region18: #{seanet_encoder_forward.8} parent=11 // pred_check_branch
        %123 = sbr.rel (%p121) target = $region20
      $region19: #{seanet_encoder_forward.8} parent=11 // pred_region
        _
      $region20: #{seanet_encoder_forward.8} parent=11 // pred_fallthru
        _
    $region12: #{seanet_encoder_forward.8} parent=5 // pred_fallthru
      _
    %p124 = scmp.lt.s32.totalorder %s9, 2
    // Predicated region
    $region21: #{seanet_encoder_forward.8} parent=5 // pred_check
      %p125 = pneg %p124
    $region22: #{seanet_encoder_forward.8} parent=5 // pred_check_branch
      %127 = sbr.rel (%p125) target = $region24
    $region23: #{seanet_encoder_forward.8} parent=5 // pred_region
      // Predicated region
      $region25: #{seanet_encoder_forward.8} parent=23 // pred_check
        %p128 = pneg %p29
      $region26: #{seanet_encoder_forward.8} parent=23 // pred_check_branch
        %130 = sbr.rel (%p128) target = $region28
      $region27: #{seanet_encoder_forward.8} parent=23 // pred_region
        %p131 = scmp.lt.s32.totalorder %s9, 1
        %s132 = scalar_select %p131, %s9, 1
        %s133 = smul.addr %s132, 10
        %s134 = smul.addr %s133, 8
        %s135 = scalar_lea.vmem %s0, %s134
      $region28: #{seanet_encoder_forward.8} parent=23 // pred_fallthru
        _
    $region24: #{seanet_encoder_forward.8} parent=5 // pred_fallthru
      _
    %p136 = scmp.le.s32.totalorder 1, %s9
    %p137 = scmp.lt.s32.totalorder %s9, 3
    %p138 = pnand %p136, %p137
    %p139 = pneg %p138
    // Predicated region
    $region29: #{seanet_encoder_forward.8} parent=5 // pred_check
      _
    $region30: #{seanet_encoder_forward.8} parent=5 // pred_check_branch
      %141 = sbr.rel (%p138) target = $region32
    $region31: #{seanet_encoder_forward.8} parent=5 // pred_region
      %s142 = ssub.s32 %s9, 1
      %p143 = scmp.lt.s32.totalorder %s14, 1
      %s144 = scalar_select %p143, %s14, 1
      %s145 = smul.addr %s144, 10
      %s146 = smul.addr %s145, 8
      %s147 = scalar_lea.vmem %s0, %s146
      %p148 = pneg %p35
      %p149 = pneg %p32
      %p150 = pneg %p56
      %p151 = pneg %p53
      %p152 = pneg %p77
      %p153 = pneg %p74
      %p154 = pneg %p103
      %p155 = pneg %p100
      %p156 = scmp.lt.s32.totalorder %s14, 1
      %s157 = scalar_select %p156, %s14, 1
      %s158 = smul.addr %s157, 4
      %s159 = smul.addr %s158, 8
      %s160 = scalar_lea.vmem %s3, %s159
      %p161 = scmp.lt.s32.totalorder %s14, 1
      %s162 = scalar_select %p161, %s14, 1
      %s163 = smul.addr %s162, 10
      %s164 = smul.addr %s163, 8
      %s165 = scalar_lea.vmem %s0, %s164
      %p166 = scmp.lt.s32.totalorder %s14, 1
      %s167 = scalar_select %p166, %s14, 1
      %s168 = smul.addr %s167, 4
      %s169 = smul.addr %s168, 8
      %s170 = scalar_lea.vmem %s3, %s169
      %v171 = vld [vmem:[%s165] sm:$0xff]
      %v172 = vld [vmem:[%s165 + $0x8] sm:$0xff]
      %v173 = vld [vmem:[%s165 + $0x10] sm:$0xff]
      %v174 = vld [vmem:[%s165 + $0x18] sm:$0xff]
      %v175 = vld [vmem:[%s165 + $0x20] sm:$0xff]
      %v176 = vld [vmem:[%s165 + $0x28] sm:$0xff]
      %v177 = vld [vmem:[%s165 + $0x30] sm:$0xff]
      %v178 = vld [vmem:[%s165 + $0x38] sm:$0xff]
      %v179 = vld [vmem:[%s165 + $0x40] sm:$0x1]
      %v180 = vld [vmem:[%s165 + $0x48] sm:$0x1]
      %vm181 = vcmp.gt.f32.partialorder %v171, 0.0
      %vm182 = vcmp.gt.f32.partialorder %v172, 0.0
      %vm183 = vcmp.gt.f32.partialorder %v173, 0.0
      %vm184 = vcmp.gt.f32.partialorder %v174, 0.0
      %vm185 = vcmp.gt.f32.partialorder %v175, 0.0
      %vm186 = vcmp.gt.f32.partialorder %v176, 0.0
      %vm187 = vcmp.gt.f32.partialorder %v177, 0.0
      %vm188 = vcmp.gt.f32.partialorder %v178, 0.0
      %vm189 = vcmp.gt.f32.partialorder %v179, 0.0
      %vm190 = vcmp.gt.f32.partialorder %v180, 0.0
      %v191 = vmin.f32 %v171, 0.0
      %v192 = vmin.f32 %v172, 0.0
      %v193 = vmin.f32 %v173, 0.0
      %v194 = vmin.f32 %v174, 0.0
      %v195 = vmin.f32 %v175, 0.0
      %v196 = vmin.f32 %v176, 0.0
      %v197 = vmin.f32 %v177, 0.0
      %v198 = vmin.f32 %v178, 0.0
      %v199 = vmin.f32 %v179, 0.0
      %v200 = vmin.f32 %v180, 0.0
      %v201 = vmul.f32 %v191, 1.442695
      %v202 = vpow.pop %v201
      %v203 = vmul.f32 %v192, 1.442695
      %v204 = vpow.pop %v203
      %v205 = vmul.f32 %v193, 1.442695
      %v206 = vpow.pop %v205
      %v207 = vmul.f32 %v194, 1.442695
      %v208 = vpow.pop %v207
      %v209 = vmul.f32 %v195, 1.442695
      %v210 = vpow.pop %v209
      %v211 = vmul.f32 %v196, 1.442695
      %v212 = vpow.pop %v211
      %v213 = vmul.f32 %v197, 1.442695
      %v214 = vpow.pop %v213
      %v215 = vmul.f32 %v198, 1.442695
      %v216 = vpow.pop %v215
      %v217 = vmul.f32 %v199, 1.442695
      %v218 = vpow.pop %v217
      %v219 = vmul.f32 %v200, 1.442695
      %v220 = vpow.pop %v219
      %v221 = vsub.f32 %v202, 1.0
      %v222 = vsub.f32 %v204, 1.0
      %v223 = vsub.f32 %v206, 1.0
      %v224 = vsub.f32 %v208, 1.0
      %v225 = vsub.f32 %v210, 1.0
      %v226 = vsub.f32 %v212, 1.0
      %v227 = vsub.f32 %v214, 1.0
      %v228 = vsub.f32 %v216, 1.0
      %v229 = vsub.f32 %v218, 1.0
      %v230 = vsub.f32 %v220, 1.0
      %v231 = vsel %vm181, %v171, %v221
      %v232 = vsel %vm182, %v172, %v222
      %v233 = vsel %vm183, %v173, %v223
      %v234 = vsel %vm184, %v174, %v224
      %v235 = vsel %vm185, %v175, %v225
      %v236 = vsel %vm186, %v176, %v226
      %v237 = vsel %vm187, %v177, %v227
      %v238 = vsel %vm188, %v178, %v228
      %v239 = vsel %vm189, %v179, %v229
      %v240 = vsel %vm190, %v180, %v230
      %v241 = vld [vmem:[%s2] sm:$0x1]
      %v243 = vlaneseq
      %v244 = vshrl.u32 %v243, 7
      %v245 = vsub.s32 0, %v244
      %v246 = vrot.slane %v241, %v245
      %v248 = vld [vmem:[%s1] sm:$0xff]
      %v249 = vld [vmem:[%s1 + $0x8] sm:$0xff]
      %v250 = vld [vmem:[%s1 + $0x10] sm:$0xff]
      %v251 = vld [vmem:[%s1 + $0x18] sm:$0xff]
      %v252 = vld [vmem:[%s1 + $0x20] sm:$0xff]
      %v253 = vld [vmem:[%s1 + $0x28] sm:$0xff]
      %v254 = vld [vmem:[%s1 + $0x30] sm:$0xff]
      %v255 = vld [vmem:[%s1 + $0x38] sm:$0xff]
      %v256 = vld [vmem:[%s1 + $0x40] sm:$0xff]
      %v257 = vld [vmem:[%s1 + $0x48] sm:$0xff]
      %v258 = vld [vmem:[%s1 + $0x50] sm:$0xff]
      %v259 = vld [vmem:[%s1 + $0x58] sm:$0xff]
      %v260 = vld [vmem:[%s1 + $0x60] sm:$0xff]
      %v261 = vld [vmem:[%s1 + $0x68] sm:$0xff]
      %v262 = vld [vmem:[%s1 + $0x70] sm:$0xff]
      %v263 = vld [vmem:[%s1 + $0x78] sm:$0xff]
      %v264 = vld [vmem:[%s1 + $0x80] sm:$0xff]
      %v265 = vld [vmem:[%s1 + $0x88] sm:$0xff]
      %v266 = vld [vmem:[%s1 + $0x90] sm:$0xff]
      %v267 = vld [vmem:[%s1 + $0x98] sm:$0xff]
      %v268 = vld [vmem:[%s1 + $0xa0] sm:$0xff]
      %v269 = vld [vmem:[%s1 + $0xa8] sm:$0xff]
      %v270 = vld [vmem:[%s1 + $0xb0] sm:$0xff]
      %v271 = vld [vmem:[%s1 + $0xb8] sm:$0xff]
      %v272 = vld [vmem:[%s1 + $0xc0] sm:$0xff]
      %v273 = vld [vmem:[%s1 + $0xc8] sm:$0xff]
      %v274 = vld [vmem:[%s1 + $0xd0] sm:$0xff]
      %v275 = vld [vmem:[%s1 + $0xd8] sm:$0xff]
      %v276 = vld [vmem:[%s1 + $0xe0] sm:$0xff]
      %v277 = vld [vmem:[%s1 + $0xe8] sm:$0xff]
      %v278 = vld [vmem:[%s1 + $0xf0] sm:$0xff]
      %v279 = vld [vmem:[%s1 + $0xf8] sm:$0xff]
      %280 = vmatprep.subr.mxu0 0.0
      %281 = vmatpush1.msra.mxu0 %v263
      %282 = vmatprep.subr.mxu0 0.0
      %283 = vmatpush1.msra.mxu0 %v262
      %284 = vmatprep.subr.mxu0 0.0
      %285 = vmatpush1.msra.mxu0 %v261
      %286 = vmatprep.subr.mxu0 0.0
      %287 = vmatpush1.msra.mxu0 %v260
      %288 = vmatprep.subr.mxu0 0.0
      %289 = vmatpush1.msra.mxu0 %v259
      %290 = vmatprep.subr.mxu0 0.0
      %291 = vmatpush1.msra.mxu0 %v258
      %292 = vmatprep.subr.mxu0 0.0
      %293 = vmatpush1.msra.mxu0 %v257
      %294 = vmatprep.subr.mxu0 0.0
      %295 = vmatpush1.msra.mxu0 %v256
      %296 = vmatprep.subr.mxu0 0.0
      %297 = vmatpush1.msra.mxu0 %v255
      %298 = vmatprep.subr.mxu0 0.0
      %299 = vmatpush1.msra.mxu0 %v254
      %300 = vmatprep.subr.mxu0 0.0
      %301 = vmatpush1.msra.mxu0 %v253
      %302 = vmatprep.subr.mxu0 0.0
      %303 = vmatpush1.msra.mxu0 %v252
      %304 = vmatprep.subr.mxu0 0.0
      %305 = vmatpush1.msra.mxu0 %v251
      %306 = vmatprep.subr.mxu0 0.0
      %307 = vmatpush1.msra.mxu0 %v250
      %308 = vmatprep.subr.mxu0 0.0
      %309 = vmatpush1.msra.mxu0 %v249
      %310 = vmatprep.subr.mxu0 0.0
      %311 = vmatpush1.msra.mxu0 %v248
      %312 = vmatprep.subr.mxu0 0.0
      %313 = vmatpush2.msra.mxu0 %v279
      %314 = vmatprep.subr.mxu0 0.0
      %315 = vmatpush2.msra.mxu0 %v278
      %316 = vmatprep.subr.mxu0 0.0
      %317 = vmatpush2.msra.mxu0 %v277
      %318 = vmatprep.subr.mxu0 0.0
      %319 = vmatpush2.msra.mxu0 %v276
      %320 = vmatprep.subr.mxu0 0.0
      %321 = vmatpush2.msra.mxu0 %v275
      %322 = vmatprep.subr.mxu0 0.0
      %323 = vmatpush2.msra.mxu0 %v274
      %324 = vmatprep.subr.mxu0 0.0
      %325 = vmatpush2.msra.mxu0 %v273
      %326 = vmatprep.subr.mxu0 0.0
      %327 = vmatpush2.msra.mxu0 %v272
      %328 = vmatprep.subr.mxu0 0.0
      %329 = vmatpush2.msra.mxu0 %v271
      %330 = vmatprep.subr.mxu0 0.0
      %331 = vmatpush2.msra.mxu0 %v270
      %332 = vmatprep.subr.mxu0 0.0
      %333 = vmatpush2.msra.mxu0 %v269
      %334 = vmatprep.subr.mxu0 0.0
      %335 = vmatpush2.msra.mxu0 %v268
      %336 = vmatprep.subr.mxu0 0.0
      %337 = vmatpush2.msra.mxu0 %v267
      %338 = vmatprep.subr.mxu0 0.0
      %339 = vmatpush2.msra.mxu0 %v266
      %340 = vmatprep.subr.mxu0 0.0
      %341 = vmatpush2.msra.mxu0 %v265
      %342 = vmatprep.subr.mxu0 0.0
      %343 = vmatpush2.msra.mxu0 %v264
      %344 = vmatprep.mubr.f32.mxu0 %v232
      %345 = vmatmul.mubr.f32.gmra.mxu0 %v231
      %v346 = vpop.f32.mrf.mxu0
      %v347 = vadd.f32 0.0, %v346
      %v348 = vpop.f32.mrf.mxu0
      %349 = vmatprep.mubr.f32.mxu0 %v234
      %350 = vmatmul.mubr.f32.gmra.mxu0 %v233
      %v351 = vpop.f32.mrf.mxu0
      %v352 = vadd.f32 0.0, %v351
      %v353 = vpop.f32.mrf.mxu0
      %354 = vmatprep.mubr.f32.mxu0 %v236
      %355 = vmatmul.mubr.f32.gmra.mxu0 %v235
      %v356 = vpop.f32.mrf.mxu0
      %v357 = vadd.f32 0.0, %v356
      %v358 = vpop.f32.mrf.mxu0
      %359 = vmatprep.mubr.f32.mxu0 %v238
      %360 = vmatmul.mubr.f32.gmra.mxu0 %v237
      %v361 = vpop.f32.mrf.mxu0
      %v362 = vadd.f32 0.0, %v361
      %v363 = vpop.f32.mrf.mxu0
      %364 = vdwg.mxu0
      %v365 = vadd.f32 %v246, %v347
      %v366 = vadd.f32 %v246, %v352
      %v367 = vadd.f32 %v246, %v357
      %v368 = vadd.f32 %v246, %v362
      %s369 = scalar_lea.vmem %s1, 256
      %v370 = vld [vmem:[%s369] sm:$0xff]
      %v371 = vld [vmem:[%s369 + $0x8] sm:$0xff]
      %v372 = vld [vmem:[%s369 + $0x10] sm:$0xff]
      %v373 = vld [vmem:[%s369 + $0x18] sm:$0xff]
      %v374 = vld [vmem:[%s369 + $0x20] sm:$0xff]
      %v375 = vld [vmem:[%s369 + $0x28] sm:$0xff]
      %v376 = vld [vmem:[%s369 + $0x30] sm:$0xff]
      %v377 = vld [vmem:[%s369 + $0x38] sm:$0xff]
      %v378 = vld [vmem:[%s369 + $0x40] sm:$0xff]
      %v379 = vld [vmem:[%s369 + $0x48] sm:$0xff]
      %v380 = vld [vmem:[%s369 + $0x50] sm:$0xff]
      %v381 = vld [vmem:[%s369 + $0x58] sm:$0xff]
      %v382 = vld [vmem:[%s369 + $0x60] sm:$0xff]
      %v383 = vld [vmem:[%s369 + $0x68] sm:$0xff]
      %v384 = vld [vmem:[%s369 + $0x70] sm:$0xff]
      %v385 = vld [vmem:[%s369 + $0x78] sm:$0xff]
      %v386 = vld [vmem:[%s369 + $0x80] sm:$0xff]
      %v387 = vld [vmem:[%s369 + $0x88] sm:$0xff]
      %v388 = vld [vmem:[%s369 + $0x90] sm:$0xff]
      %v389 = vld [vmem:[%s369 + $0x98] sm:$0xff]
      %v390 = vld [vmem:[%s369 + $0xa0] sm:$0xff]
      %v391 = vld [vmem:[%s369 + $0xa8] sm:$0xff]
      %v392 = vld [vmem:[%s369 + $0xb0] sm:$0xff]
      %v393 = vld [vmem:[%s369 + $0xb8] sm:$0xff]
      %v394 = vld [vmem:[%s369 + $0xc0] sm:$0xff]
      %v395 = vld [vmem:[%s369 + $0xc8] sm:$0xff]
      %v396 = vld [vmem:[%s369 + $0xd0] sm:$0xff]
      %v397 = vld [vmem:[%s369 + $0xd8] sm:$0xff]
      %v398 = vld [vmem:[%s369 + $0xe0] sm:$0xff]
      %v399 = vld [vmem:[%s369 + $0xe8] sm:$0xff]
      %v400 = vld [vmem:[%s369 + $0xf0] sm:$0xff]
      %v401 = vld [vmem:[%s369 + $0xf8] sm:$0xff]
      %vm412 = vcmask 1046528
      %v413 = vrot.slane %v231, 1
      %v414 = vrot.slane %v233, 1
      %v415 = vsel %vm412, %v413, %v414
      %v416 = vrot.slane %v232, 1
      %v417 = vrot.slane %v234, 1
      %v418 = vsel %vm412, %v416, %v417
      %v419 = vrot.slane %v235, 1
      %v420 = vsel %vm412, %v414, %v419
      %v421 = vrot.slane %v236, 1
      %v422 = vsel %vm412, %v417, %v421
      %v423 = vrot.slane %v237, 1
      %v424 = vsel %vm412, %v419, %v423
      %v425 = vrot.slane %v238, 1
      %v426 = vsel %vm412, %v421, %v425
      %v427 = vrot.slane %v239, 1
      %v428 = vsel %vm412, %v423, %v427
      %v429 = vrot.slane %v240, 1
      %v430 = vsel %vm412, %v425, %v429
      %439 = vmatprep.subr.mxu0 0.0
      %440 = vmatpush1.msra.mxu0 %v385
      %441 = vmatprep.subr.mxu0 0.0
      %442 = vmatpush1.msra.mxu0 %v384
      %443 = vmatprep.subr.mxu0 0.0
      %444 = vmatpush1.msra.mxu0 %v383
      %445 = vmatprep.subr.mxu0 0.0
      %446 = vmatpush1.msra.mxu0 %v382
      %447 = vmatprep.subr.mxu0 0.0
      %448 = vmatpush1.msra.mxu0 %v381
      %449 = vmatprep.subr.mxu0 0.0
      %450 = vmatpush1.msra.mxu0 %v380
      %451 = vmatprep.subr.mxu0 0.0
      %452 = vmatpush1.msra.mxu0 %v379
      %453 = vmatprep.subr.mxu0 0.0
      %454 = vmatpush1.msra.mxu0 %v378
      %455 = vmatprep.subr.mxu0 0.0
      %456 = vmatpush1.msra.mxu0 %v377
      %457 = vmatprep.subr.mxu0 0.0
      %458 = vmatpush1.msra.mxu0 %v376
      %459 = vmatprep.subr.mxu0 0.0
      %460 = vmatpush1.msra.mxu0 %v375
      %461 = vmatprep.subr.mxu0 0.0
      %462 = vmatpush1.msra.mxu0 %v374
      %463 = vmatprep.subr.mxu0 0.0
      %464 = vmatpush1.msra.mxu0 %v373
      %465 = vmatprep.subr.mxu0 0.0
      %466 = vmatpush1.msra.mxu0 %v372
      %467 = vmatprep.subr.mxu0 0.0
      %468 = vmatpush1.msra.mxu0 %v371
      %469 = vmatprep.subr.mxu0 0.0
      %470 = vmatpush1.msra.mxu0 %v370
      %471 = vmatprep.subr.mxu0 0.0
      %472 = vmatpush2.msra.mxu0 %v401
      %473 = vmatprep.subr.mxu0 0.0
      %474 = vmatpush2.msra.mxu0 %v400
      %475 = vmatprep.subr.mxu0 0.0
      %476 = vmatpush2.msra.mxu0 %v399
      %477 = vmatprep.subr.mxu0 0.0
      %478 = vmatpush2.msra.mxu0 %v398
      %479 = vmatprep.subr.mxu0 0.0
      %480 = vmatpush2.msra.mxu0 %v397
      %481 = vmatprep.subr.mxu0 0.0
      %482 = vmatpush2.msra.mxu0 %v396
      %483 = vmatprep.subr.mxu0 0.0
      %484 = vmatpush2.msra.mxu0 %v395
      %485 = vmatprep.subr.mxu0 0.0
      %486 = vmatpush2.msra.mxu0 %v394
      %487 = vmatprep.subr.mxu0 0.0
      %488 = vmatpush2.msra.mxu0 %v393
      %489 = vmatprep.subr.mxu0 0.0
      %490 = vmatpush2.msra.mxu0 %v392
      %491 = vmatprep.subr.mxu0 0.0
      %492 = vmatpush2.msra.mxu0 %v391
      %493 = vmatprep.subr.mxu0 0.0
      %494 = vmatpush2.msra.mxu0 %v390
      %495 = vmatprep.subr.mxu0 0.0
      %496 = vmatpush2.msra.mxu0 %v389
      %497 = vmatprep.subr.mxu0 0.0
      %498 = vmatpush2.msra.mxu0 %v388
      %499 = vmatprep.subr.mxu0 0.0
      %500 = vmatpush2.msra.mxu0 %v387
      %501 = vmatprep.subr.mxu0 0.0
      %502 = vmatpush2.msra.mxu0 %v386
      %503 = vmatprep.mubr.f32.mxu0 %v418
      %504 = vmatmul.mubr.f32.gmra.mxu0 %v415
      %v505 = vpop.f32.mrf.mxu0
      %v506 = vadd.f32 0.0, %v505
      %v507 = vpop.f32.mrf.mxu0
      %508 = vmatprep.mubr.f32.mxu0 %v422
      %509 = vmatmul.mubr.f32.gmra.mxu0 %v420
      %v510 = vpop.f32.mrf.mxu0
      %v511 = vadd.f32 0.0, %v510
      %v512 = vpop.f32.mrf.mxu0
      %513 = vmatprep.mubr.f32.mxu0 %v426
      %514 = vmatmul.mubr.f32.gmra.mxu0 %v424
      %v515 = vpop.f32.mrf.mxu0
      %v516 = vadd.f32 0.0, %v515
      %v517 = vpop.f32.mrf.mxu0
      %518 = vmatprep.mubr.f32.mxu0 %v430
      %519 = vmatmul.mubr.f32.gmra.mxu0 %v428
      %v520 = vpop.f32.mrf.mxu0
      %v521 = vadd.f32 0.0, %v520
      %v522 = vpop.f32.mrf.mxu0
      %523 = vdwg.mxu0
      %v524 = vadd.f32 %v365, %v506
      %v525 = vadd.f32 %v366, %v511
      %v526 = vadd.f32 %v367, %v516
      %v527 = vadd.f32 %v368, %v521
      %528 = vst [vmem:[%s170] sm:$0xff] %v524
      %529 = vst [vmem:[%s170 + $0x8] sm:$0xff] %v525
      %530 = vst [vmem:[%s170 + $0x10] sm:$0xff] %v526
      %531 = vst [vmem:[%s170 + $0x18] sm:$0xff] %v527
      %p532 = scmp.lt.s32.totalorder %s14, 1
      %s533 = scalar_select %p532, %s14, 1
      %s534 = smul.addr %s533, 4
      %s535 = smul.addr %s534, 8
      %s536 = scalar_lea.vmem %s3, %s535
      // Predicated region
      $region33: #{seanet_encoder_forward.8} parent=31 // pred_check
        %p537 = pneg %p100
      $region34: #{seanet_encoder_forward.8} parent=31 // pred_check_branch
        %539 = sbr.rel (%p537) target = $region36
      $region35: #{seanet_encoder_forward.8} parent=31 // pred_region
        _
      $region36: #{seanet_encoder_forward.8} parent=31 // pred_fallthru
        _
    $region32: #{seanet_encoder_forward.8} parent=5 // pred_fallthru
      _
    %p540 = scmp.le.s32.totalorder 2, %s9
    // Predicated region
    $region37: #{seanet_encoder_forward.8} parent=5 // pred_check
      %p541 = pneg %p540
    $region38: #{seanet_encoder_forward.8} parent=5 // pred_check_branch
      %543 = sbr.rel (%p541) target = $region40
    $region39: #{seanet_encoder_forward.8} parent=5 // pred_region
      %s544 = ssub.s32 %s9, 2
      // Predicated region
      $region41: #{seanet_encoder_forward.8} parent=39 // pred_check
        %p545 = pneg %p106
      $region42: #{seanet_encoder_forward.8} parent=39 // pred_check_branch
        %547 = sbr.rel (%p545) target = $region44
      $region43: #{seanet_encoder_forward.8} parent=39 // pred_region
        %p548 = scmp.lt.s32.totalorder %s15, 1
        %s549 = scalar_select %p548, %s15, 1
        %s550 = smul.addr %s549, 4
        %s551 = smul.addr %s550, 8
        %s552 = scalar_lea.vmem %s3, %s551
      $region44: #{seanet_encoder_forward.8} parent=39 // pred_fallthru
        _
    $region40: #{seanet_encoder_forward.8} parent=5 // pred_fallthru
      _
  $region6: #{seanet_encoder_forward.8} parent=0 // loop_footer
    %s13 = sadd.s32 1, %s9
  $region7: #{seanet_encoder_forward.8} parent=0 // loop_footer_branch
    %8 = sbr.rel target = $region3
  $region8: #{seanet_encoder_forward.8} parent=0 // loop_exit
    _

// kernel: seanet_encoder_forward.7
$region0: #{seanet_encoder_forward.7}
  #allocation0 [shape = 'u32[]', space=smem, size = 0x4, offset = 0x4, fixed_abs, tag = 'smem constant byte address 0x4 - core index']
  #allocation1 [shape = 'u32[144,128]{1,0:T(1,128)}', space=vmem, size = 0x12000, scoped, tag = 'internal scratch']
  %s0 = inlined_call_operand.vmem [shape: f32[2,66,128], index: 0, kind: input, shape index: {}]
  %s1 = inlined_call_operand.vmem [shape: f32[3,128,128], index: 1, kind: input, shape index: {}]
  %s2 = inlined_call_operand.vmem [shape: f32[1,128], index: 2, kind: input, shape index: {}]
  %s3 = inlined_call_operand.vmem [shape: f32[1,128,128], index: 3, kind: input, shape index: {}]
  %s4 = inlined_call_operand.vmem [shape: f32[1,128], index: 4, kind: input, shape index: {}]
  %s5 = inlined_call_operand.vmem [shape: f32[2,64,128], index: 5, kind: output, shape index: {}]
  %s6 = sld [smem:[#allocation0]]
  $region53: #{seanet_encoder_forward.7} parent=0
    _
  %s8 = ssub.s32 1, %s6
  %s9 = scalar_select 0, %s8, %s6
  loop: start=0, step=1, limit=4
  $region2: #{seanet_encoder_forward.7} parent=0 // loop_pre_header
    _
  $region3: #{seanet_encoder_forward.7} parent=0 // loop_header
    %s11 = sphi 0, %s15
    %p12 = scmp.ge.s32.totalorder %s11, 4
    %s21 = sphi 0, %s23
    %s24 = sphi 0, %s21
    %s25 = sphi 0, %s24
    %s41 = sphi 0, %s25
    %s45 = sphi 0, %s45
    %s47 = sphi 0, %s45
    %s48 = sphi 0, %s47
    %s62 = sphi 0, %s48
    %s66 = sphi 0, %s66
    %s68 = sphi 0, %s66
    %s69 = sphi 0, %s68
    %s83 = sphi 0, %s69
    %s87 = sphi 0, %s87
    %s89 = sphi 0, %s87
    %s90 = sphi 0, %s89
    %s104 = sphi 0, %s90
    %s108 = sphi 0, %s108
    %s110 = sphi 0, %s108
    %s111 = sphi 0, %s110
    %s125 = sphi 0, %s111
    %s131 = sphi 0, %s133
    %s134 = sphi 0, %s131
    %s135 = sphi 0, %s134
    %s151 = sphi 0, %s135
  $region4: #{seanet_encoder_forward.7} parent=0 // loop_header_branch
    %14 = sbr.rel (%p12) target = $region8
  $region5: #{seanet_encoder_forward.7} parent=0 // loop_body
    %s16 = ssub.s32 %s11, 1
    %s17 = ssub.s32 %s11, 2
    %s18 = sadd.s32 %s11, 1
    %s19 = ssub.s32 %s11, %s18
    %p20 = scmp.eq.s32.totalorder %s19, 0
    %s22 = sadd.s32 %s21, 1
    %s23 = scalar_select %p20, %s21, %s22
    %p26 = pneg %p20
    %p27 = scmp.eq.s32.totalorder %s11, 1
    %p28 = por %p26, %p27
    %p29 = scmp.ne.s32.totalorder %s21, %s24
    %p30 = scmp.eq.s32.totalorder %s11, 0
    %p31 = por %p29, %p30
    %p32 = scmp.ne.s32.totalorder %s21, %s24
    %p33 = scmp.eq.s32.totalorder %s16, 1
    %p34 = por %p32, %p33
    %p35 = scmp.ne.s32.totalorder %s24, %s25
    %p36 = scmp.eq.s32.totalorder %s16, 0
    %p37 = por %p35, %p36
    %p38 = scmp.ne.s32.totalorder %s24, %s25
    %p39 = scmp.eq.s32.totalorder %s17, 1
    %p40 = por %p38, %p39
    %p42 = scmp.ne.s32.totalorder %s25, %s41
    %p43 = scmp.eq.s32.totalorder %s17, 0
    %p44 = por %p42, %p43
    %s46 = sadd.s32 %s45, 1
    %p49 = scmp.eq.s32.totalorder %s11, 1
    %p50 = scmp.ne.s32.totalorder %s45, %s47
    %p51 = scmp.eq.s32.totalorder %s11, 0
    %p52 = por %p50, %p51
    %p53 = scmp.ne.s32.totalorder %s45, %s47
    %p54 = scmp.eq.s32.totalorder %s16, 1
    %p55 = por %p53, %p54
    %p56 = scmp.ne.s32.totalorder %s47, %s48
    %p57 = scmp.eq.s32.totalorder %s16, 0
    %p58 = por %p56, %p57
    %p59 = scmp.ne.s32.totalorder %s47, %s48
    %p60 = scmp.eq.s32.totalorder %s17, 1
    %p61 = por %p59, %p60
    %p63 = scmp.ne.s32.totalorder %s48, %s62
    %p64 = scmp.eq.s32.totalorder %s17, 0
    %p65 = por %p63, %p64
    %s67 = sadd.s32 %s66, 1
    %p70 = scmp.eq.s32.totalorder %s11, 1
    %p71 = scmp.ne.s32.totalorder %s66, %s68
    %p72 = scmp.eq.s32.totalorder %s11, 0
    %p73 = por %p71, %p72
    %p74 = scmp.ne.s32.totalorder %s66, %s68
    %p75 = scmp.eq.s32.totalorder %s16, 1
    %p76 = por %p74, %p75
    %p77 = scmp.ne.s32.totalorder %s68, %s69
    %p78 = scmp.eq.s32.totalorder %s16, 0
    %p79 = por %p77, %p78
    %p80 = scmp.ne.s32.totalorder %s68, %s69
    %p81 = scmp.eq.s32.totalorder %s17, 1
    %p82 = por %p80, %p81
    %p84 = scmp.ne.s32.totalorder %s69, %s83
    %p85 = scmp.eq.s32.totalorder %s17, 0
    %p86 = por %p84, %p85
    %s88 = sadd.s32 %s87, 1
    %p91 = scmp.eq.s32.totalorder %s11, 1
    %p92 = scmp.ne.s32.totalorder %s87, %s89
    %p93 = scmp.eq.s32.totalorder %s11, 0
    %p94 = por %p92, %p93
    %p95 = scmp.ne.s32.totalorder %s87, %s89
    %p96 = scmp.eq.s32.totalorder %s16, 1
    %p97 = por %p95, %p96
    %p98 = scmp.ne.s32.totalorder %s89, %s90
    %p99 = scmp.eq.s32.totalorder %s16, 0
    %p100 = por %p98, %p99
    %p101 = scmp.ne.s32.totalorder %s89, %s90
    %p102 = scmp.eq.s32.totalorder %s17, 1
    %p103 = por %p101, %p102
    %p105 = scmp.ne.s32.totalorder %s90, %s104
    %p106 = scmp.eq.s32.totalorder %s17, 0
    %p107 = por %p105, %p106
    %s109 = sadd.s32 %s108, 1
    %p112 = scmp.eq.s32.totalorder %s11, 1
    %p113 = scmp.ne.s32.totalorder %s108, %s110
    %p114 = scmp.eq.s32.totalorder %s11, 0
    %p115 = por %p113, %p114
    %p116 = scmp.ne.s32.totalorder %s108, %s110
    %p117 = scmp.eq.s32.totalorder %s16, 1
    %p118 = por %p116, %p117
    %p119 = scmp.ne.s32.totalorder %s110, %s111
    %p120 = scmp.eq.s32.totalorder %s16, 0
    %p121 = por %p119, %p120
    %p122 = scmp.ne.s32.totalorder %s110, %s111
    %p123 = scmp.eq.s32.totalorder %s17, 1
    %p124 = por %p122, %p123
    %p126 = scmp.ne.s32.totalorder %s111, %s125
    %p127 = scmp.eq.s32.totalorder %s17, 0
    %p128 = por %p126, %p127
    %s129 = ssub.s32 %s11, %s18
    %p130 = scmp.eq.s32.totalorder %s129, 0
    %s132 = sadd.s32 %s131, 1
    %s133 = scalar_select %p130, %s131, %s132
    %p136 = pneg %p130
    %p137 = scmp.eq.s32.totalorder %s11, 1
    %p138 = por %p136, %p137
    %p139 = scmp.ne.s32.totalorder %s131, %s134
    %p140 = scmp.eq.s32.totalorder %s11, 0
    %p141 = por %p139, %p140
    %p142 = scmp.ne.s32.totalorder %s131, %s134
    %p143 = scmp.eq.s32.totalorder %s16, 1
    %p144 = por %p142, %p143
    %p145 = scmp.ne.s32.totalorder %s134, %s135
    %p146 = scmp.eq.s32.totalorder %s16, 0
    %p147 = por %p145, %p146
    %p148 = scmp.ne.s32.totalorder %s134, %s135
    %p149 = scmp.eq.s32.totalorder %s17, 1
    %p150 = por %p148, %p149
    %p152 = scmp.ne.s32.totalorder %s135, %s151
    %p153 = scmp.eq.s32.totalorder %s17, 0
    %p154 = por %p152, %p153
    %p155 = scmp.le.s32.totalorder 1, %s11
    %p156 = scmp.lt.s32.totalorder %s11, 3
    %p157 = pnand %p155, %p156
    %p158 = pneg %p157
    // Predicated region
    $region9: #{seanet_encoder_forward.7} parent=5 // pred_check
      _
    $region10: #{seanet_encoder_forward.7} parent=5 // pred_check_branch
      %160 = sbr.rel (%p157) target = $region12
    $region11: #{seanet_encoder_forward.7} parent=5 // pred_region
      %s161 = ssub.s32 %s11, 1
      // Predicated region
      $region13: #{seanet_encoder_forward.7} parent=11 // pred_check
        %p162 = pneg %p58
      $region14: #{seanet_encoder_forward.7} parent=11 // pred_check_branch
        %164 = sbr.rel (%p162) target = $region16
      $region15: #{seanet_encoder_forward.7} parent=11 // pred_region
        _
      $region16: #{seanet_encoder_forward.7} parent=11 // pred_fallthru
        _
      // Predicated region
      $region17: #{seanet_encoder_forward.7} parent=11 // pred_check
        %p165 = pneg %p79
      $region18: #{seanet_encoder_forward.7} parent=11 // pred_check_branch
        %167 = sbr.rel (%p165) target = $region20
      $region19: #{seanet_encoder_forward.7} parent=11 // pred_region
        _
      $region20: #{seanet_encoder_forward.7} parent=11 // pred_fallthru
        _
      // Predicated region
      $region21: #{seanet_encoder_forward.7} parent=11 // pred_check
        %p168 = pneg %p100
      $region22: #{seanet_encoder_forward.7} parent=11 // pred_check_branch
        %170 = sbr.rel (%p168) target = $region24
      $region23: #{seanet_encoder_forward.7} parent=11 // pred_region
        _
      $region24: #{seanet_encoder_forward.7} parent=11 // pred_fallthru
        _
      // Predicated region
      $region25: #{seanet_encoder_forward.7} parent=11 // pred_check
        %p171 = pneg %p121
      $region26: #{seanet_encoder_forward.7} parent=11 // pred_check_branch
        %173 = sbr.rel (%p171) target = $region28
      $region27: #{seanet_encoder_forward.7} parent=11 // pred_region
        _
      $region28: #{seanet_encoder_forward.7} parent=11 // pred_fallthru
        _
    $region12: #{seanet_encoder_forward.7} parent=5 // pred_fallthru
      _
    %p174 = scmp.lt.s32.totalorder %s11, 2
    // Predicated region
    $region29: #{seanet_encoder_forward.7} parent=5 // pred_check
      %p175 = pneg %p174
    $region30: #{seanet_encoder_forward.7} parent=5 // pred_check_branch
      %177 = sbr.rel (%p175) target = $region32
    $region31: #{seanet_encoder_forward.7} parent=5 // pred_region
      // Predicated region
      $region33: #{seanet_encoder_forward.7} parent=31 // pred_check
        %p178 = pneg %p31
      $region34: #{seanet_encoder_forward.7} parent=31 // pred_check_branch
        %180 = sbr.rel (%p178) target = $region36
      $region35: #{seanet_encoder_forward.7} parent=31 // pred_region
        %p181 = scmp.lt.s32.totalorder %s11, 1
        %s182 = scalar_select %p181, %s11, 1
        %s183 = smul.addr %s182, 9
        %s184 = smul.addr %s183, 8
        %s185 = scalar_lea.vmem %s0, %s184
      $region36: #{seanet_encoder_forward.7} parent=31 // pred_fallthru
        _
    $region32: #{seanet_encoder_forward.7} parent=5 // pred_fallthru
      _
    %p186 = scmp.le.s32.totalorder 1, %s11
    %p187 = scmp.lt.s32.totalorder %s11, 3
    %p188 = pnand %p186, %p187
    %p189 = pneg %p188
    // Predicated region
    $region37: #{seanet_encoder_forward.7} parent=5 // pred_check
      _
    $region38: #{seanet_encoder_forward.7} parent=5 // pred_check_branch
      %191 = sbr.rel (%p188) target = $region40
    $region39: #{seanet_encoder_forward.7} parent=5 // pred_region
      %s192 = ssub.s32 %s11, 1
      %p193 = scmp.lt.s32.totalorder %s16, 1
      %s194 = scalar_select %p193, %s16, 1
      %s195 = smul.addr %s194, 9
      %s196 = smul.addr %s195, 8
      %s197 = scalar_lea.vmem %s0, %s196
      %p198 = pneg %p37
      %p199 = pneg %p34
      %p200 = pneg %p58
      %p201 = pneg %p55
      %p202 = pneg %p79
      %p203 = pneg %p76
      %p204 = pneg %p100
      %p205 = pneg %p97
      %p206 = pneg %p121
      %p207 = pneg %p118
      %p208 = pneg %p147
      %p209 = pneg %p144
      %p210 = scmp.lt.s32.totalorder %s16, 1
      %s211 = scalar_select %p210, %s16, 1
      %s212 = smul.addr %s211, 8
      %s213 = smul.addr %s212, 8
      %s214 = scalar_lea.vmem %s5, %s213
      %p215 = scmp.lt.s32.totalorder %s16, 1
      %s216 = scalar_select %p215, %s16, 1
      %s217 = smul.addr %s216, 9
      %s218 = smul.addr %s217, 8
      %s219 = scalar_lea.vmem %s0, %s218
      %p220 = scmp.lt.s32.totalorder %s16, 1
      %s221 = scalar_select %p220, %s16, 1
      %s222 = smul.addr %s221, 8
      %s223 = smul.addr %s222, 8
      %s224 = scalar_lea.vmem %s5, %s223
      %v225 = vld [vmem:[%s219] sm:$0xff]
      %v226 = vld [vmem:[%s219 + $0x8] sm:$0xff]
      %v227 = vld [vmem:[%s219 + $0x10] sm:$0xff]
      %v228 = vld [vmem:[%s219 + $0x18] sm:$0xff]
      %v229 = vld [vmem:[%s219 + $0x20] sm:$0xff]
      %v230 = vld [vmem:[%s219 + $0x28] sm:$0xff]
      %v231 = vld [vmem:[%s219 + $0x30] sm:$0xff]
      %v232 = vld [vmem:[%s219 + $0x38] sm:$0xff]
      %v233 = vld [vmem:[%s219 + $0x40] sm:$0x3]
      %vm234 = vcmp.gt.f32.partialorder %v225, 0.0
      %vm235 = vcmp.gt.f32.partialorder %v226, 0.0
      %vm236 = vcmp.gt.f32.partialorder %v227, 0.0
      %vm237 = vcmp.gt.f32.partialorder %v228, 0.0
      %vm238 = vcmp.gt.f32.partialorder %v229, 0.0
      %vm239 = vcmp.gt.f32.partialorder %v230, 0.0
      %vm240 = vcmp.gt.f32.partialorder %v231, 0.0
      %vm241 = vcmp.gt.f32.partialorder %v232, 0.0
      %vm242 = vcmp.gt.f32.partialorder %v233, 0.0
      %v243 = vmin.f32 %v225, 0.0
      %v244 = vmin.f32 %v226, 0.0
      %v245 = vmin.f32 %v227, 0.0
      %v246 = vmin.f32 %v228, 0.0
      %v247 = vmin.f32 %v229, 0.0
      %v248 = vmin.f32 %v230, 0.0
      %v249 = vmin.f32 %v231, 0.0
      %v250 = vmin.f32 %v232, 0.0
      %v251 = vmin.f32 %v233, 0.0
      %v252 = vmul.f32 %v243, 1.442695
      %v253 = vpow.pop %v252
      %v254 = vmul.f32 %v244, 1.442695
      %v255 = vpow.pop %v254
      %v256 = vmul.f32 %v245, 1.442695
      %v257 = vpow.pop %v256
      %v258 = vmul.f32 %v246, 1.442695
      %v259 = vpow.pop %v258
      %v260 = vmul.f32 %v247, 1.442695
      %v261 = vpow.pop %v260
      %v262 = vmul.f32 %v248, 1.442695
      %v263 = vpow.pop %v262
      %v264 = vmul.f32 %v249, 1.442695
      %v265 = vpow.pop %v264
      %v266 = vmul.f32 %v250, 1.442695
      %v267 = vpow.pop %v266
      %v268 = vmul.f32 %v251, 1.442695
      %v269 = vpow.pop %v268
      %v270 = vsub.f32 %v253, 1.0
      %v271 = vsub.f32 %v255, 1.0
      %v272 = vsub.f32 %v257, 1.0
      %v273 = vsub.f32 %v259, 1.0
      %v274 = vsub.f32 %v261, 1.0
      %v275 = vsub.f32 %v263, 1.0
      %v276 = vsub.f32 %v265, 1.0
      %v277 = vsub.f32 %v267, 1.0
      %v278 = vsub.f32 %v269, 1.0
      %v279 = vsel %vm234, %v225, %v270
      %v280 = vsel %vm235, %v226, %v271
      %v281 = vsel %vm236, %v227, %v272
      %v282 = vsel %vm237, %v228, %v273
      %v283 = vsel %vm238, %v229, %v274
      %v284 = vsel %vm239, %v230, %v275
      %v285 = vsel %vm240, %v231, %v276
      %v286 = vsel %vm241, %v232, %v277
      %v287 = vsel %vm242, %v233, %v278
      %v288 = vld [vmem:[%s2] sm:$0x1]
      %v290 = vlaneseq
      %v291 = vshrl.u32 %v290, 7
      %v292 = vsub.s32 0, %v291
      %v293 = vrot.slane %v288, %v292
      %v295 = vld [vmem:[%s1] sm:$0xff]
      %v296 = vld [vmem:[%s1 + $0x8] sm:$0xff]
      %v297 = vld [vmem:[%s1 + $0x10] sm:$0xff]
      %v298 = vld [vmem:[%s1 + $0x18] sm:$0xff]
      %v299 = vld [vmem:[%s1 + $0x20] sm:$0xff]
      %v300 = vld [vmem:[%s1 + $0x28] sm:$0xff]
      %v301 = vld [vmem:[%s1 + $0x30] sm:$0xff]
      %v302 = vld [vmem:[%s1 + $0x38] sm:$0xff]
      %v303 = vld [vmem:[%s1 + $0x40] sm:$0xff]
      %v304 = vld [vmem:[%s1 + $0x48] sm:$0xff]
      %v305 = vld [vmem:[%s1 + $0x50] sm:$0xff]
      %v306 = vld [vmem:[%s1 + $0x58] sm:$0xff]
      %v307 = vld [vmem:[%s1 + $0x60] sm:$0xff]
      %v308 = vld [vmem:[%s1 + $0x68] sm:$0xff]
      %v309 = vld [vmem:[%s1 + $0x70] sm:$0xff]
      %v310 = vld [vmem:[%s1 + $0x78] sm:$0xff]
      %311 = vmatprep.subr.mxu0 0.0
      %312 = vmatpush1.msra.mxu0 %v310
      %313 = vmatprep.subr.mxu0 0.0
      %314 = vmatpush1.msra.mxu0 %v309
      %315 = vmatprep.subr.mxu0 0.0
      %316 = vmatpush1.msra.mxu0 %v308
      %317 = vmatprep.subr.mxu0 0.0
      %318 = vmatpush1.msra.mxu0 %v307
      %319 = vmatprep.subr.mxu0 0.0
      %320 = vmatpush1.msra.mxu0 %v306
      %321 = vmatprep.subr.mxu0 0.0
      %322 = vmatpush1.msra.mxu0 %v305
      %323 = vmatprep.subr.mxu0 0.0
      %324 = vmatpush1.msra.mxu0 %v304
      %325 = vmatprep.subr.mxu0 0.0
      %326 = vmatpush1.msra.mxu0 %v303
      %327 = vmatprep.subr.mxu0 0.0
      %328 = vmatpush1.msra.mxu0 %v302
      %329 = vmatprep.subr.mxu0 0.0
      %330 = vmatpush1.msra.mxu0 %v301
      %331 = vmatprep.subr.mxu0 0.0
      %332 = vmatpush1.msra.mxu0 %v300
      %333 = vmatprep.subr.mxu0 0.0
      %334 = vmatpush1.msra.mxu0 %v299
      %335 = vmatprep.subr.mxu0 0.0
      %336 = vmatpush1.msra.mxu0 %v298
      %337 = vmatprep.subr.mxu0 0.0
      %338 = vmatpush1.msra.mxu0 %v297
      %339 = vmatprep.subr.mxu0 0.0
      %340 = vmatpush1.msra.mxu0 %v296
      %341 = vmatprep.subr.mxu0 0.0
      %342 = vmatpush1.msra.mxu0 %v295
      %343 = vmatprep.subr.mxu0 0.0
      %344 = vmatpush2.msra.mxu0 0.0
      %345 = vmatprep.subr.mxu0 0.0
      %346 = vmatpush2.msra.mxu0 0.0
      %347 = vmatprep.subr.mxu0 0.0
      %348 = vmatpush2.msra.mxu0 0.0
      %349 = vmatprep.subr.mxu0 0.0
      %350 = vmatpush2.msra.mxu0 0.0
      %351 = vmatprep.subr.mxu0 0.0
      %352 = vmatpush2.msra.mxu0 0.0
      %353 = vmatprep.subr.mxu0 0.0
      %354 = vmatpush2.msra.mxu0 0.0
      %355 = vmatprep.subr.mxu0 0.0
      %356 = vmatpush2.msra.mxu0 0.0
      %357 = vmatprep.subr.mxu0 0.0
      %358 = vmatpush2.msra.mxu0 0.0
      %359 = vmatprep.subr.mxu0 0.0
      %360 = vmatpush2.msra.mxu0 0.0
      %361 = vmatprep.subr.mxu0 0.0
      %362 = vmatpush2.msra.mxu0 0.0
      %363 = vmatprep.subr.mxu0 0.0
      %364 = vmatpush2.msra.mxu0 0.0
      %365 = vmatprep.subr.mxu0 0.0
      %366 = vmatpush2.msra.mxu0 0.0
      %367 = vmatprep.subr.mxu0 0.0
      %368 = vmatpush2.msra.mxu0 0.0
      %369 = vmatprep.subr.mxu0 0.0
      %370 = vmatpush2.msra.mxu0 0.0
      %371 = vmatprep.subr.mxu0 0.0
      %372 = vmatpush2.msra.mxu0 0.0
      %373 = vmatprep.subr.mxu0 0.0
      %374 = vmatpush2.msra.mxu0 0.0
      %375 = vmatprep.mubr.f32.mxu0 0.0
      %376 = vmatmul.mubr.f32.gmra.mxu0 %v279
      %v377 = vpop.f32.mrf.mxu0
      %v378 = vadd.f32 0.0, %v377
      %v379 = vpop.f32.mrf.mxu0
      %380 = vmatprep.mubr.f32.mxu0 0.0
      %381 = vmatmul.mubr.f32.gmra.mxu0 %v280
      %v382 = vpop.f32.mrf.mxu0
      %v383 = vadd.f32 0.0, %v382
      %v384 = vpop.f32.mrf.mxu0
      %385 = vmatprep.mubr.f32.mxu0 0.0
      %386 = vmatmul.mubr.f32.gmra.mxu0 %v281
      %v387 = vpop.f32.mrf.mxu0
      %v388 = vadd.f32 0.0, %v387
      %v389 = vpop.f32.mrf.mxu0
      %390 = vmatprep.mubr.f32.mxu0 0.0
      %391 = vmatmul.mubr.f32.gmra.mxu0 %v282
      %v392 = vpop.f32.mrf.mxu0
      %v393 = vadd.f32 0.0, %v392
      %v394 = vpop.f32.mrf.mxu0
      %395 = vmatprep.mubr.f32.mxu0 0.0
      %396 = vmatmul.mubr.f32.gmra.mxu0 %v283
      %v397 = vpop.f32.mrf.mxu0
      %v398 = vadd.f32 0.0, %v397
      %v399 = vpop.f32.mrf.mxu0
      %400 = vmatprep.mubr.f32.mxu0 0.0
      %401 = vmatmul.mubr.f32.gmra.mxu0 %v284
      %v402 = vpop.f32.mrf.mxu0
      %v403 = vadd.f32 0.0, %v402
      %v404 = vpop.f32.mrf.mxu0
      %405 = vmatprep.mubr.f32.mxu0 0.0
      %406 = vmatmul.mubr.f32.gmra.mxu0 %v285
      %v407 = vpop.f32.mrf.mxu0
      %v408 = vadd.f32 0.0, %v407
      %v409 = vpop.f32.mrf.mxu0
      %410 = vmatprep.mubr.f32.mxu0 0.0
      %411 = vmatmul.mubr.f32.gmra.mxu0 %v286
      %v412 = vpop.f32.mrf.mxu0
      %v413 = vadd.f32 0.0, %v412
      %v414 = vpop.f32.mrf.mxu0
      %415 = vdwg.mxu0
      %v416 = vadd.f32 %v293, %v378
      %v417 = vadd.f32 %v293, %v383
      %v418 = vadd.f32 %v293, %v388
      %v419 = vadd.f32 %v293, %v393
      %v420 = vadd.f32 %v293, %v398
      %v421 = vadd.f32 %v293, %v403
      %v422 = vadd.f32 %v293, %v408
      %v423 = vadd.f32 %v293, %v413
      %s424 = scalar_lea.vmem %s1, 128
      %v425 = vld [vmem:[%s424] sm:$0xff]
      %v426 = vld [vmem:[%s424 + $0x8] sm:$0xff]
      %v427 = vld [vmem:[%s424 + $0x10] sm:$0xff]
      %v428 = vld [vmem:[%s424 + $0x18] sm:$0xff]
      %v429 = vld [vmem:[%s424 + $0x20] sm:$0xff]
      %v430 = vld [vmem:[%s424 + $0x28] sm:$0xff]
      %v431 = vld [vmem:[%s424 + $0x30] sm:$0xff]
      %v432 = vld [vmem:[%s424 + $0x38] sm:$0xff]
      %v433 = vld [vmem:[%s424 + $0x40] sm:$0xff]
      %v434 = vld [vmem:[%s424 + $0x48] sm:$0xff]
      %v435 = vld [vmem:[%s424 + $0x50] sm:$0xff]
      %v436 = vld [vmem:[%s424 + $0x58] sm:$0xff]
      %v437 = vld [vmem:[%s424 + $0x60] sm:$0xff]
      %v438 = vld [vmem:[%s424 + $0x68] sm:$0xff]
      %v439 = vld [vmem:[%s424 + $0x70] sm:$0xff]
      %v440 = vld [vmem:[%s424 + $0x78] sm:$0xff]
      %vm450 = vcmask 1046528
      %v451 = vrot.slane %v279, 1
      %v452 = vrot.slane %v280, 1
      %v453 = vsel %vm450, %v451, %v452
      %v454 = vrot.slane %v281, 1
      %v455 = vsel %vm450, %v452, %v454
      %v456 = vrot.slane %v282, 1
      %v457 = vsel %vm450, %v454, %v456
      %v458 = vrot.slane %v283, 1
      %v459 = vsel %vm450, %v456, %v458
      %v460 = vrot.slane %v284, 1
      %v461 = vsel %vm450, %v458, %v460
      %v462 = vrot.slane %v285, 1
      %v463 = vsel %vm450, %v460, %v462
      %v464 = vrot.slane %v286, 1
      %v465 = vsel %vm450, %v462, %v464
      %v466 = vrot.slane %v287, 1
      %v467 = vsel %vm450, %v464, %v466
      %476 = vmatprep.subr.mxu0 0.0
      %477 = vmatpush1.msra.mxu0 %v440
      %478 = vmatprep.subr.mxu0 0.0
      %479 = vmatpush1.msra.mxu0 %v439
      %480 = vmatprep.subr.mxu0 0.0
      %481 = vmatpush1.msra.mxu0 %v438
      %482 = vmatprep.subr.mxu0 0.0
      %483 = vmatpush1.msra.mxu0 %v437
      %484 = vmatprep.subr.mxu0 0.0
      %485 = vmatpush1.msra.mxu0 %v436
      %486 = vmatprep.subr.mxu0 0.0
      %487 = vmatpush1.msra.mxu0 %v435
      %488 = vmatprep.subr.mxu0 0.0
      %489 = vmatpush1.msra.mxu0 %v434
      %490 = vmatprep.subr.mxu0 0.0
      %491 = vmatpush1.msra.mxu0 %v433
      %492 = vmatprep.subr.mxu0 0.0
      %493 = vmatpush1.msra.mxu0 %v432
      %494 = vmatprep.subr.mxu0 0.0
      %495 = vmatpush1.msra.mxu0 %v431
      %496 = vmatprep.subr.mxu0 0.0
      %497 = vmatpush1.msra.mxu0 %v430
      %498 = vmatprep.subr.mxu0 0.0
      %499 = vmatpush1.msra.mxu0 %v429
      %500 = vmatprep.subr.mxu0 0.0
      %501 = vmatpush1.msra.mxu0 %v428
      %502 = vmatprep.subr.mxu0 0.0
      %503 = vmatpush1.msra.mxu0 %v427
      %504 = vmatprep.subr.mxu0 0.0
      %505 = vmatpush1.msra.mxu0 %v426
      %506 = vmatprep.subr.mxu0 0.0
      %507 = vmatpush1.msra.mxu0 %v425
      %508 = vmatprep.subr.mxu0 0.0
      %509 = vmatpush2.msra.mxu0 0.0
      %510 = vmatprep.subr.mxu0 0.0
      %511 = vmatpush2.msra.mxu0 0.0
      %512 = vmatprep.subr.mxu0 0.0
      %513 = vmatpush2.msra.mxu0 0.0
      %514 = vmatprep.subr.mxu0 0.0
      %515 = vmatpush2.msra.mxu0 0.0
      %516 = vmatprep.subr.mxu0 0.0
      %517 = vmatpush2.msra.mxu0 0.0
      %518 = vmatprep.subr.mxu0 0.0
      %519 = vmatpush2.msra.mxu0 0.0
      %520 = vmatprep.subr.mxu0 0.0
      %521 = vmatpush2.msra.mxu0 0.0
      %522 = vmatprep.subr.mxu0 0.0
      %523 = vmatpush2.msra.mxu0 0.0
      %524 = vmatprep.subr.mxu0 0.0
      %525 = vmatpush2.msra.mxu0 0.0
      %526 = vmatprep.subr.mxu0 0.0
      %527 = vmatpush2.msra.mxu0 0.0
      %528 = vmatprep.subr.mxu0 0.0
      %529 = vmatpush2.msra.mxu0 0.0
      %530 = vmatprep.subr.mxu0 0.0
      %531 = vmatpush2.msra.mxu0 0.0
      %532 = vmatprep.subr.mxu0 0.0
      %533 = vmatpush2.msra.mxu0 0.0
      %534 = vmatprep.subr.mxu0 0.0
      %535 = vmatpush2.msra.mxu0 0.0
      %536 = vmatprep.subr.mxu0 0.0
      %537 = vmatpush2.msra.mxu0 0.0
      %538 = vmatprep.subr.mxu0 0.0
      %539 = vmatpush2.msra.mxu0 0.0
      %540 = vmatprep.mubr.f32.mxu0 0.0
      %541 = vmatmul.mubr.f32.gmra.mxu0 %v453
      %v542 = vpop.f32.mrf.mxu0
      %v543 = vadd.f32 0.0, %v542
      %v544 = vpop.f32.mrf.mxu0
      %545 = vmatprep.mubr.f32.mxu0 0.0
      %546 = vmatmul.mubr.f32.gmra.mxu0 %v455
      %v547 = vpop.f32.mrf.mxu0
      %v548 = vadd.f32 0.0, %v547
      %v549 = vpop.f32.mrf.mxu0
      %550 = vmatprep.mubr.f32.mxu0 0.0
      %551 = vmatmul.mubr.f32.gmra.mxu0 %v457
      %v552 = vpop.f32.mrf.mxu0
      %v553 = vadd.f32 0.0, %v552
      %v554 = vpop.f32.mrf.mxu0
      %555 = vmatprep.mubr.f32.mxu0 0.0
      %556 = vmatmul.mubr.f32.gmra.mxu0 %v459
      %v557 = vpop.f32.mrf.mxu0
      %v558 = vadd.f32 0.0, %v557
      %v559 = vpop.f32.mrf.mxu0
      %560 = vmatprep.mubr.f32.mxu0 0.0
      %561 = vmatmul.mubr.f32.gmra.mxu0 %v461
      %v562 = vpop.f32.mrf.mxu0
      %v563 = vadd.f32 0.0, %v562
      %v564 = vpop.f32.mrf.mxu0
      %565 = vmatprep.mubr.f32.mxu0 0.0
      %566 = vmatmul.mubr.f32.gmra.mxu0 %v463
      %v567 = vpop.f32.mrf.mxu0
      %v568 = vadd.f32 0.0, %v567
      %v569 = vpop.f32.mrf.mxu0
      %570 = vmatprep.mubr.f32.mxu0 0.0
      %571 = vmatmul.mubr.f32.gmra.mxu0 %v465
      %v572 = vpop.f32.mrf.mxu0
      %v573 = vadd.f32 0.0, %v572
      %v574 = vpop.f32.mrf.mxu0
      %575 = vmatprep.mubr.f32.mxu0 0.0
      %576 = vmatmul.mubr.f32.gmra.mxu0 %v467
      %v577 = vpop.f32.mrf.mxu0
      %v578 = vadd.f32 0.0, %v577
      %v579 = vpop.f32.mrf.mxu0
      %580 = vdwg.mxu0
      %v581 = vadd.f32 %v416, %v543
      %v582 = vadd.f32 %v417, %v548
      %v583 = vadd.f32 %v418, %v553
      %v584 = vadd.f32 %v419, %v558
      %v585 = vadd.f32 %v420, %v563
      %v586 = vadd.f32 %v421, %v568
      %v587 = vadd.f32 %v422, %v573
      %v588 = vadd.f32 %v423, %v578
      %s589 = scalar_lea.vmem %s1, 256
      %v590 = vld [vmem:[%s589] sm:$0xff]
      %v591 = vld [vmem:[%s589 + $0x8] sm:$0xff]
      %v592 = vld [vmem:[%s589 + $0x10] sm:$0xff]
      %v593 = vld [vmem:[%s589 + $0x18] sm:$0xff]
      %v594 = vld [vmem:[%s589 + $0x20] sm:$0xff]
      %v595 = vld [vmem:[%s589 + $0x28] sm:$0xff]
      %v596 = vld [vmem:[%s589 + $0x30] sm:$0xff]
      %v597 = vld [vmem:[%s589 + $0x38] sm:$0xff]
      %v598 = vld [vmem:[%s589 + $0x40] sm:$0xff]
      %v599 = vld [vmem:[%s589 + $0x48] sm:$0xff]
      %v600 = vld [vmem:[%s589 + $0x50] sm:$0xff]
      %v601 = vld [vmem:[%s589 + $0x58] sm:$0xff]
      %v602 = vld [vmem:[%s589 + $0x60] sm:$0xff]
      %v603 = vld [vmem:[%s589 + $0x68] sm:$0xff]
      %v604 = vld [vmem:[%s589 + $0x70] sm:$0xff]
      %v605 = vld [vmem:[%s589 + $0x78] sm:$0xff]
      %vm606 = vcmask 1045504
      %v607 = vrot.slane %v279, 2
      %v608 = vrot.slane %v280, 2
      %v609 = vsel %vm606, %v607, %v608
      %v610 = vrot.slane %v281, 2
      %v611 = vsel %vm606, %v608, %v610
      %v612 = vrot.slane %v282, 2
      %v613 = vsel %vm606, %v610, %v612
      %v614 = vrot.slane %v283, 2
      %v615 = vsel %vm606, %v612, %v614
      %v616 = vrot.slane %v284, 2
      %v617 = vsel %vm606, %v614, %v616
      %v618 = vrot.slane %v285, 2
      %v619 = vsel %vm606, %v616, %v618
      %v620 = vrot.slane %v286, 2
      %v621 = vsel %vm606, %v618, %v620
      %v622 = vrot.slane %v287, 2
      %v623 = vsel %vm606, %v620, %v622
      %632 = vmatprep.subr.mxu0 0.0
      %633 = vmatpush1.msra.mxu0 %v605
      %634 = vmatprep.subr.mxu0 0.0
      %635 = vmatpush1.msra.mxu0 %v604
      %636 = vmatprep.subr.mxu0 0.0
      %637 = vmatpush1.msra.mxu0 %v603
      %638 = vmatprep.subr.mxu0 0.0
      %639 = vmatpush1.msra.mxu0 %v602
      %640 = vmatprep.subr.mxu0 0.0
      %641 = vmatpush1.msra.mxu0 %v601
      %642 = vmatprep.subr.mxu0 0.0
      %643 = vmatpush1.msra.mxu0 %v600
      %644 = vmatprep.subr.mxu0 0.0
      %645 = vmatpush1.msra.mxu0 %v599
      %646 = vmatprep.subr.mxu0 0.0
      %647 = vmatpush1.msra.mxu0 %v598
      %648 = vmatprep.subr.mxu0 0.0
      %649 = vmatpush1.msra.mxu0 %v597
      %650 = vmatprep.subr.mxu0 0.0
      %651 = vmatpush1.msra.mxu0 %v596
      %652 = vmatprep.subr.mxu0 0.0
      %653 = vmatpush1.msra.mxu0 %v595
      %654 = vmatprep.subr.mxu0 0.0
      %655 = vmatpush1.msra.mxu0 %v594
      %656 = vmatprep.subr.mxu0 0.0
      %657 = vmatpush1.msra.mxu0 %v593
      %658 = vmatprep.subr.mxu0 0.0
      %659 = vmatpush1.msra.mxu0 %v592
      %660 = vmatprep.subr.mxu0 0.0
      %661 = vmatpush1.msra.mxu0 %v591
      %662 = vmatprep.subr.mxu0 0.0
      %663 = vmatpush1.msra.mxu0 %v590
      %664 = vmatprep.subr.mxu0 0.0
      %665 = vmatpush2.msra.mxu0 0.0
      %666 = vmatprep.subr.mxu0 0.0
      %667 = vmatpush2.msra.mxu0 0.0
      %668 = vmatprep.subr.mxu0 0.0
      %669 = vmatpush2.msra.mxu0 0.0
      %670 = vmatprep.subr.mxu0 0.0
      %671 = vmatpush2.msra.mxu0 0.0
      %672 = vmatprep.subr.mxu0 0.0
      %673 = vmatpush2.msra.mxu0 0.0
      %674 = vmatprep.subr.mxu0 0.0
      %675 = vmatpush2.msra.mxu0 0.0
      %676 = vmatprep.subr.mxu0 0.0
      %677 = vmatpush2.msra.mxu0 0.0
      %678 = vmatprep.subr.mxu0 0.0
      %679 = vmatpush2.msra.mxu0 0.0
      %680 = vmatprep.subr.mxu0 0.0
      %681 = vmatpush2.msra.mxu0 0.0
      %682 = vmatprep.subr.mxu0 0.0
      %683 = vmatpush2.msra.mxu0 0.0
      %684 = vmatprep.subr.mxu0 0.0
      %685 = vmatpush2.msra.mxu0 0.0
      %686 = vmatprep.subr.mxu0 0.0
      %687 = vmatpush2.msra.mxu0 0.0
      %688 = vmatprep.subr.mxu0 0.0
      %689 = vmatpush2.msra.mxu0 0.0
      %690 = vmatprep.subr.mxu0 0.0
      %691 = vmatpush2.msra.mxu0 0.0
      %692 = vmatprep.subr.mxu0 0.0
      %693 = vmatpush2.msra.mxu0 0.0
      %694 = vmatprep.subr.mxu0 0.0
      %695 = vmatpush2.msra.mxu0 0.0
      %696 = vmatprep.mubr.f32.mxu0 0.0
      %697 = vmatmul.mubr.f32.gmra.mxu0 %v609
      %v698 = vpop.f32.mrf.mxu0
      %v699 = vadd.f32 0.0, %v698
      %v700 = vpop.f32.mrf.mxu0
      %701 = vmatprep.mubr.f32.mxu0 0.0
      %702 = vmatmul.mubr.f32.gmra.mxu0 %v611
      %v703 = vpop.f32.mrf.mxu0
      %v704 = vadd.f32 0.0, %v703
      %v705 = vpop.f32.mrf.mxu0
      %706 = vmatprep.mubr.f32.mxu0 0.0
      %707 = vmatmul.mubr.f32.gmra.mxu0 %v613
      %v708 = vpop.f32.mrf.mxu0
      %v709 = vadd.f32 0.0, %v708
      %v710 = vpop.f32.mrf.mxu0
      %711 = vmatprep.mubr.f32.mxu0 0.0
      %712 = vmatmul.mubr.f32.gmra.mxu0 %v615
      %v713 = vpop.f32.mrf.mxu0
      %v714 = vadd.f32 0.0, %v713
      %v715 = vpop.f32.mrf.mxu0
      %716 = vmatprep.mubr.f32.mxu0 0.0
      %717 = vmatmul.mubr.f32.gmra.mxu0 %v617
      %v718 = vpop.f32.mrf.mxu0
      %v719 = vadd.f32 0.0, %v718
      %v720 = vpop.f32.mrf.mxu0
      %721 = vmatprep.mubr.f32.mxu0 0.0
      %722 = vmatmul.mubr.f32.gmra.mxu0 %v619
      %v723 = vpop.f32.mrf.mxu0
      %v724 = vadd.f32 0.0, %v723
      %v725 = vpop.f32.mrf.mxu0
      %726 = vmatprep.mubr.f32.mxu0 0.0
      %727 = vmatmul.mubr.f32.gmra.mxu0 %v621
      %v728 = vpop.f32.mrf.mxu0
      %v729 = vadd.f32 0.0, %v728
      %v730 = vpop.f32.mrf.mxu0
      %731 = vmatprep.mubr.f32.mxu0 0.0
      %732 = vmatmul.mubr.f32.gmra.mxu0 %v623
      %v733 = vpop.f32.mrf.mxu0
      %v734 = vadd.f32 0.0, %v733
      %v735 = vpop.f32.mrf.mxu0
      %736 = vdwg.mxu0
      %v737 = vadd.f32 %v581, %v699
      %v738 = vadd.f32 %v582, %v704
      %v739 = vadd.f32 %v583, %v709
      %v740 = vadd.f32 %v584, %v714
      %v741 = vadd.f32 %v585, %v719
      %v742 = vadd.f32 %v586, %v724
      %v743 = vadd.f32 %v587, %v729
      %v744 = vadd.f32 %v588, %v734
      %vm745 = vcmp.gt.f32.partialorder %v737, 0.0
      %vm746 = vcmp.gt.f32.partialorder %v738, 0.0
      %vm747 = vcmp.gt.f32.partialorder %v739, 0.0
      %vm748 = vcmp.gt.f32.partialorder %v740, 0.0
      %vm749 = vcmp.gt.f32.partialorder %v741, 0.0
      %vm750 = vcmp.gt.f32.partialorder %v742, 0.0
      %vm751 = vcmp.gt.f32.partialorder %v743, 0.0
      %vm752 = vcmp.gt.f32.partialorder %v744, 0.0
      %v753 = vmin.f32 %v737, 0.0
      %v754 = vmin.f32 %v738, 0.0
      %v755 = vmin.f32 %v739, 0.0
      %v756 = vmin.f32 %v740, 0.0
      %v757 = vmin.f32 %v741, 0.0
      %v758 = vmin.f32 %v742, 0.0
      %v759 = vmin.f32 %v743, 0.0
      %v760 = vmin.f32 %v744, 0.0
      %v761 = vmul.f32 %v753, 1.442695
      %v762 = vpow.pop %v761
      %v763 = vmul.f32 %v754, 1.442695
      %v764 = vpow.pop %v763
      %v765 = vmul.f32 %v755, 1.442695
      %v766 = vpow.pop %v765
      %v767 = vmul.f32 %v756, 1.442695
      %v768 = vpow.pop %v767
      %v769 = vmul.f32 %v757, 1.442695
      %v770 = vpow.pop %v769
      %v771 = vmul.f32 %v758, 1.442695
      %v772 = vpow.pop %v771
      %v773 = vmul.f32 %v759, 1.442695
      %v774 = vpow.pop %v773
      %v775 = vmul.f32 %v760, 1.442695
      %v776 = vpow.pop %v775
      %v777 = vsub.f32 %v762, 1.0
      %v778 = vsub.f32 %v764, 1.0
      %v779 = vsub.f32 %v766, 1.0
      %v780 = vsub.f32 %v768, 1.0
      %v781 = vsub.f32 %v770, 1.0
      %v782 = vsub.f32 %v772, 1.0
      %v783 = vsub.f32 %v774, 1.0
      %v784 = vsub.f32 %v776, 1.0
      %v785 = vsel %vm745, %v737, %v777
      %v786 = vsel %vm746, %v738, %v778
      %v787 = vsel %vm747, %v739, %v779
      %v788 = vsel %vm748, %v740, %v780
      %v789 = vsel %vm749, %v741, %v781
      %v790 = vsel %vm750, %v742, %v782
      %v791 = vsel %vm751, %v743, %v783
      %v792 = vsel %vm752, %v744, %v784
      %v793 = vld [vmem:[%s3] sm:$0xff]
      %v794 = vld [vmem:[%s3 + $0x8] sm:$0xff]
      %v795 = vld [vmem:[%s3 + $0x10] sm:$0xff]
      %v796 = vld [vmem:[%s3 + $0x18] sm:$0xff]
      %v797 = vld [vmem:[%s3 + $0x20] sm:$0xff]
      %v798 = vld [vmem:[%s3 + $0x28] sm:$0xff]
      %v799 = vld [vmem:[%s3 + $0x30] sm:$0xff]
      %v800 = vld [vmem:[%s3 + $0x38] sm:$0xff]
      %v801 = vld [vmem:[%s3 + $0x40] sm:$0xff]
      %v802 = vld [vmem:[%s3 + $0x48] sm:$0xff]
      %v803 = vld [vmem:[%s3 + $0x50] sm:$0xff]
      %v804 = vld [vmem:[%s3 + $0x58] sm:$0xff]
      %v805 = vld [vmem:[%s3 + $0x60] sm:$0xff]
      %v806 = vld [vmem:[%s3 + $0x68] sm:$0xff]
      %v807 = vld [vmem:[%s3 + $0x70] sm:$0xff]
      %v808 = vld [vmem:[%s3 + $0x78] sm:$0xff]
      %v809 = vld [vmem:[%s4] sm:$0x1]
      %v811 = vlaneseq
      %v812 = vshrl.u32 %v811, 7
      %v813 = vsub.s32 0, %v812
      %v814 = vrot.slane %v809, %v813
      %816 = vmatprep.subr.mxu0 0.0
      %817 = vmatpush1.msra.mxu0 %v808
      %818 = vmatprep.subr.mxu0 0.0
      %819 = vmatpush1.msra.mxu0 %v807
      %820 = vmatprep.subr.mxu0 0.0
      %821 = vmatpush1.msra.mxu0 %v806
      %822 = vmatprep.subr.mxu0 0.0
      %823 = vmatpush1.msra.mxu0 %v805
      %824 = vmatprep.subr.mxu0 0.0
      %825 = vmatpush1.msra.mxu0 %v804
      %826 = vmatprep.subr.mxu0 0.0
      %827 = vmatpush1.msra.mxu0 %v803
      %828 = vmatprep.subr.mxu0 0.0
      %829 = vmatpush1.msra.mxu0 %v802
      %830 = vmatprep.subr.mxu0 0.0
      %831 = vmatpush1.msra.mxu0 %v801
      %832 = vmatprep.subr.mxu0 0.0
      %833 = vmatpush1.msra.mxu0 %v800
      %834 = vmatprep.subr.mxu0 0.0
      %835 = vmatpush1.msra.mxu0 %v799
      %836 = vmatprep.subr.mxu0 0.0
      %837 = vmatpush1.msra.mxu0 %v798
      %838 = vmatprep.subr.mxu0 0.0
      %839 = vmatpush1.msra.mxu0 %v797
      %840 = vmatprep.subr.mxu0 0.0
      %841 = vmatpush1.msra.mxu0 %v796
      %842 = vmatprep.subr.mxu0 0.0
      %843 = vmatpush1.msra.mxu0 %v795
      %844 = vmatprep.subr.mxu0 0.0
      %845 = vmatpush1.msra.mxu0 %v794
      %846 = vmatprep.subr.mxu0 0.0
      %847 = vmatpush1.msra.mxu0 %v793
      %848 = vmatprep.subr.mxu0 0.0
      %849 = vmatpush2.msra.mxu0 0.0
      %850 = vmatprep.subr.mxu0 0.0
      %851 = vmatpush2.msra.mxu0 0.0
      %852 = vmatprep.subr.mxu0 0.0
      %853 = vmatpush2.msra.mxu0 0.0
      %854 = vmatprep.subr.mxu0 0.0
      %855 = vmatpush2.msra.mxu0 0.0
      %856 = vmatprep.subr.mxu0 0.0
      %857 = vmatpush2.msra.mxu0 0.0
      %858 = vmatprep.subr.mxu0 0.0
      %859 = vmatpush2.msra.mxu0 0.0
      %860 = vmatprep.subr.mxu0 0.0
      %861 = vmatpush2.msra.mxu0 0.0
      %862 = vmatprep.subr.mxu0 0.0
      %863 = vmatpush2.msra.mxu0 0.0
      %864 = vmatprep.subr.mxu0 0.0
      %865 = vmatpush2.msra.mxu0 0.0
      %866 = vmatprep.subr.mxu0 0.0
      %867 = vmatpush2.msra.mxu0 0.0
      %868 = vmatprep.subr.mxu0 0.0
      %869 = vmatpush2.msra.mxu0 0.0
      %870 = vmatprep.subr.mxu0 0.0
      %871 = vmatpush2.msra.mxu0 0.0
      %872 = vmatprep.subr.mxu0 0.0
      %873 = vmatpush2.msra.mxu0 0.0
      %874 = vmatprep.subr.mxu0 0.0
      %875 = vmatpush2.msra.mxu0 0.0
      %876 = vmatprep.subr.mxu0 0.0
      %877 = vmatpush2.msra.mxu0 0.0
      %878 = vmatprep.subr.mxu0 0.0
      %879 = vmatpush2.msra.mxu0 0.0
      %880 = vmatprep.mubr.f32.mxu0 0.0
      %881 = vmatmul.mubr.f32.gmra.mxu0 %v785
      %v882 = vpop.f32.mrf.mxu0
      %v883 = vadd.f32 %v814, %v882
      %v884 = vpop.f32.mrf.mxu0
      %885 = vmatprep.mubr.f32.mxu0 0.0
      %886 = vmatmul.mubr.f32.gmra.mxu0 %v786
      %v887 = vpop.f32.mrf.mxu0
      %v888 = vadd.f32 %v814, %v887
      %v889 = vpop.f32.mrf.mxu0
      %890 = vmatprep.mubr.f32.mxu0 0.0
      %891 = vmatmul.mubr.f32.gmra.mxu0 %v787
      %v892 = vpop.f32.mrf.mxu0
      %v893 = vadd.f32 %v814, %v892
      %v894 = vpop.f32.mrf.mxu0
      %895 = vmatprep.mubr.f32.mxu0 0.0
      %896 = vmatmul.mubr.f32.gmra.mxu0 %v788
      %v897 = vpop.f32.mrf.mxu0
      %v898 = vadd.f32 %v814, %v897
      %v899 = vpop.f32.mrf.mxu0
      %900 = vmatprep.mubr.f32.mxu0 0.0
      %901 = vmatmul.mubr.f32.gmra.mxu0 %v789
      %v902 = vpop.f32.mrf.mxu0
      %v903 = vadd.f32 %v814, %v902
      %v904 = vpop.f32.mrf.mxu0
      %905 = vmatprep.mubr.f32.mxu0 0.0
      %906 = vmatmul.mubr.f32.gmra.mxu0 %v790
      %v907 = vpop.f32.mrf.mxu0
      %v908 = vadd.f32 %v814, %v907
      %v909 = vpop.f32.mrf.mxu0
      %910 = vmatprep.mubr.f32.mxu0 0.0
      %911 = vmatmul.mubr.f32.gmra.mxu0 %v791
      %v912 = vpop.f32.mrf.mxu0
      %v913 = vadd.f32 %v814, %v912
      %v914 = vpop.f32.mrf.mxu0
      %915 = vmatprep.mubr.f32.mxu0 0.0
      %916 = vmatmul.mubr.f32.gmra.mxu0 %v792
      %v917 = vpop.f32.mrf.mxu0
      %v918 = vadd.f32 %v814, %v917
      %v919 = vpop.f32.mrf.mxu0
      %920 = vdwg.mxu0
      %v930 = vrot.slane %v225, 1
      %v931 = vrot.slane %v226, 1
      %v932 = vsel %vm450, %v930, %v931
      %v933 = vrot.slane %v227, 1
      %v934 = vsel %vm450, %v931, %v933
      %v935 = vrot.slane %v228, 1
      %v936 = vsel %vm450, %v933, %v935
      %v937 = vrot.slane %v229, 1
      %v938 = vsel %vm450, %v935, %v937
      %v939 = vrot.slane %v230, 1
      %v940 = vsel %vm450, %v937, %v939
      %v941 = vrot.slane %v231, 1
      %v942 = vsel %vm450, %v939, %v941
      %v943 = vrot.slane %v232, 1
      %v944 = vsel %vm450, %v941, %v943
      %v945 = vrot.slane %v233, 1
      %v946 = vsel %vm450, %v943, %v945
      %v955 = vadd.f32 %v883, %v932
      %v956 = vadd.f32 %v888, %v934
      %v957 = vadd.f32 %v893, %v936
      %v958 = vadd.f32 %v898, %v938
      %v959 = vadd.f32 %v903, %v940
      %v960 = vadd.f32 %v908, %v942
      %v961 = vadd.f32 %v913, %v944
      %v962 = vadd.f32 %v918, %v946
      %963 = vst [vmem:[%s224] sm:$0xff] %v955
      %964 = vst [vmem:[%s224 + $0x8] sm:$0xff] %v956
      %965 = vst [vmem:[%s224 + $0x10] sm:$0xff] %v957
      %966 = vst [vmem:[%s224 + $0x18] sm:$0xff] %v958
      %967 = vst [vmem:[%s224 + $0x20] sm:$0xff] %v959
      %968 = vst [vmem:[%s224 + $0x28] sm:$0xff] %v960
      %969 = vst [vmem:[%s224 + $0x30] sm:$0xff] %v961
      %970 = vst [vmem:[%s224 + $0x38] sm:$0xff] %v962
      %p971 = scmp.lt.s32.totalorder %s16, 1
      %s972 = scalar_select %p971, %s16, 1
      %s973 = smul.addr %s972, 8
      %s974 = smul.addr %s973, 8
      %s975 = scalar_lea.vmem %s5, %s974
      // Predicated region
      $region41: #{seanet_encoder_forward.7} parent=39 // pred_check
        %p976 = pneg %p144
      $region42: #{seanet_encoder_forward.7} parent=39 // pred_check_branch
        %978 = sbr.rel (%p976) target = $region44
      $region43: #{seanet_encoder_forward.7} parent=39 // pred_region
        _
      $region44: #{seanet_encoder_forward.7} parent=39 // pred_fallthru
        _
    $region40: #{seanet_encoder_forward.7} parent=5 // pred_fallthru
      _
    %p979 = scmp.le.s32.totalorder 2, %s11
    // Predicated region
    $region45: #{seanet_encoder_forward.7} parent=5 // pred_check
      %p980 = pneg %p979
    $region46: #{seanet_encoder_forward.7} parent=5 // pred_check_branch
      %982 = sbr.rel (%p980) target = $region48
    $region47: #{seanet_encoder_forward.7} parent=5 // pred_region
      %s983 = ssub.s32 %s11, 2
      // Predicated region
      $region49: #{seanet_encoder_forward.7} parent=47 // pred_check
        %p984 = pneg %p150
      $region50: #{seanet_encoder_forward.7} parent=47 // pred_check_branch
        %986 = sbr.rel (%p984) target = $region52
      $region51: #{seanet_encoder_forward.7} parent=47 // pred_region
        %p987 = scmp.lt.s32.totalorder %s17, 1
        %s988 = scalar_select %p987, %s17, 1
        %s989 = smul.addr %s988, 8
        %s990 = smul.addr %s989, 8
        %s991 = scalar_lea.vmem %s5, %s990
      $region52: #{seanet_encoder_forward.7} parent=47 // pred_fallthru
        _
    $region48: #{seanet_encoder_forward.7} parent=5 // pred_fallthru
      _
  $region6: #{seanet_encoder_forward.7} parent=0 // loop_footer
    %s15 = sadd.s32 1, %s11
  $region7: #{seanet_encoder_forward.7} parent=0 // loop_footer_branch
    %10 = sbr.rel target = $region3
  $region8: #{seanet_encoder_forward.7} parent=0 // loop_exit
    _

// kernel: seanet_encoder_forward.9
$region0: #{seanet_encoder_forward.9}
  #allocation0 [shape = 'u32[]', space=smem, size = 0x4, offset = 0x4, fixed_abs, tag = 'smem constant byte address 0x4 - core index']
  #allocation1 [shape = 'u32[144,128]{1,0:T(1,128)}', space=vmem, size = 0x12000, scoped, tag = 'internal scratch']
  %s0 = inlined_call_operand.vmem [shape: f32[2,34,128], index: 0, kind: input, shape index: {}]
  %s1 = inlined_call_operand.vmem [shape: f32[3,128,128], index: 1, kind: input, shape index: {}]
  %s2 = inlined_call_operand.vmem [shape: f32[1,128], index: 2, kind: input, shape index: {}]
  %s3 = inlined_call_operand.vmem [shape: f32[1,128,128], index: 3, kind: input, shape index: {}]
  %s4 = inlined_call_operand.vmem [shape: f32[1,128], index: 4, kind: input, shape index: {}]
  %s5 = inlined_call_operand.vmem [shape: f32[2,32,128], index: 5, kind: output, shape index: {}]
  %s6 = sld [smem:[#allocation0]]
  $region53: #{seanet_encoder_forward.9} parent=0
    _
  %s8 = ssub.s32 1, %s6
  %s9 = scalar_select 0, %s8, %s6
  loop: start=0, step=1, limit=4
  $region2: #{seanet_encoder_forward.9} parent=0 // loop_pre_header
    _
  $region3: #{seanet_encoder_forward.9} parent=0 // loop_header
    %s11 = sphi 0, %s15
    %p12 = scmp.ge.s32.totalorder %s11, 4
    %s21 = sphi 0, %s23
    %s24 = sphi 0, %s21
    %s25 = sphi 0, %s24
    %s41 = sphi 0, %s25
    %s45 = sphi 0, %s45
    %s47 = sphi 0, %s45
    %s48 = sphi 0, %s47
    %s62 = sphi 0, %s48
    %s66 = sphi 0, %s66
    %s68 = sphi 0, %s66
    %s69 = sphi 0, %s68
    %s83 = sphi 0, %s69
    %s87 = sphi 0, %s87
    %s89 = sphi 0, %s87
    %s90 = sphi 0, %s89
    %s104 = sphi 0, %s90
    %s108 = sphi 0, %s108
    %s110 = sphi 0, %s108
    %s111 = sphi 0, %s110
    %s125 = sphi 0, %s111
    %s131 = sphi 0, %s133
    %s134 = sphi 0, %s131
    %s135 = sphi 0, %s134
    %s151 = sphi 0, %s135
  $region4: #{seanet_encoder_forward.9} parent=0 // loop_header_branch
    %14 = sbr.rel (%p12) target = $region8
  $region5: #{seanet_encoder_forward.9} parent=0 // loop_body
    %s16 = ssub.s32 %s11, 1
    %s17 = ssub.s32 %s11, 2
    %s18 = sadd.s32 %s11, 1
    %s19 = ssub.s32 %s11, %s18
    %p20 = scmp.eq.s32.totalorder %s19, 0
    %s22 = sadd.s32 %s21, 1
    %s23 = scalar_select %p20, %s21, %s22
    %p26 = pneg %p20
    %p27 = scmp.eq.s32.totalorder %s11, 1
    %p28 = por %p26, %p27
    %p29 = scmp.ne.s32.totalorder %s21, %s24
    %p30 = scmp.eq.s32.totalorder %s11, 0
    %p31 = por %p29, %p30
    %p32 = scmp.ne.s32.totalorder %s21, %s24
    %p33 = scmp.eq.s32.totalorder %s16, 1
    %p34 = por %p32, %p33
    %p35 = scmp.ne.s32.totalorder %s24, %s25
    %p36 = scmp.eq.s32.totalorder %s16, 0
    %p37 = por %p35, %p36
    %p38 = scmp.ne.s32.totalorder %s24, %s25
    %p39 = scmp.eq.s32.totalorder %s17, 1
    %p40 = por %p38, %p39
    %p42 = scmp.ne.s32.totalorder %s25, %s41
    %p43 = scmp.eq.s32.totalorder %s17, 0
    %p44 = por %p42, %p43
    %s46 = sadd.s32 %s45, 1
    %p49 = scmp.eq.s32.totalorder %s11, 1
    %p50 = scmp.ne.s32.totalorder %s45, %s47
    %p51 = scmp.eq.s32.totalorder %s11, 0
    %p52 = por %p50, %p51
    %p53 = scmp.ne.s32.totalorder %s45, %s47
    %p54 = scmp.eq.s32.totalorder %s16, 1
    %p55 = por %p53, %p54
    %p56 = scmp.ne.s32.totalorder %s47, %s48
    %p57 = scmp.eq.s32.totalorder %s16, 0
    %p58 = por %p56, %p57
    %p59 = scmp.ne.s32.totalorder %s47, %s48
    %p60 = scmp.eq.s32.totalorder %s17, 1
    %p61 = por %p59, %p60
    %p63 = scmp.ne.s32.totalorder %s48, %s62
    %p64 = scmp.eq.s32.totalorder %s17, 0
    %p65 = por %p63, %p64
    %s67 = sadd.s32 %s66, 1
    %p70 = scmp.eq.s32.totalorder %s11, 1
    %p71 = scmp.ne.s32.totalorder %s66, %s68
    %p72 = scmp.eq.s32.totalorder %s11, 0
    %p73 = por %p71, %p72
    %p74 = scmp.ne.s32.totalorder %s66, %s68
    %p75 = scmp.eq.s32.totalorder %s16, 1
    %p76 = por %p74, %p75
    %p77 = scmp.ne.s32.totalorder %s68, %s69
    %p78 = scmp.eq.s32.totalorder %s16, 0
    %p79 = por %p77, %p78
    %p80 = scmp.ne.s32.totalorder %s68, %s69
    %p81 = scmp.eq.s32.totalorder %s17, 1
    %p82 = por %p80, %p81
    %p84 = scmp.ne.s32.totalorder %s69, %s83
    %p85 = scmp.eq.s32.totalorder %s17, 0
    %p86 = por %p84, %p85
    %s88 = sadd.s32 %s87, 1
    %p91 = scmp.eq.s32.totalorder %s11, 1
    %p92 = scmp.ne.s32.totalorder %s87, %s89
    %p93 = scmp.eq.s32.totalorder %s11, 0
    %p94 = por %p92, %p93
    %p95 = scmp.ne.s32.totalorder %s87, %s89
    %p96 = scmp.eq.s32.totalorder %s16, 1
    %p97 = por %p95, %p96
    %p98 = scmp.ne.s32.totalorder %s89, %s90
    %p99 = scmp.eq.s32.totalorder %s16, 0
    %p100 = por %p98, %p99
    %p101 = scmp.ne.s32.totalorder %s89, %s90
    %p102 = scmp.eq.s32.totalorder %s17, 1
    %p103 = por %p101, %p102
    %p105 = scmp.ne.s32.totalorder %s90, %s104
    %p106 = scmp.eq.s32.totalorder %s17, 0
    %p107 = por %p105, %p106
    %s109 = sadd.s32 %s108, 1
    %p112 = scmp.eq.s32.totalorder %s11, 1
    %p113 = scmp.ne.s32.totalorder %s108, %s110
    %p114 = scmp.eq.s32.totalorder %s11, 0
    %p115 = por %p113, %p114
    %p116 = scmp.ne.s32.totalorder %s108, %s110
    %p117 = scmp.eq.s32.totalorder %s16, 1
    %p118 = por %p116, %p117
    %p119 = scmp.ne.s32.totalorder %s110, %s111
    %p120 = scmp.eq.s32.totalorder %s16, 0
    %p121 = por %p119, %p120
    %p122 = scmp.ne.s32.totalorder %s110, %s111
    %p123 = scmp.eq.s32.totalorder %s17, 1
    %p124 = por %p122, %p123
    %p126 = scmp.ne.s32.totalorder %s111, %s125
    %p127 = scmp.eq.s32.totalorder %s17, 0
    %p128 = por %p126, %p127
    %s129 = ssub.s32 %s11, %s18
    %p130 = scmp.eq.s32.totalorder %s129, 0
    %s132 = sadd.s32 %s131, 1
    %s133 = scalar_select %p130, %s131, %s132
    %p136 = pneg %p130
    %p137 = scmp.eq.s32.totalorder %s11, 1
    %p138 = por %p136, %p137
    %p139 = scmp.ne.s32.totalorder %s131, %s134
    %p140 = scmp.eq.s32.totalorder %s11, 0
    %p141 = por %p139, %p140
    %p142 = scmp.ne.s32.totalorder %s131, %s134
    %p143 = scmp.eq.s32.totalorder %s16, 1
    %p144 = por %p142, %p143
    %p145 = scmp.ne.s32.totalorder %s134, %s135
    %p146 = scmp.eq.s32.totalorder %s16, 0
    %p147 = por %p145, %p146
    %p148 = scmp.ne.s32.totalorder %s134, %s135
    %p149 = scmp.eq.s32.totalorder %s17, 1
    %p150 = por %p148, %p149
    %p152 = scmp.ne.s32.totalorder %s135, %s151
    %p153 = scmp.eq.s32.totalorder %s17, 0
    %p154 = por %p152, %p153
    %p155 = scmp.le.s32.totalorder 1, %s11
    %p156 = scmp.lt.s32.totalorder %s11, 3
    %p157 = pnand %p155, %p156
    %p158 = pneg %p157
    // Predicated region
    $region9: #{seanet_encoder_forward.9} parent=5 // pred_check
      _
    $region10: #{seanet_encoder_forward.9} parent=5 // pred_check_branch
      %160 = sbr.rel (%p157) target = $region12
    $region11: #{seanet_encoder_forward.9} parent=5 // pred_region
      %s161 = ssub.s32 %s11, 1
      // Predicated region
      $region13: #{seanet_encoder_forward.9} parent=11 // pred_check
        %p162 = pneg %p58
      $region14: #{seanet_encoder_forward.9} parent=11 // pred_check_branch
        %164 = sbr.rel (%p162) target = $region16
      $region15: #{seanet_encoder_forward.9} parent=11 // pred_region
        _
      $region16: #{seanet_encoder_forward.9} parent=11 // pred_fallthru
        _
      // Predicated region
      $region17: #{seanet_encoder_forward.9} parent=11 // pred_check
        %p165 = pneg %p79
      $region18: #{seanet_encoder_forward.9} parent=11 // pred_check_branch
        %167 = sbr.rel (%p165) target = $region20
      $region19: #{seanet_encoder_forward.9} parent=11 // pred_region
        _
      $region20: #{seanet_encoder_forward.9} parent=11 // pred_fallthru
        _
      // Predicated region
      $region21: #{seanet_encoder_forward.9} parent=11 // pred_check
        %p168 = pneg %p100
      $region22: #{seanet_encoder_forward.9} parent=11 // pred_check_branch
        %170 = sbr.rel (%p168) target = $region24
      $region23: #{seanet_encoder_forward.9} parent=11 // pred_region
        _
      $region24: #{seanet_encoder_forward.9} parent=11 // pred_fallthru
        _
      // Predicated region
      $region25: #{seanet_encoder_forward.9} parent=11 // pred_check
        %p171 = pneg %p121
      $region26: #{seanet_encoder_forward.9} parent=11 // pred_check_branch
        %173 = sbr.rel (%p171) target = $region28
      $region27: #{seanet_encoder_forward.9} parent=11 // pred_region
        _
      $region28: #{seanet_encoder_forward.9} parent=11 // pred_fallthru
        _
    $region12: #{seanet_encoder_forward.9} parent=5 // pred_fallthru
      _
    %p174 = scmp.lt.s32.totalorder %s11, 2
    // Predicated region
    $region29: #{seanet_encoder_forward.9} parent=5 // pred_check
      %p175 = pneg %p174
    $region30: #{seanet_encoder_forward.9} parent=5 // pred_check_branch
      %177 = sbr.rel (%p175) target = $region32
    $region31: #{seanet_encoder_forward.9} parent=5 // pred_region
      // Predicated region
      $region33: #{seanet_encoder_forward.9} parent=31 // pred_check
        %p178 = pneg %p31
      $region34: #{seanet_encoder_forward.9} parent=31 // pred_check_branch
        %180 = sbr.rel (%p178) target = $region36
      $region35: #{seanet_encoder_forward.9} parent=31 // pred_region
        %p181 = scmp.lt.s32.totalorder %s11, 1
        %s182 = scalar_select %p181, %s11, 1
        %s183 = smul.addr %s182, 5
        %s184 = smul.addr %s183, 8
        %s185 = scalar_lea.vmem %s0, %s184
      $region36: #{seanet_encoder_forward.9} parent=31 // pred_fallthru
        _
    $region32: #{seanet_encoder_forward.9} parent=5 // pred_fallthru
      _
    %p186 = scmp.le.s32.totalorder 1, %s11
    %p187 = scmp.lt.s32.totalorder %s11, 3
    %p188 = pnand %p186, %p187
    %p189 = pneg %p188
    // Predicated region
    $region37: #{seanet_encoder_forward.9} parent=5 // pred_check
      _
    $region38: #{seanet_encoder_forward.9} parent=5 // pred_check_branch
      %191 = sbr.rel (%p188) target = $region40
    $region39: #{seanet_encoder_forward.9} parent=5 // pred_region
      %s192 = ssub.s32 %s11, 1
      %p193 = scmp.lt.s32.totalorder %s16, 1
      %s194 = scalar_select %p193, %s16, 1
      %s195 = smul.addr %s194, 5
      %s196 = smul.addr %s195, 8
      %s197 = scalar_lea.vmem %s0, %s196
      %p198 = pneg %p37
      %p199 = pneg %p34
      %p200 = pneg %p58
      %p201 = pneg %p55
      %p202 = pneg %p79
      %p203 = pneg %p76
      %p204 = pneg %p100
      %p205 = pneg %p97
      %p206 = pneg %p121
      %p207 = pneg %p118
      %p208 = pneg %p147
      %p209 = pneg %p144
      %p210 = scmp.lt.s32.totalorder %s16, 1
      %s211 = scalar_select %p210, %s16, 1
      %s212 = smul.addr %s211, 4
      %s213 = smul.addr %s212, 8
      %s214 = scalar_lea.vmem %s5, %s213
      %p215 = scmp.lt.s32.totalorder %s16, 1
      %s216 = scalar_select %p215, %s16, 1
      %s217 = smul.addr %s216, 5
      %s218 = smul.addr %s217, 8
      %s219 = scalar_lea.vmem %s0, %s218
      %p220 = scmp.lt.s32.totalorder %s16, 1
      %s221 = scalar_select %p220, %s16, 1
      %s222 = smul.addr %s221, 4
      %s223 = smul.addr %s222, 8
      %s224 = scalar_lea.vmem %s5, %s223
      %v225 = vld [vmem:[%s219] sm:$0xff]
      %v226 = vld [vmem:[%s219 + $0x8] sm:$0xff]
      %v227 = vld [vmem:[%s219 + $0x10] sm:$0xff]
      %v228 = vld [vmem:[%s219 + $0x18] sm:$0xff]
      %v229 = vld [vmem:[%s219 + $0x20] sm:$0x3]
      %vm230 = vcmp.gt.f32.partialorder %v225, 0.0
      %vm231 = vcmp.gt.f32.partialorder %v226, 0.0
      %vm232 = vcmp.gt.f32.partialorder %v227, 0.0
      %vm233 = vcmp.gt.f32.partialorder %v228, 0.0
      %vm234 = vcmp.gt.f32.partialorder %v229, 0.0
      %v235 = vmin.f32 %v225, 0.0
      %v236 = vmin.f32 %v226, 0.0
      %v237 = vmin.f32 %v227, 0.0
      %v238 = vmin.f32 %v228, 0.0
      %v239 = vmin.f32 %v229, 0.0
      %v240 = vmul.f32 %v235, 1.442695
      %v241 = vpow.pop %v240
      %v242 = vmul.f32 %v236, 1.442695
      %v243 = vpow.pop %v242
      %v244 = vmul.f32 %v237, 1.442695
      %v245 = vpow.pop %v244
      %v246 = vmul.f32 %v238, 1.442695
      %v247 = vpow.pop %v246
      %v248 = vmul.f32 %v239, 1.442695
      %v249 = vpow.pop %v248
      %v250 = vsub.f32 %v241, 1.0
      %v251 = vsub.f32 %v243, 1.0
      %v252 = vsub.f32 %v245, 1.0
      %v253 = vsub.f32 %v247, 1.0
      %v254 = vsub.f32 %v249, 1.0
      %v255 = vsel %vm230, %v225, %v250
      %v256 = vsel %vm231, %v226, %v251
      %v257 = vsel %vm232, %v227, %v252
      %v258 = vsel %vm233, %v228, %v253
      %v259 = vsel %vm234, %v229, %v254
      %v260 = vld [vmem:[%s2] sm:$0x1]
      %v262 = vlaneseq
      %v263 = vshrl.u32 %v262, 7
      %v264 = vsub.s32 0, %v263
      %v265 = vrot.slane %v260, %v264
      %v267 = vld [vmem:[%s1] sm:$0xff]
      %v268 = vld [vmem:[%s1 + $0x8] sm:$0xff]
      %v269 = vld [vmem:[%s1 + $0x10] sm:$0xff]
      %v270 = vld [vmem:[%s1 + $0x18] sm:$0xff]
      %v271 = vld [vmem:[%s1 + $0x20] sm:$0xff]
      %v272 = vld [vmem:[%s1 + $0x28] sm:$0xff]
      %v273 = vld [vmem:[%s1 + $0x30] sm:$0xff]
      %v274 = vld [vmem:[%s1 + $0x38] sm:$0xff]
      %v275 = vld [vmem:[%s1 + $0x40] sm:$0xff]
      %v276 = vld [vmem:[%s1 + $0x48] sm:$0xff]
      %v277 = vld [vmem:[%s1 + $0x50] sm:$0xff]
      %v278 = vld [vmem:[%s1 + $0x58] sm:$0xff]
      %v279 = vld [vmem:[%s1 + $0x60] sm:$0xff]
      %v280 = vld [vmem:[%s1 + $0x68] sm:$0xff]
      %v281 = vld [vmem:[%s1 + $0x70] sm:$0xff]
      %v282 = vld [vmem:[%s1 + $0x78] sm:$0xff]
      %283 = vmatprep.subr.mxu0 0.0
      %284 = vmatpush1.msra.mxu0 %v282
      %285 = vmatprep.subr.mxu0 0.0
      %286 = vmatpush1.msra.mxu0 %v281
      %287 = vmatprep.subr.mxu0 0.0
      %288 = vmatpush1.msra.mxu0 %v280
      %289 = vmatprep.subr.mxu0 0.0
      %290 = vmatpush1.msra.mxu0 %v279
      %291 = vmatprep.subr.mxu0 0.0
      %292 = vmatpush1.msra.mxu0 %v278
      %293 = vmatprep.subr.mxu0 0.0
      %294 = vmatpush1.msra.mxu0 %v277
      %295 = vmatprep.subr.mxu0 0.0
      %296 = vmatpush1.msra.mxu0 %v276
      %297 = vmatprep.subr.mxu0 0.0
      %298 = vmatpush1.msra.mxu0 %v275
      %299 = vmatprep.subr.mxu0 0.0
      %300 = vmatpush1.msra.mxu0 %v274
      %301 = vmatprep.subr.mxu0 0.0
      %302 = vmatpush1.msra.mxu0 %v273
      %303 = vmatprep.subr.mxu0 0.0
      %304 = vmatpush1.msra.mxu0 %v272
      %305 = vmatprep.subr.mxu0 0.0
      %306 = vmatpush1.msra.mxu0 %v271
      %307 = vmatprep.subr.mxu0 0.0
      %308 = vmatpush1.msra.mxu0 %v270
      %309 = vmatprep.subr.mxu0 0.0
      %310 = vmatpush1.msra.mxu0 %v269
      %311 = vmatprep.subr.mxu0 0.0
      %312 = vmatpush1.msra.mxu0 %v268
      %313 = vmatprep.subr.mxu0 0.0
      %314 = vmatpush1.msra.mxu0 %v267
      %315 = vmatprep.subr.mxu0 0.0
      %316 = vmatpush2.msra.mxu0 0.0
      %317 = vmatprep.subr.mxu0 0.0
      %318 = vmatpush2.msra.mxu0 0.0
      %319 = vmatprep.subr.mxu0 0.0
      %320 = vmatpush2.msra.mxu0 0.0
      %321 = vmatprep.subr.mxu0 0.0
      %322 = vmatpush2.msra.mxu0 0.0
      %323 = vmatprep.subr.mxu0 0.0
      %324 = vmatpush2.msra.mxu0 0.0
      %325 = vmatprep.subr.mxu0 0.0
      %326 = vmatpush2.msra.mxu0 0.0
      %327 = vmatprep.subr.mxu0 0.0
      %328 = vmatpush2.msra.mxu0 0.0
      %329 = vmatprep.subr.mxu0 0.0
      %330 = vmatpush2.msra.mxu0 0.0
      %331 = vmatprep.subr.mxu0 0.0
      %332 = vmatpush2.msra.mxu0 0.0
      %333 = vmatprep.subr.mxu0 0.0
      %334 = vmatpush2.msra.mxu0 0.0
      %335 = vmatprep.subr.mxu0 0.0
      %336 = vmatpush2.msra.mxu0 0.0
      %337 = vmatprep.subr.mxu0 0.0
      %338 = vmatpush2.msra.mxu0 0.0
      %339 = vmatprep.subr.mxu0 0.0
      %340 = vmatpush2.msra.mxu0 0.0
      %341 = vmatprep.subr.mxu0 0.0
      %342 = vmatpush2.msra.mxu0 0.0
      %343 = vmatprep.subr.mxu0 0.0
      %344 = vmatpush2.msra.mxu0 0.0
      %345 = vmatprep.subr.mxu0 0.0
      %346 = vmatpush2.msra.mxu0 0.0
      %347 = vmatprep.mubr.f32.mxu0 0.0
      %348 = vmatmul.mubr.f32.gmra.mxu0 %v255
      %v349 = vpop.f32.mrf.mxu0
      %v350 = vadd.f32 0.0, %v349
      %v351 = vpop.f32.mrf.mxu0
      %352 = vmatprep.mubr.f32.mxu0 0.0
      %353 = vmatmul.mubr.f32.gmra.mxu0 %v256
      %v354 = vpop.f32.mrf.mxu0
      %v355 = vadd.f32 0.0, %v354
      %v356 = vpop.f32.mrf.mxu0
      %357 = vmatprep.mubr.f32.mxu0 0.0
      %358 = vmatmul.mubr.f32.gmra.mxu0 %v257
      %v359 = vpop.f32.mrf.mxu0
      %v360 = vadd.f32 0.0, %v359
      %v361 = vpop.f32.mrf.mxu0
      %362 = vmatprep.mubr.f32.mxu0 0.0
      %363 = vmatmul.mubr.f32.gmra.mxu0 %v258
      %v364 = vpop.f32.mrf.mxu0
      %v365 = vadd.f32 0.0, %v364
      %v366 = vpop.f32.mrf.mxu0
      %367 = vdwg.mxu0
      %v368 = vadd.f32 %v265, %v350
      %v369 = vadd.f32 %v265, %v355
      %v370 = vadd.f32 %v265, %v360
      %v371 = vadd.f32 %v265, %v365
      %s372 = scalar_lea.vmem %s1, 128
      %v373 = vld [vmem:[%s372] sm:$0xff]
      %v374 = vld [vmem:[%s372 + $0x8] sm:$0xff]
      %v375 = vld [vmem:[%s372 + $0x10] sm:$0xff]
      %v376 = vld [vmem:[%s372 + $0x18] sm:$0xff]
      %v377 = vld [vmem:[%s372 + $0x20] sm:$0xff]
      %v378 = vld [vmem:[%s372 + $0x28] sm:$0xff]
      %v379 = vld [vmem:[%s372 + $0x30] sm:$0xff]
      %v380 = vld [vmem:[%s372 + $0x38] sm:$0xff]
      %v381 = vld [vmem:[%s372 + $0x40] sm:$0xff]
      %v382 = vld [vmem:[%s372 + $0x48] sm:$0xff]
      %v383 = vld [vmem:[%s372 + $0x50] sm:$0xff]
      %v384 = vld [vmem:[%s372 + $0x58] sm:$0xff]
      %v385 = vld [vmem:[%s372 + $0x60] sm:$0xff]
      %v386 = vld [vmem:[%s372 + $0x68] sm:$0xff]
      %v387 = vld [vmem:[%s372 + $0x70] sm:$0xff]
      %v388 = vld [vmem:[%s372 + $0x78] sm:$0xff]
      %vm394 = vcmask 1046528
      %v395 = vrot.slane %v255, 1
      %v396 = vrot.slane %v256, 1
      %v397 = vsel %vm394, %v395, %v396
      %v398 = vrot.slane %v257, 1
      %v399 = vsel %vm394, %v396, %v398
      %v400 = vrot.slane %v258, 1
      %v401 = vsel %vm394, %v398, %v400
      %v402 = vrot.slane %v259, 1
      %v403 = vsel %vm394, %v400, %v402
      %408 = vmatprep.subr.mxu0 0.0
      %409 = vmatpush1.msra.mxu0 %v388
      %410 = vmatprep.subr.mxu0 0.0
      %411 = vmatpush1.msra.mxu0 %v387
      %412 = vmatprep.subr.mxu0 0.0
      %413 = vmatpush1.msra.mxu0 %v386
      %414 = vmatprep.subr.mxu0 0.0
      %415 = vmatpush1.msra.mxu0 %v385
      %416 = vmatprep.subr.mxu0 0.0
      %417 = vmatpush1.msra.mxu0 %v384
      %418 = vmatprep.subr.mxu0 0.0
      %419 = vmatpush1.msra.mxu0 %v383
      %420 = vmatprep.subr.mxu0 0.0
      %421 = vmatpush1.msra.mxu0 %v382
      %422 = vmatprep.subr.mxu0 0.0
      %423 = vmatpush1.msra.mxu0 %v381
      %424 = vmatprep.subr.mxu0 0.0
      %425 = vmatpush1.msra.mxu0 %v380
      %426 = vmatprep.subr.mxu0 0.0
      %427 = vmatpush1.msra.mxu0 %v379
      %428 = vmatprep.subr.mxu0 0.0
      %429 = vmatpush1.msra.mxu0 %v378
      %430 = vmatprep.subr.mxu0 0.0
      %431 = vmatpush1.msra.mxu0 %v377
      %432 = vmatprep.subr.mxu0 0.0
      %433 = vmatpush1.msra.mxu0 %v376
      %434 = vmatprep.subr.mxu0 0.0
      %435 = vmatpush1.msra.mxu0 %v375
      %436 = vmatprep.subr.mxu0 0.0
      %437 = vmatpush1.msra.mxu0 %v374
      %438 = vmatprep.subr.mxu0 0.0
      %439 = vmatpush1.msra.mxu0 %v373
      %440 = vmatprep.subr.mxu0 0.0
      %441 = vmatpush2.msra.mxu0 0.0
      %442 = vmatprep.subr.mxu0 0.0
      %443 = vmatpush2.msra.mxu0 0.0
      %444 = vmatprep.subr.mxu0 0.0
      %445 = vmatpush2.msra.mxu0 0.0
      %446 = vmatprep.subr.mxu0 0.0
      %447 = vmatpush2.msra.mxu0 0.0
      %448 = vmatprep.subr.mxu0 0.0
      %449 = vmatpush2.msra.mxu0 0.0
      %450 = vmatprep.subr.mxu0 0.0
      %451 = vmatpush2.msra.mxu0 0.0
      %452 = vmatprep.subr.mxu0 0.0
      %453 = vmatpush2.msra.mxu0 0.0
      %454 = vmatprep.subr.mxu0 0.0
      %455 = vmatpush2.msra.mxu0 0.0
      %456 = vmatprep.subr.mxu0 0.0
      %457 = vmatpush2.msra.mxu0 0.0
      %458 = vmatprep.subr.mxu0 0.0
      %459 = vmatpush2.msra.mxu0 0.0
      %460 = vmatprep.subr.mxu0 0.0
      %461 = vmatpush2.msra.mxu0 0.0
      %462 = vmatprep.subr.mxu0 0.0
      %463 = vmatpush2.msra.mxu0 0.0
      %464 = vmatprep.subr.mxu0 0.0
      %465 = vmatpush2.msra.mxu0 0.0
      %466 = vmatprep.subr.mxu0 0.0
      %467 = vmatpush2.msra.mxu0 0.0
      %468 = vmatprep.subr.mxu0 0.0
      %469 = vmatpush2.msra.mxu0 0.0
      %470 = vmatprep.subr.mxu0 0.0
      %471 = vmatpush2.msra.mxu0 0.0
      %472 = vmatprep.mubr.f32.mxu0 0.0
      %473 = vmatmul.mubr.f32.gmra.mxu0 %v397
      %v474 = vpop.f32.mrf.mxu0
      %v475 = vadd.f32 0.0, %v474
      %v476 = vpop.f32.mrf.mxu0
      %477 = vmatprep.mubr.f32.mxu0 0.0
      %478 = vmatmul.mubr.f32.gmra.mxu0 %v399
      %v479 = vpop.f32.mrf.mxu0
      %v480 = vadd.f32 0.0, %v479
      %v481 = vpop.f32.mrf.mxu0
      %482 = vmatprep.mubr.f32.mxu0 0.0
      %483 = vmatmul.mubr.f32.gmra.mxu0 %v401
      %v484 = vpop.f32.mrf.mxu0
      %v485 = vadd.f32 0.0, %v484
      %v486 = vpop.f32.mrf.mxu0
      %487 = vmatprep.mubr.f32.mxu0 0.0
      %488 = vmatmul.mubr.f32.gmra.mxu0 %v403
      %v489 = vpop.f32.mrf.mxu0
      %v490 = vadd.f32 0.0, %v489
      %v491 = vpop.f32.mrf.mxu0
      %492 = vdwg.mxu0
      %v493 = vadd.f32 %v368, %v475
      %v494 = vadd.f32 %v369, %v480
      %v495 = vadd.f32 %v370, %v485
      %v496 = vadd.f32 %v371, %v490
      %s497 = scalar_lea.vmem %s1, 256
      %v498 = vld [vmem:[%s497] sm:$0xff]
      %v499 = vld [vmem:[%s497 + $0x8] sm:$0xff]
      %v500 = vld [vmem:[%s497 + $0x10] sm:$0xff]
      %v501 = vld [vmem:[%s497 + $0x18] sm:$0xff]
      %v502 = vld [vmem:[%s497 + $0x20] sm:$0xff]
      %v503 = vld [vmem:[%s497 + $0x28] sm:$0xff]
      %v504 = vld [vmem:[%s497 + $0x30] sm:$0xff]
      %v505 = vld [vmem:[%s497 + $0x38] sm:$0xff]
      %v506 = vld [vmem:[%s497 + $0x40] sm:$0xff]
      %v507 = vld [vmem:[%s497 + $0x48] sm:$0xff]
      %v508 = vld [vmem:[%s497 + $0x50] sm:$0xff]
      %v509 = vld [vmem:[%s497 + $0x58] sm:$0xff]
      %v510 = vld [vmem:[%s497 + $0x60] sm:$0xff]
      %v511 = vld [vmem:[%s497 + $0x68] sm:$0xff]
      %v512 = vld [vmem:[%s497 + $0x70] sm:$0xff]
      %v513 = vld [vmem:[%s497 + $0x78] sm:$0xff]
      %vm514 = vcmask 1045504
      %v515 = vrot.slane %v255, 2
      %v516 = vrot.slane %v256, 2
      %v517 = vsel %vm514, %v515, %v516
      %v518 = vrot.slane %v257, 2
      %v519 = vsel %vm514, %v516, %v518
      %v520 = vrot.slane %v258, 2
      %v521 = vsel %vm514, %v518, %v520
      %v522 = vrot.slane %v259, 2
      %v523 = vsel %vm514, %v520, %v522
      %528 = vmatprep.subr.mxu0 0.0
      %529 = vmatpush1.msra.mxu0 %v513
      %530 = vmatprep.subr.mxu0 0.0
      %531 = vmatpush1.msra.mxu0 %v512
      %532 = vmatprep.subr.mxu0 0.0
      %533 = vmatpush1.msra.mxu0 %v511
      %534 = vmatprep.subr.mxu0 0.0
      %535 = vmatpush1.msra.mxu0 %v510
      %536 = vmatprep.subr.mxu0 0.0
      %537 = vmatpush1.msra.mxu0 %v509
      %538 = vmatprep.subr.mxu0 0.0
      %539 = vmatpush1.msra.mxu0 %v508
      %540 = vmatprep.subr.mxu0 0.0
      %541 = vmatpush1.msra.mxu0 %v507
      %542 = vmatprep.subr.mxu0 0.0
      %543 = vmatpush1.msra.mxu0 %v506
      %544 = vmatprep.subr.mxu0 0.0
      %545 = vmatpush1.msra.mxu0 %v505
      %546 = vmatprep.subr.mxu0 0.0
      %547 = vmatpush1.msra.mxu0 %v504
      %548 = vmatprep.subr.mxu0 0.0
      %549 = vmatpush1.msra.mxu0 %v503
      %550 = vmatprep.subr.mxu0 0.0
      %551 = vmatpush1.msra.mxu0 %v502
      %552 = vmatprep.subr.mxu0 0.0
      %553 = vmatpush1.msra.mxu0 %v501
      %554 = vmatprep.subr.mxu0 0.0
      %555 = vmatpush1.msra.mxu0 %v500
      %556 = vmatprep.subr.mxu0 0.0
      %557 = vmatpush1.msra.mxu0 %v499
      %558 = vmatprep.subr.mxu0 0.0
      %559 = vmatpush1.msra.mxu0 %v498
      %560 = vmatprep.subr.mxu0 0.0
      %561 = vmatpush2.msra.mxu0 0.0
      %562 = vmatprep.subr.mxu0 0.0
      %563 = vmatpush2.msra.mxu0 0.0
      %564 = vmatprep.subr.mxu0 0.0
      %565 = vmatpush2.msra.mxu0 0.0
      %566 = vmatprep.subr.mxu0 0.0
      %567 = vmatpush2.msra.mxu0 0.0
      %568 = vmatprep.subr.mxu0 0.0
      %569 = vmatpush2.msra.mxu0 0.0
      %570 = vmatprep.subr.mxu0 0.0
      %571 = vmatpush2.msra.mxu0 0.0
      %572 = vmatprep.subr.mxu0 0.0
      %573 = vmatpush2.msra.mxu0 0.0
      %574 = vmatprep.subr.mxu0 0.0
      %575 = vmatpush2.msra.mxu0 0.0
      %576 = vmatprep.subr.mxu0 0.0
      %577 = vmatpush2.msra.mxu0 0.0
      %578 = vmatprep.subr.mxu0 0.0
      %579 = vmatpush2.msra.mxu0 0.0
      %580 = vmatprep.subr.mxu0 0.0
      %581 = vmatpush2.msra.mxu0 0.0
      %582 = vmatprep.subr.mxu0 0.0
      %583 = vmatpush2.msra.mxu0 0.0
      %584 = vmatprep.subr.mxu0 0.0
      %585 = vmatpush2.msra.mxu0 0.0
      %586 = vmatprep.subr.mxu0 0.0
      %587 = vmatpush2.msra.mxu0 0.0
      %588 = vmatprep.subr.mxu0 0.0
      %589 = vmatpush2.msra.mxu0 0.0
      %590 = vmatprep.subr.mxu0 0.0
      %591 = vmatpush2.msra.mxu0 0.0
      %592 = vmatprep.mubr.f32.mxu0 0.0
      %593 = vmatmul.mubr.f32.gmra.mxu0 %v517
      %v594 = vpop.f32.mrf.mxu0
      %v595 = vadd.f32 0.0, %v594
      %v596 = vpop.f32.mrf.mxu0
      %597 = vmatprep.mubr.f32.mxu0 0.0
      %598 = vmatmul.mubr.f32.gmra.mxu0 %v519
      %v599 = vpop.f32.mrf.mxu0
      %v600 = vadd.f32 0.0, %v599
      %v601 = vpop.f32.mrf.mxu0
      %602 = vmatprep.mubr.f32.mxu0 0.0
      %603 = vmatmul.mubr.f32.gmra.mxu0 %v521
      %v604 = vpop.f32.mrf.mxu0
      %v605 = vadd.f32 0.0, %v604
      %v606 = vpop.f32.mrf.mxu0
      %607 = vmatprep.mubr.f32.mxu0 0.0
      %608 = vmatmul.mubr.f32.gmra.mxu0 %v523
      %v609 = vpop.f32.mrf.mxu0
      %v610 = vadd.f32 0.0, %v609
      %v611 = vpop.f32.mrf.mxu0
      %612 = vdwg.mxu0
      %v613 = vadd.f32 %v493, %v595
      %v614 = vadd.f32 %v494, %v600
      %v615 = vadd.f32 %v495, %v605
      %v616 = vadd.f32 %v496, %v610
      %vm617 = vcmp.gt.f32.partialorder %v613, 0.0
      %vm618 = vcmp.gt.f32.partialorder %v614, 0.0
      %vm619 = vcmp.gt.f32.partialorder %v615, 0.0
      %vm620 = vcmp.gt.f32.partialorder %v616, 0.0
      %v621 = vmin.f32 %v613, 0.0
      %v622 = vmin.f32 %v614, 0.0
      %v623 = vmin.f32 %v615, 0.0
      %v624 = vmin.f32 %v616, 0.0
      %v625 = vmul.f32 %v621, 1.442695
      %v626 = vpow.pop %v625
      %v627 = vmul.f32 %v622, 1.442695
      %v628 = vpow.pop %v627
      %v629 = vmul.f32 %v623, 1.442695
      %v630 = vpow.pop %v629
      %v631 = vmul.f32 %v624, 1.442695
      %v632 = vpow.pop %v631
      %v633 = vsub.f32 %v626, 1.0
      %v634 = vsub.f32 %v628, 1.0
      %v635 = vsub.f32 %v630, 1.0
      %v636 = vsub.f32 %v632, 1.0
      %v637 = vsel %vm617, %v613, %v633
      %v638 = vsel %vm618, %v614, %v634
      %v639 = vsel %vm619, %v615, %v635
      %v640 = vsel %vm620, %v616, %v636
      %v641 = vld [vmem:[%s3] sm:$0xff]
      %v642 = vld [vmem:[%s3 + $0x8] sm:$0xff]
      %v643 = vld [vmem:[%s3 + $0x10] sm:$0xff]
      %v644 = vld [vmem:[%s3 + $0x18] sm:$0xff]
      %v645 = vld [vmem:[%s3 + $0x20] sm:$0xff]
      %v646 = vld [vmem:[%s3 + $0x28] sm:$0xff]
      %v647 = vld [vmem:[%s3 + $0x30] sm:$0xff]
      %v648 = vld [vmem:[%s3 + $0x38] sm:$0xff]
      %v649 = vld [vmem:[%s3 + $0x40] sm:$0xff]
      %v650 = vld [vmem:[%s3 + $0x48] sm:$0xff]
      %v651 = vld [vmem:[%s3 + $0x50] sm:$0xff]
      %v652 = vld [vmem:[%s3 + $0x58] sm:$0xff]
      %v653 = vld [vmem:[%s3 + $0x60] sm:$0xff]
      %v654 = vld [vmem:[%s3 + $0x68] sm:$0xff]
      %v655 = vld [vmem:[%s3 + $0x70] sm:$0xff]
      %v656 = vld [vmem:[%s3 + $0x78] sm:$0xff]
      %v657 = vld [vmem:[%s4] sm:$0x1]
      %v659 = vlaneseq
      %v660 = vshrl.u32 %v659, 7
      %v661 = vsub.s32 0, %v660
      %v662 = vrot.slane %v657, %v661
      %664 = vmatprep.subr.mxu0 0.0
      %665 = vmatpush1.msra.mxu0 %v656
      %666 = vmatprep.subr.mxu0 0.0
      %667 = vmatpush1.msra.mxu0 %v655
      %668 = vmatprep.subr.mxu0 0.0
      %669 = vmatpush1.msra.mxu0 %v654
      %670 = vmatprep.subr.mxu0 0.0
      %671 = vmatpush1.msra.mxu0 %v653
      %672 = vmatprep.subr.mxu0 0.0
      %673 = vmatpush1.msra.mxu0 %v652
      %674 = vmatprep.subr.mxu0 0.0
      %675 = vmatpush1.msra.mxu0 %v651
      %676 = vmatprep.subr.mxu0 0.0
      %677 = vmatpush1.msra.mxu0 %v650
      %678 = vmatprep.subr.mxu0 0.0
      %679 = vmatpush1.msra.mxu0 %v649
      %680 = vmatprep.subr.mxu0 0.0
      %681 = vmatpush1.msra.mxu0 %v648
      %682 = vmatprep.subr.mxu0 0.0
      %683 = vmatpush1.msra.mxu0 %v647
      %684 = vmatprep.subr.mxu0 0.0
      %685 = vmatpush1.msra.mxu0 %v646
      %686 = vmatprep.subr.mxu0 0.0
      %687 = vmatpush1.msra.mxu0 %v645
      %688 = vmatprep.subr.mxu0 0.0
      %689 = vmatpush1.msra.mxu0 %v644
      %690 = vmatprep.subr.mxu0 0.0
      %691 = vmatpush1.msra.mxu0 %v643
      %692 = vmatprep.subr.mxu0 0.0
      %693 = vmatpush1.msra.mxu0 %v642
      %694 = vmatprep.subr.mxu0 0.0
      %695 = vmatpush1.msra.mxu0 %v641
      %696 = vmatprep.subr.mxu0 0.0
      %697 = vmatpush2.msra.mxu0 0.0
      %698 = vmatprep.subr.mxu0 0.0
      %699 = vmatpush2.msra.mxu0 0.0
      %700 = vmatprep.subr.mxu0 0.0
      %701 = vmatpush2.msra.mxu0 0.0
      %702 = vmatprep.subr.mxu0 0.0
      %703 = vmatpush2.msra.mxu0 0.0
      %704 = vmatprep.subr.mxu0 0.0
      %705 = vmatpush2.msra.mxu0 0.0
      %706 = vmatprep.subr.mxu0 0.0
      %707 = vmatpush2.msra.mxu0 0.0
      %708 = vmatprep.subr.mxu0 0.0
      %709 = vmatpush2.msra.mxu0 0.0
      %710 = vmatprep.subr.mxu0 0.0
      %711 = vmatpush2.msra.mxu0 0.0
      %712 = vmatprep.subr.mxu0 0.0
      %713 = vmatpush2.msra.mxu0 0.0
      %714 = vmatprep.subr.mxu0 0.0
      %715 = vmatpush2.msra.mxu0 0.0
      %716 = vmatprep.subr.mxu0 0.0
      %717 = vmatpush2.msra.mxu0 0.0
      %718 = vmatprep.subr.mxu0 0.0
      %719 = vmatpush2.msra.mxu0 0.0
      %720 = vmatprep.subr.mxu0 0.0
      %721 = vmatpush2.msra.mxu0 0.0
      %722 = vmatprep.subr.mxu0 0.0
      %723 = vmatpush2.msra.mxu0 0.0
      %724 = vmatprep.subr.mxu0 0.0
      %725 = vmatpush2.msra.mxu0 0.0
      %726 = vmatprep.subr.mxu0 0.0
      %727 = vmatpush2.msra.mxu0 0.0
      %728 = vmatprep.mubr.f32.mxu0 0.0
      %729 = vmatmul.mubr.f32.gmra.mxu0 %v637
      %v730 = vpop.f32.mrf.mxu0
      %v731 = vadd.f32 %v662, %v730
      %v732 = vpop.f32.mrf.mxu0
      %733 = vmatprep.mubr.f32.mxu0 0.0
      %734 = vmatmul.mubr.f32.gmra.mxu0 %v638
      %v735 = vpop.f32.mrf.mxu0
      %v736 = vadd.f32 %v662, %v735
      %v737 = vpop.f32.mrf.mxu0
      %738 = vmatprep.mubr.f32.mxu0 0.0
      %739 = vmatmul.mubr.f32.gmra.mxu0 %v639
      %v740 = vpop.f32.mrf.mxu0
      %v741 = vadd.f32 %v662, %v740
      %v742 = vpop.f32.mrf.mxu0
      %743 = vmatprep.mubr.f32.mxu0 0.0
      %744 = vmatmul.mubr.f32.gmra.mxu0 %v640
      %v745 = vpop.f32.mrf.mxu0
      %v746 = vadd.f32 %v662, %v745
      %v747 = vpop.f32.mrf.mxu0
      %748 = vdwg.mxu0
      %v754 = vrot.slane %v225, 1
      %v755 = vrot.slane %v226, 1
      %v756 = vsel %vm394, %v754, %v755
      %v757 = vrot.slane %v227, 1
      %v758 = vsel %vm394, %v755, %v757
      %v759 = vrot.slane %v228, 1
      %v760 = vsel %vm394, %v757, %v759
      %v761 = vrot.slane %v229, 1
      %v762 = vsel %vm394, %v759, %v761
      %v767 = vadd.f32 %v731, %v756
      %v768 = vadd.f32 %v736, %v758
      %v769 = vadd.f32 %v741, %v760
      %v770 = vadd.f32 %v746, %v762
      %771 = vst [vmem:[%s224] sm:$0xff] %v767
      %772 = vst [vmem:[%s224 + $0x8] sm:$0xff] %v768
      %773 = vst [vmem:[%s224 + $0x10] sm:$0xff] %v769
      %774 = vst [vmem:[%s224 + $0x18] sm:$0xff] %v770
      %p775 = scmp.lt.s32.totalorder %s16, 1
      %s776 = scalar_select %p775, %s16, 1
      %s777 = smul.addr %s776, 4
      %s778 = smul.addr %s777, 8
      %s779 = scalar_lea.vmem %s5, %s778
      // Predicated region
      $region41: #{seanet_encoder_forward.9} parent=39 // pred_check
        %p780 = pneg %p144
      $region42: #{seanet_encoder_forward.9} parent=39 // pred_check_branch
        %782 = sbr.rel (%p780) target = $region44
      $region43: #{seanet_encoder_forward.9} parent=39 // pred_region
        _
      $region44: #{seanet_encoder_forward.9} parent=39 // pred_fallthru
        _
    $region40: #{seanet_encoder_forward.9} parent=5 // pred_fallthru
      _
    %p783 = scmp.le.s32.totalorder 2, %s11
    // Predicated region
    $region45: #{seanet_encoder_forward.9} parent=5 // pred_check
      %p784 = pneg %p783
    $region46: #{seanet_encoder_forward.9} parent=5 // pred_check_branch
      %786 = sbr.rel (%p784) target = $region48
    $region47: #{seanet_encoder_forward.9} parent=5 // pred_region
      %s787 = ssub.s32 %s11, 2
      // Predicated region
      $region49: #{seanet_encoder_forward.9} parent=47 // pred_check
        %p788 = pneg %p150
      $region50: #{seanet_encoder_forward.9} parent=47 // pred_check_branch
        %790 = sbr.rel (%p788) target = $region52
      $region51: #{seanet_encoder_forward.9} parent=47 // pred_region
        %p791 = scmp.lt.s32.totalorder %s17, 1
        %s792 = scalar_select %p791, %s17, 1
        %s793 = smul.addr %s792, 4
        %s794 = smul.addr %s793, 8
        %s795 = scalar_lea.vmem %s5, %s794
      $region52: #{seanet_encoder_forward.9} parent=47 // pred_fallthru
        _
    $region48: #{seanet_encoder_forward.9} parent=5 // pred_fallthru
      _
  $region6: #{seanet_encoder_forward.9} parent=0 // loop_footer
    %s15 = sadd.s32 1, %s11
  $region7: #{seanet_encoder_forward.9} parent=0 // loop_footer_branch
    %10 = sbr.rel target = $region3
  $region8: #{seanet_encoder_forward.9} parent=0 // loop_exit
    _

// kernel: seanet_encoder_forward.6
$region0: #{seanet_encoder_forward.6}
  #allocation0 [shape = 'u32[]', space=smem, size = 0x4, offset = 0x4, fixed_abs, tag = 'smem constant byte address 0x4 - core index']
  #allocation1 [shape = 'u32[144,128]{1,0:T(1,128)}', space=vmem, size = 0x12000, scoped, tag = 'internal scratch']
  %s0 = inlined_call_operand.vmem [shape: f32[2,70,128], index: 0, kind: input, shape index: {}]
  %s1 = inlined_call_operand.hbm [shape: f32[7,128,128], index: 1, kind: input, shape index: {}]
  %s2 = inlined_call_operand.vmem [shape: f32[1,128], index: 2, kind: input, shape index: {}]
  %s3 = inlined_call_operand.vmem [shape: f32[2,64,128], index: 3, kind: output, shape index: {}]
  %s4 = sld [smem:[#allocation0]]
  $region49: #{seanet_encoder_forward.6} parent=0
    _
  %s6 = ssub.s32 1, %s4
  %s7 = scalar_select 0, %s6, %s4
  $region1: #{seanet_encoder_forward.6} parent=0
    #allocation2 [shape = 'u8[458752]{0}', space=vmem, size = 0x70000, scoped, tag = 'input window, operand 1, single buffered']
    #allocation3 [shape = 's32[2]{0}', space=sflag, size = 0x8, scoped, tag = 'scoped memory for seanet_encoder_forward.6']
    %8 = vsyncpa [#allocation3], 0
    loop: start=0, step=1, limit=4
    $region2: #{seanet_encoder_forward.6} parent=1 // loop_pre_header
      _
    $region3: #{seanet_encoder_forward.6} parent=1 // loop_header
      %s10 = sphi 0, %s14
      %p11 = scmp.ge.s32.totalorder %s10, 4
      %s20 = sphi 0, %s22
      %s23 = sphi 0, %s20
      %s24 = sphi 0, %s23
      %s40 = sphi 0, %s24
      %s44 = sphi 0, %s44
      %s46 = sphi 0, %s44
      %s47 = sphi 0, %s46
      %s61 = sphi 0, %s47
      %s65 = sphi 0, %s65
      %s67 = sphi 0, %s65
      %s68 = sphi 0, %s67
      %s82 = sphi 0, %s68
      %s88 = sphi 0, %s90
      %s91 = sphi 0, %s88
      %s92 = sphi 0, %s91
      %s108 = sphi 0, %s92
    $region4: #{seanet_encoder_forward.6} parent=1 // loop_header_branch
      %13 = sbr.rel (%p11) target = $region8
    $region5: #{seanet_encoder_forward.6} parent=1 // loop_body
      %s15 = ssub.s32 %s10, 1
      %s16 = ssub.s32 %s10, 2
      %s17 = sadd.s32 %s10, 1
      %s18 = ssub.s32 %s10, %s17
      %p19 = scmp.eq.s32.totalorder %s18, 0
      %s21 = sadd.s32 %s20, 1
      %s22 = scalar_select %p19, %s20, %s21
      %p25 = pneg %p19
      %p26 = scmp.eq.s32.totalorder %s10, 1
      %p27 = por %p25, %p26
      %p28 = scmp.ne.s32.totalorder %s20, %s23
      %p29 = scmp.eq.s32.totalorder %s10, 0
      %p30 = por %p28, %p29
      %p31 = scmp.ne.s32.totalorder %s20, %s23
      %p32 = scmp.eq.s32.totalorder %s15, 1
      %p33 = por %p31, %p32
      %p34 = scmp.ne.s32.totalorder %s23, %s24
      %p35 = scmp.eq.s32.totalorder %s15, 0
      %p36 = por %p34, %p35
      %p37 = scmp.ne.s32.totalorder %s23, %s24
      %p38 = scmp.eq.s32.totalorder %s16, 1
      %p39 = por %p37, %p38
      %p41 = scmp.ne.s32.totalorder %s24, %s40
      %p42 = scmp.eq.s32.totalorder %s16, 0
      %p43 = por %p41, %p42
      %s45 = sadd.s32 %s44, 1
      %p48 = scmp.eq.s32.totalorder %s10, 1
      %p49 = scmp.ne.s32.totalorder %s44, %s46
      %p50 = scmp.eq.s32.totalorder %s10, 0
      %p51 = por %p49, %p50
      %p52 = scmp.ne.s32.totalorder %s44, %s46
      %p53 = scmp.eq.s32.totalorder %s15, 1
      %p54 = por %p52, %p53
      %p55 = scmp.ne.s32.totalorder %s46, %s47
      %p56 = scmp.eq.s32.totalorder %s15, 0
      %p57 = por %p55, %p56
      %p58 = scmp.ne.s32.totalorder %s46, %s47
      %p59 = scmp.eq.s32.totalorder %s16, 1
      %p60 = por %p58, %p59
      %p62 = scmp.ne.s32.totalorder %s47, %s61
      %p63 = scmp.eq.s32.totalorder %s16, 0
      %p64 = por %p62, %p63
      %s66 = sadd.s32 %s65, 1
      %p69 = scmp.eq.s32.totalorder %s10, 1
      %p70 = scmp.ne.s32.totalorder %s65, %s67
      %p71 = scmp.eq.s32.totalorder %s10, 0
      %p72 = por %p70, %p71
      %p73 = scmp.ne.s32.totalorder %s65, %s67
      %p74 = scmp.eq.s32.totalorder %s15, 1
      %p75 = por %p73, %p74
      %p76 = scmp.ne.s32.totalorder %s67, %s68
      %p77 = scmp.eq.s32.totalorder %s15, 0
      %p78 = por %p76, %p77
      %p79 = scmp.ne.s32.totalorder %s67, %s68
      %p80 = scmp.eq.s32.totalorder %s16, 1
      %p81 = por %p79, %p80
      %p83 = scmp.ne.s32.totalorder %s68, %s82
      %p84 = scmp.eq.s32.totalorder %s16, 0
      %p85 = por %p83, %p84
      %s86 = ssub.s32 %s10, %s17
      %p87 = scmp.eq.s32.totalorder %s86, 0
      %s89 = sadd.s32 %s88, 1
      %s90 = scalar_select %p87, %s88, %s89
      %p93 = pneg %p87
      %p94 = scmp.eq.s32.totalorder %s10, 1
      %p95 = por %p93, %p94
      %p96 = scmp.ne.s32.totalorder %s88, %s91
      %p97 = scmp.eq.s32.totalorder %s10, 0
      %p98 = por %p96, %p97
      %p99 = scmp.ne.s32.totalorder %s88, %s91
      %p100 = scmp.eq.s32.totalorder %s15, 1
      %p101 = por %p99, %p100
      %p102 = scmp.ne.s32.totalorder %s91, %s92
      %p103 = scmp.eq.s32.totalorder %s15, 0
      %p104 = por %p102, %p103
      %p105 = scmp.ne.s32.totalorder %s91, %s92
      %p106 = scmp.eq.s32.totalorder %s16, 1
      %p107 = por %p105, %p106
      %p109 = scmp.ne.s32.totalorder %s92, %s108
      %p110 = scmp.eq.s32.totalorder %s16, 0
      %p111 = por %p109, %p110
      %p112 = scmp.le.s32.totalorder 1, %s10
      %p113 = scmp.lt.s32.totalorder %s10, 3
      %p114 = pnand %p112, %p113
      %p115 = pneg %p114
      // Predicated region
      $region9: #{seanet_encoder_forward.6} parent=5 // pred_check
        _
      $region10: #{seanet_encoder_forward.6} parent=5 // pred_check_branch
        %117 = sbr.rel (%p114) target = $region12
      $region11: #{seanet_encoder_forward.6} parent=5 // pred_region
        %s118 = ssub.s32 %s10, 1
        // Predicated region
        $region13: #{seanet_encoder_forward.6} parent=11 // pred_check
          %p119 = pneg %p57
        $region14: #{seanet_encoder_forward.6} parent=11 // pred_check_branch
          %121 = sbr.rel (%p119) target = $region16
        $region15: #{seanet_encoder_forward.6} parent=11 // pred_region
          %s123 = ssub.s32 14336, 14336
          %124 = vsyncadd [#allocation3], %s123
          %s125 = sshll.u32 [#allocation2], 4
          %s126 = int_to_ptr.vmem [resolvable:$true] %s125
          %131 = dma.hbm_to_vmem [thread:$0]  %s1, 14336, %s126, [#allocation3], 128, 128, 8
        $region16: #{seanet_encoder_forward.6} parent=11 // pred_fallthru
          _
        // Predicated region
        $region17: #{seanet_encoder_forward.6} parent=11 // pred_check
          %p132 = pneg %p78
        $region18: #{seanet_encoder_forward.6} parent=11 // pred_check_branch
          %134 = sbr.rel (%p132) target = $region20
        $region19: #{seanet_encoder_forward.6} parent=11 // pred_region
          _
        $region20: #{seanet_encoder_forward.6} parent=11 // pred_fallthru
          _
      $region12: #{seanet_encoder_forward.6} parent=5 // pred_fallthru
        _
      %p135 = scmp.lt.s32.totalorder %s10, 2
      // Predicated region
      $region21: #{seanet_encoder_forward.6} parent=5 // pred_check
        %p136 = pneg %p135
      $region22: #{seanet_encoder_forward.6} parent=5 // pred_check_branch
        %138 = sbr.rel (%p136) target = $region24
      $region23: #{seanet_encoder_forward.6} parent=5 // pred_region
        // Predicated region
        $region25: #{seanet_encoder_forward.6} parent=23 // pred_check
          %p139 = pneg %p30
        $region26: #{seanet_encoder_forward.6} parent=23 // pred_check_branch
          %141 = sbr.rel (%p139) target = $region28
        $region27: #{seanet_encoder_forward.6} parent=23 // pred_region
          %p142 = scmp.lt.s32.totalorder %s10, 1
          %s143 = scalar_select %p142, %s10, 1
          %s144 = smul.addr %s143, 9
          %s145 = smul.addr %s144, 8
          %s146 = scalar_lea.vmem %s0, %s145
        $region28: #{seanet_encoder_forward.6} parent=23 // pred_fallthru
          _
      $region24: #{seanet_encoder_forward.6} parent=5 // pred_fallthru
        _
      %p147 = scmp.le.s32.totalorder 1, %s10
      %p148 = scmp.lt.s32.totalorder %s10, 3
      %p149 = pnand %p147, %p148
      %p150 = pneg %p149
      // Predicated region
      $region29: #{seanet_encoder_forward.6} parent=5 // pred_check
        _
      $region30: #{seanet_encoder_forward.6} parent=5 // pred_check_branch
        %152 = sbr.rel (%p149) target = $region32
      $region31: #{seanet_encoder_forward.6} parent=5 // pred_region
        %s153 = ssub.s32 %s10, 1
        // Predicated region
        $region33: #{seanet_encoder_forward.6} parent=31 // pred_check
          %p154 = pneg %p57
        $region34: #{seanet_encoder_forward.6} parent=31 // pred_check_branch
          %156 = sbr.rel (%p154) target = $region36
        $region35: #{seanet_encoder_forward.6} parent=31 // pred_region
          %157 = dma.done [#allocation3], 14336
        $region36: #{seanet_encoder_forward.6} parent=31 // pred_fallthru
          _
        %p158 = scmp.lt.s32.totalorder %s15, 1
        %s159 = scalar_select %p158, %s15, 1
        %s160 = smul.addr %s159, 9
        %s161 = smul.addr %s160, 8
        %s162 = scalar_lea.vmem %s0, %s161
        %p163 = pneg %p36
        %p164 = pneg %p33
        %p165 = pneg %p57
        %p166 = pneg %p54
        %p167 = pneg %p78
        %p168 = pneg %p75
        %p169 = pneg %p104
        %p170 = pneg %p101
        %p171 = scmp.lt.s32.totalorder %s15, 1
        %s172 = scalar_select %p171, %s15, 1
        %s173 = smul.addr %s172, 8
        %s174 = smul.addr %s173, 8
        %s175 = scalar_lea.vmem %s3, %s174
        %p176 = scmp.lt.s32.totalorder %s15, 1
        %s177 = scalar_select %p176, %s15, 1
        %s178 = smul.addr %s177, 9
        %s179 = smul.addr %s178, 8
        %s180 = scalar_lea.vmem %s0, %s179
        %p181 = scmp.lt.s32.totalorder %s15, 1
        %s182 = scalar_select %p181, %s15, 1
        %s183 = smul.addr %s182, 8
        %s184 = smul.addr %s183, 8
        %s185 = scalar_lea.vmem %s3, %s184
        %v186 = vld [vmem:[%s180] sm:$0xff]
        %v187 = vld [vmem:[%s180 + $0x8] sm:$0xff]
        %v188 = vld [vmem:[%s180 + $0x10] sm:$0xff]
        %v189 = vld [vmem:[%s180 + $0x18] sm:$0xff]
        %v190 = vld [vmem:[%s180 + $0x20] sm:$0xff]
        %v191 = vld [vmem:[%s180 + $0x28] sm:$0xff]
        %v192 = vld [vmem:[%s180 + $0x30] sm:$0xff]
        %v193 = vld [vmem:[%s180 + $0x38] sm:$0xff]
        %v194 = vld [vmem:[%s180 + $0x40] sm:$0x3f]
        %v195 = vld [vmem:[%s2] sm:$0x1]
        %v197 = vlaneseq
        %v198 = vshrl.u32 %v197, 7
        %v199 = vsub.s32 0, %v198
        %v200 = vrot.slane %v195, %v199
        %v202 = vld [vmem:[#allocation2] sm:$0xff]
        %v203 = vld [vmem:[#allocation2 + $0x8] sm:$0xff]
        %v204 = vld [vmem:[#allocation2 + $0x10] sm:$0xff]
        %v205 = vld [vmem:[#allocation2 + $0x18] sm:$0xff]
        %v206 = vld [vmem:[#allocation2 + $0x20] sm:$0xff]
        %v207 = vld [vmem:[#allocation2 + $0x28] sm:$0xff]
        %v208 = vld [vmem:[#allocation2 + $0x30] sm:$0xff]
        %v209 = vld [vmem:[#allocation2 + $0x38] sm:$0xff]
        %v210 = vld [vmem:[#allocation2 + $0x40] sm:$0xff]
        %v211 = vld [vmem:[#allocation2 + $0x48] sm:$0xff]
        %v212 = vld [vmem:[#allocation2 + $0x50] sm:$0xff]
        %v213 = vld [vmem:[#allocation2 + $0x58] sm:$0xff]
        %v214 = vld [vmem:[#allocation2 + $0x60] sm:$0xff]
        %v215 = vld [vmem:[#allocation2 + $0x68] sm:$0xff]
        %v216 = vld [vmem:[#allocation2 + $0x70] sm:$0xff]
        %v217 = vld [vmem:[#allocation2 + $0x78] sm:$0xff]
        %218 = vmatprep.subr.mxu0 0.0
        %219 = vmatpush1.msra.mxu0 %v217
        %220 = vmatprep.subr.mxu0 0.0
        %221 = vmatpush1.msra.mxu0 %v216
        %222 = vmatprep.subr.mxu0 0.0
        %223 = vmatpush1.msra.mxu0 %v215
        %224 = vmatprep.subr.mxu0 0.0
        %225 = vmatpush1.msra.mxu0 %v214
        %226 = vmatprep.subr.mxu0 0.0
        %227 = vmatpush1.msra.mxu0 %v213
        %228 = vmatprep.subr.mxu0 0.0
        %229 = vmatpush1.msra.mxu0 %v212
        %230 = vmatprep.subr.mxu0 0.0
        %231 = vmatpush1.msra.mxu0 %v211
        %232 = vmatprep.subr.mxu0 0.0
        %233 = vmatpush1.msra.mxu0 %v210
        %234 = vmatprep.subr.mxu0 0.0
        %235 = vmatpush1.msra.mxu0 %v209
        %236 = vmatprep.subr.mxu0 0.0
        %237 = vmatpush1.msra.mxu0 %v208
        %238 = vmatprep.subr.mxu0 0.0
        %239 = vmatpush1.msra.mxu0 %v207
        %240 = vmatprep.subr.mxu0 0.0
        %241 = vmatpush1.msra.mxu0 %v206
        %242 = vmatprep.subr.mxu0 0.0
        %243 = vmatpush1.msra.mxu0 %v205
        %244 = vmatprep.subr.mxu0 0.0
        %245 = vmatpush1.msra.mxu0 %v204
        %246 = vmatprep.subr.mxu0 0.0
        %247 = vmatpush1.msra.mxu0 %v203
        %248 = vmatprep.subr.mxu0 0.0
        %249 = vmatpush1.msra.mxu0 %v202
        %250 = vmatprep.subr.mxu0 0.0
        %251 = vmatpush2.msra.mxu0 0.0
        %252 = vmatprep.subr.mxu0 0.0
        %253 = vmatpush2.msra.mxu0 0.0
        %254 = vmatprep.subr.mxu0 0.0
        %255 = vmatpush2.msra.mxu0 0.0
        %256 = vmatprep.subr.mxu0 0.0
        %257 = vmatpush2.msra.mxu0 0.0
        %258 = vmatprep.subr.mxu0 0.0
        %259 = vmatpush2.msra.mxu0 0.0
        %260 = vmatprep.subr.mxu0 0.0
        %261 = vmatpush2.msra.mxu0 0.0
        %262 = vmatprep.subr.mxu0 0.0
        %263 = vmatpush2.msra.mxu0 0.0
        %264 = vmatprep.subr.mxu0 0.0
        %265 = vmatpush2.msra.mxu0 0.0
        %266 = vmatprep.subr.mxu0 0.0
        %267 = vmatpush2.msra.mxu0 0.0
        %268 = vmatprep.subr.mxu0 0.0
        %269 = vmatpush2.msra.mxu0 0.0
        %270 = vmatprep.subr.mxu0 0.0
        %271 = vmatpush2.msra.mxu0 0.0
        %272 = vmatprep.subr.mxu0 0.0
        %273 = vmatpush2.msra.mxu0 0.0
        %274 = vmatprep.subr.mxu0 0.0
        %275 = vmatpush2.msra.mxu0 0.0
        %276 = vmatprep.subr.mxu0 0.0
        %277 = vmatpush2.msra.mxu0 0.0
        %278 = vmatprep.subr.mxu0 0.0
        %279 = vmatpush2.msra.mxu0 0.0
        %280 = vmatprep.subr.mxu0 0.0
        %281 = vmatpush2.msra.mxu0 0.0
        %282 = vmatprep.mubr.f32.mxu0 0.0
        %283 = vmatmul.mubr.f32.gmra.mxu0 %v186
        %v284 = vpop.f32.mrf.mxu0
        %v285 = vadd.f32 0.0, %v284
        %v286 = vpop.f32.mrf.mxu0
        %287 = vmatprep.mubr.f32.mxu0 0.0
        %288 = vmatmul.mubr.f32.gmra.mxu0 %v187
        %v289 = vpop.f32.mrf.mxu0
        %v290 = vadd.f32 0.0, %v289
        %v291 = vpop.f32.mrf.mxu0
        %292 = vmatprep.mubr.f32.mxu0 0.0
        %293 = vmatmul.mubr.f32.gmra.mxu0 %v188
        %v294 = vpop.f32.mrf.mxu0
        %v295 = vadd.f32 0.0, %v294
        %v296 = vpop.f32.mrf.mxu0
        %297 = vmatprep.mubr.f32.mxu0 0.0
        %298 = vmatmul.mubr.f32.gmra.mxu0 %v189
        %v299 = vpop.f32.mrf.mxu0
        %v300 = vadd.f32 0.0, %v299
        %v301 = vpop.f32.mrf.mxu0
        %302 = vmatprep.mubr.f32.mxu0 0.0
        %303 = vmatmul.mubr.f32.gmra.mxu0 %v190
        %v304 = vpop.f32.mrf.mxu0
        %v305 = vadd.f32 0.0, %v304
        %v306 = vpop.f32.mrf.mxu0
        %307 = vmatprep.mubr.f32.mxu0 0.0
        %308 = vmatmul.mubr.f32.gmra.mxu0 %v191
        %v309 = vpop.f32.mrf.mxu0
        %v310 = vadd.f32 0.0, %v309
        %v311 = vpop.f32.mrf.mxu0
        %312 = vmatprep.mubr.f32.mxu0 0.0
        %313 = vmatmul.mubr.f32.gmra.mxu0 %v192
        %v314 = vpop.f32.mrf.mxu0
        %v315 = vadd.f32 0.0, %v314
        %v316 = vpop.f32.mrf.mxu0
        %317 = vmatprep.mubr.f32.mxu0 0.0
        %318 = vmatmul.mubr.f32.gmra.mxu0 %v193
        %v319 = vpop.f32.mrf.mxu0
        %v320 = vadd.f32 0.0, %v319
        %v321 = vpop.f32.mrf.mxu0
        %322 = vdwg.mxu0
        %v323 = vadd.f32 %v200, %v285
        %v324 = vadd.f32 %v200, %v290
        %v325 = vadd.f32 %v200, %v295
        %v326 = vadd.f32 %v200, %v300
        %v327 = vadd.f32 %v200, %v305
        %v328 = vadd.f32 %v200, %v310
        %v329 = vadd.f32 %v200, %v315
        %v330 = vadd.f32 %v200, %v320
        %s331 = scalar_lea.vmem [#allocation2], 128
        %v332 = vld [vmem:[%s331] sm:$0xff]
        %v333 = vld [vmem:[%s331 + $0x8] sm:$0xff]
        %v334 = vld [vmem:[%s331 + $0x10] sm:$0xff]
        %v335 = vld [vmem:[%s331 + $0x18] sm:$0xff]
        %v336 = vld [vmem:[%s331 + $0x20] sm:$0xff]
        %v337 = vld [vmem:[%s331 + $0x28] sm:$0xff]
        %v338 = vld [vmem:[%s331 + $0x30] sm:$0xff]
        %v339 = vld [vmem:[%s331 + $0x38] sm:$0xff]
        %v340 = vld [vmem:[%s331 + $0x40] sm:$0xff]
        %v341 = vld [vmem:[%s331 + $0x48] sm:$0xff]
        %v342 = vld [vmem:[%s331 + $0x50] sm:$0xff]
        %v343 = vld [vmem:[%s331 + $0x58] sm:$0xff]
        %v344 = vld [vmem:[%s331 + $0x60] sm:$0xff]
        %v345 = vld [vmem:[%s331 + $0x68] sm:$0xff]
        %v346 = vld [vmem:[%s331 + $0x70] sm:$0xff]
        %v347 = vld [vmem:[%s331 + $0x78] sm:$0xff]
        %vm357 = vcmask 1046528
        %v358 = vrot.slane %v186, 1
        %v359 = vrot.slane %v187, 1
        %v360 = vsel %vm357, %v358, %v359
        %v361 = vrot.slane %v188, 1
        %v362 = vsel %vm357, %v359, %v361
        %v363 = vrot.slane %v189, 1
        %v364 = vsel %vm357, %v361, %v363
        %v365 = vrot.slane %v190, 1
        %v366 = vsel %vm357, %v363, %v365
        %v367 = vrot.slane %v191, 1
        %v368 = vsel %vm357, %v365, %v367
        %v369 = vrot.slane %v192, 1
        %v370 = vsel %vm357, %v367, %v369
        %v371 = vrot.slane %v193, 1
        %v372 = vsel %vm357, %v369, %v371
        %v373 = vrot.slane %v194, 1
        %v374 = vsel %vm357, %v371, %v373
        %383 = vmatprep.subr.mxu0 0.0
        %384 = vmatpush1.msra.mxu0 %v347
        %385 = vmatprep.subr.mxu0 0.0
        %386 = vmatpush1.msra.mxu0 %v346
        %387 = vmatprep.subr.mxu0 0.0
        %388 = vmatpush1.msra.mxu0 %v345
        %389 = vmatprep.subr.mxu0 0.0
        %390 = vmatpush1.msra.mxu0 %v344
        %391 = vmatprep.subr.mxu0 0.0
        %392 = vmatpush1.msra.mxu0 %v343
        %393 = vmatprep.subr.mxu0 0.0
        %394 = vmatpush1.msra.mxu0 %v342
        %395 = vmatprep.subr.mxu0 0.0
        %396 = vmatpush1.msra.mxu0 %v341
        %397 = vmatprep.subr.mxu0 0.0
        %398 = vmatpush1.msra.mxu0 %v340
        %399 = vmatprep.subr.mxu0 0.0
        %400 = vmatpush1.msra.mxu0 %v339
        %401 = vmatprep.subr.mxu0 0.0
        %402 = vmatpush1.msra.mxu0 %v338
        %403 = vmatprep.subr.mxu0 0.0
        %404 = vmatpush1.msra.mxu0 %v337
        %405 = vmatprep.subr.mxu0 0.0
        %406 = vmatpush1.msra.mxu0 %v336
        %407 = vmatprep.subr.mxu0 0.0
        %408 = vmatpush1.msra.mxu0 %v335
        %409 = vmatprep.subr.mxu0 0.0
        %410 = vmatpush1.msra.mxu0 %v334
        %411 = vmatprep.subr.mxu0 0.0
        %412 = vmatpush1.msra.mxu0 %v333
        %413 = vmatprep.subr.mxu0 0.0
        %414 = vmatpush1.msra.mxu0 %v332
        %415 = vmatprep.subr.mxu0 0.0
        %416 = vmatpush2.msra.mxu0 0.0
        %417 = vmatprep.subr.mxu0 0.0
        %418 = vmatpush2.msra.mxu0 0.0
        %419 = vmatprep.subr.mxu0 0.0
        %420 = vmatpush2.msra.mxu0 0.0
        %421 = vmatprep.subr.mxu0 0.0
        %422 = vmatpush2.msra.mxu0 0.0
        %423 = vmatprep.subr.mxu0 0.0
        %424 = vmatpush2.msra.mxu0 0.0
        %425 = vmatprep.subr.mxu0 0.0
        %426 = vmatpush2.msra.mxu0 0.0
        %427 = vmatprep.subr.mxu0 0.0
        %428 = vmatpush2.msra.mxu0 0.0
        %429 = vmatprep.subr.mxu0 0.0
        %430 = vmatpush2.msra.mxu0 0.0
        %431 = vmatprep.subr.mxu0 0.0
        %432 = vmatpush2.msra.mxu0 0.0
        %433 = vmatprep.subr.mxu0 0.0
        %434 = vmatpush2.msra.mxu0 0.0
        %435 = vmatprep.subr.mxu0 0.0
        %436 = vmatpush2.msra.mxu0 0.0
        %437 = vmatprep.subr.mxu0 0.0
        %438 = vmatpush2.msra.mxu0 0.0
        %439 = vmatprep.subr.mxu0 0.0
        %440 = vmatpush2.msra.mxu0 0.0
        %441 = vmatprep.subr.mxu0 0.0
        %442 = vmatpush2.msra.mxu0 0.0
        %443 = vmatprep.subr.mxu0 0.0
        %444 = vmatpush2.msra.mxu0 0.0
        %445 = vmatprep.subr.mxu0 0.0
        %446 = vmatpush2.msra.mxu0 0.0
        %447 = vmatprep.mubr.f32.mxu0 0.0
        %448 = vmatmul.mubr.f32.gmra.mxu0 %v360
        %v449 = vpop.f32.mrf.mxu0
        %v450 = vadd.f32 0.0, %v449
        %v451 = vpop.f32.mrf.mxu0
        %452 = vmatprep.mubr.f32.mxu0 0.0
        %453 = vmatmul.mubr.f32.gmra.mxu0 %v362
        %v454 = vpop.f32.mrf.mxu0
        %v455 = vadd.f32 0.0, %v454
        %v456 = vpop.f32.mrf.mxu0
        %457 = vmatprep.mubr.f32.mxu0 0.0
        %458 = vmatmul.mubr.f32.gmra.mxu0 %v364
        %v459 = vpop.f32.mrf.mxu0
        %v460 = vadd.f32 0.0, %v459
        %v461 = vpop.f32.mrf.mxu0
        %462 = vmatprep.mubr.f32.mxu0 0.0
        %463 = vmatmul.mubr.f32.gmra.mxu0 %v366
        %v464 = vpop.f32.mrf.mxu0
        %v465 = vadd.f32 0.0, %v464
        %v466 = vpop.f32.mrf.mxu0
        %467 = vmatprep.mubr.f32.mxu0 0.0
        %468 = vmatmul.mubr.f32.gmra.mxu0 %v368
        %v469 = vpop.f32.mrf.mxu0
        %v470 = vadd.f32 0.0, %v469
        %v471 = vpop.f32.mrf.mxu0
        %472 = vmatprep.mubr.f32.mxu0 0.0
        %473 = vmatmul.mubr.f32.gmra.mxu0 %v370
        %v474 = vpop.f32.mrf.mxu0
        %v475 = vadd.f32 0.0, %v474
        %v476 = vpop.f32.mrf.mxu0
        %477 = vmatprep.mubr.f32.mxu0 0.0
        %478 = vmatmul.mubr.f32.gmra.mxu0 %v372
        %v479 = vpop.f32.mrf.mxu0
        %v480 = vadd.f32 0.0, %v479
        %v481 = vpop.f32.mrf.mxu0
        %482 = vmatprep.mubr.f32.mxu0 0.0
        %483 = vmatmul.mubr.f32.gmra.mxu0 %v374
        %v484 = vpop.f32.mrf.mxu0
        %v485 = vadd.f32 0.0, %v484
        %v486 = vpop.f32.mrf.mxu0
        %487 = vdwg.mxu0
        %v488 = vadd.f32 %v323, %v450
        %v489 = vadd.f32 %v324, %v455
        %v490 = vadd.f32 %v325, %v460
        %v491 = vadd.f32 %v326, %v465
        %v492 = vadd.f32 %v327, %v470
        %v493 = vadd.f32 %v328, %v475
        %v494 = vadd.f32 %v329, %v480
        %v495 = vadd.f32 %v330, %v485
        %s496 = scalar_lea.vmem [#allocation2], 256
        %v497 = vld [vmem:[%s496] sm:$0xff]
        %v498 = vld [vmem:[%s496 + $0x8] sm:$0xff]
        %v499 = vld [vmem:[%s496 + $0x10] sm:$0xff]
        %v500 = vld [vmem:[%s496 + $0x18] sm:$0xff]
        %v501 = vld [vmem:[%s496 + $0x20] sm:$0xff]
        %v502 = vld [vmem:[%s496 + $0x28] sm:$0xff]
        %v503 = vld [vmem:[%s496 + $0x30] sm:$0xff]
        %v504 = vld [vmem:[%s496 + $0x38] sm:$0xff]
        %v505 = vld [vmem:[%s496 + $0x40] sm:$0xff]
        %v506 = vld [vmem:[%s496 + $0x48] sm:$0xff]
        %v507 = vld [vmem:[%s496 + $0x50] sm:$0xff]
        %v508 = vld [vmem:[%s496 + $0x58] sm:$0xff]
        %v509 = vld [vmem:[%s496 + $0x60] sm:$0xff]
        %v510 = vld [vmem:[%s496 + $0x68] sm:$0xff]
        %v511 = vld [vmem:[%s496 + $0x70] sm:$0xff]
        %v512 = vld [vmem:[%s496 + $0x78] sm:$0xff]
        %vm513 = vcmask 1045504
        %v514 = vrot.slane %v186, 2
        %v515 = vrot.slane %v187, 2
        %v516 = vsel %vm513, %v514, %v515
        %v517 = vrot.slane %v188, 2
        %v518 = vsel %vm513, %v515, %v517
        %v519 = vrot.slane %v189, 2
        %v520 = vsel %vm513, %v517, %v519
        %v521 = vrot.slane %v190, 2
        %v522 = vsel %vm513, %v519, %v521
        %v523 = vrot.slane %v191, 2
        %v524 = vsel %vm513, %v521, %v523
        %v525 = vrot.slane %v192, 2
        %v526 = vsel %vm513, %v523, %v525
        %v527 = vrot.slane %v193, 2
        %v528 = vsel %vm513, %v525, %v527
        %v529 = vrot.slane %v194, 2
        %v530 = vsel %vm513, %v527, %v529
        %539 = vmatprep.subr.mxu0 0.0
        %540 = vmatpush1.msra.mxu0 %v512
        %541 = vmatprep.subr.mxu0 0.0
        %542 = vmatpush1.msra.mxu0 %v511
        %543 = vmatprep.subr.mxu0 0.0
        %544 = vmatpush1.msra.mxu0 %v510
        %545 = vmatprep.subr.mxu0 0.0
        %546 = vmatpush1.msra.mxu0 %v509
        %547 = vmatprep.subr.mxu0 0.0
        %548 = vmatpush1.msra.mxu0 %v508
        %549 = vmatprep.subr.mxu0 0.0
        %550 = vmatpush1.msra.mxu0 %v507
        %551 = vmatprep.subr.mxu0 0.0
        %552 = vmatpush1.msra.mxu0 %v506
        %553 = vmatprep.subr.mxu0 0.0
        %554 = vmatpush1.msra.mxu0 %v505
        %555 = vmatprep.subr.mxu0 0.0
        %556 = vmatpush1.msra.mxu0 %v504
        %557 = vmatprep.subr.mxu0 0.0
        %558 = vmatpush1.msra.mxu0 %v503
        %559 = vmatprep.subr.mxu0 0.0
        %560 = vmatpush1.msra.mxu0 %v502
        %561 = vmatprep.subr.mxu0 0.0
        %562 = vmatpush1.msra.mxu0 %v501
        %563 = vmatprep.subr.mxu0 0.0
        %564 = vmatpush1.msra.mxu0 %v500
        %565 = vmatprep.subr.mxu0 0.0
        %566 = vmatpush1.msra.mxu0 %v499
        %567 = vmatprep.subr.mxu0 0.0
        %568 = vmatpush1.msra.mxu0 %v498
        %569 = vmatprep.subr.mxu0 0.0
        %570 = vmatpush1.msra.mxu0 %v497
        %571 = vmatprep.subr.mxu0 0.0
        %572 = vmatpush2.msra.mxu0 0.0
        %573 = vmatprep.subr.mxu0 0.0
        %574 = vmatpush2.msra.mxu0 0.0
        %575 = vmatprep.subr.mxu0 0.0
        %576 = vmatpush2.msra.mxu0 0.0
        %577 = vmatprep.subr.mxu0 0.0
        %578 = vmatpush2.msra.mxu0 0.0
        %579 = vmatprep.subr.mxu0 0.0
        %580 = vmatpush2.msra.mxu0 0.0
        %581 = vmatprep.subr.mxu0 0.0
        %582 = vmatpush2.msra.mxu0 0.0
        %583 = vmatprep.subr.mxu0 0.0
        %584 = vmatpush2.msra.mxu0 0.0
        %585 = vmatprep.subr.mxu0 0.0
        %586 = vmatpush2.msra.mxu0 0.0
        %587 = vmatprep.subr.mxu0 0.0
        %588 = vmatpush2.msra.mxu0 0.0
        %589 = vmatprep.subr.mxu0 0.0
        %590 = vmatpush2.msra.mxu0 0.0
        %591 = vmatprep.subr.mxu0 0.0
        %592 = vmatpush2.msra.mxu0 0.0
        %593 = vmatprep.subr.mxu0 0.0
        %594 = vmatpush2.msra.mxu0 0.0
        %595 = vmatprep.subr.mxu0 0.0
        %596 = vmatpush2.msra.mxu0 0.0
        %597 = vmatprep.subr.mxu0 0.0
        %598 = vmatpush2.msra.mxu0 0.0
        %599 = vmatprep.subr.mxu0 0.0
        %600 = vmatpush2.msra.mxu0 0.0
        %601 = vmatprep.subr.mxu0 0.0
        %602 = vmatpush2.msra.mxu0 0.0
        %603 = vmatprep.mubr.f32.mxu0 0.0
        %604 = vmatmul.mubr.f32.gmra.mxu0 %v516
        %v605 = vpop.f32.mrf.mxu0
        %v606 = vadd.f32 0.0, %v605
        %v607 = vpop.f32.mrf.mxu0
        %608 = vmatprep.mubr.f32.mxu0 0.0
        %609 = vmatmul.mubr.f32.gmra.mxu0 %v518
        %v610 = vpop.f32.mrf.mxu0
        %v611 = vadd.f32 0.0, %v610
        %v612 = vpop.f32.mrf.mxu0
        %613 = vmatprep.mubr.f32.mxu0 0.0
        %614 = vmatmul.mubr.f32.gmra.mxu0 %v520
        %v615 = vpop.f32.mrf.mxu0
        %v616 = vadd.f32 0.0, %v615
        %v617 = vpop.f32.mrf.mxu0
        %618 = vmatprep.mubr.f32.mxu0 0.0
        %619 = vmatmul.mubr.f32.gmra.mxu0 %v522
        %v620 = vpop.f32.mrf.mxu0
        %v621 = vadd.f32 0.0, %v620
        %v622 = vpop.f32.mrf.mxu0
        %623 = vmatprep.mubr.f32.mxu0 0.0
        %624 = vmatmul.mubr.f32.gmra.mxu0 %v524
        %v625 = vpop.f32.mrf.mxu0
        %v626 = vadd.f32 0.0, %v625
        %v627 = vpop.f32.mrf.mxu0
        %628 = vmatprep.mubr.f32.mxu0 0.0
        %629 = vmatmul.mubr.f32.gmra.mxu0 %v526
        %v630 = vpop.f32.mrf.mxu0
        %v631 = vadd.f32 0.0, %v630
        %v632 = vpop.f32.mrf.mxu0
        %633 = vmatprep.mubr.f32.mxu0 0.0
        %634 = vmatmul.mubr.f32.gmra.mxu0 %v528
        %v635 = vpop.f32.mrf.mxu0
        %v636 = vadd.f32 0.0, %v635
        %v637 = vpop.f32.mrf.mxu0
        %638 = vmatprep.mubr.f32.mxu0 0.0
        %639 = vmatmul.mubr.f32.gmra.mxu0 %v530
        %v640 = vpop.f32.mrf.mxu0
        %v641 = vadd.f32 0.0, %v640
        %v642 = vpop.f32.mrf.mxu0
        %643 = vdwg.mxu0
        %v644 = vadd.f32 %v488, %v606
        %v645 = vadd.f32 %v489, %v611
        %v646 = vadd.f32 %v490, %v616
        %v647 = vadd.f32 %v491, %v621
        %v648 = vadd.f32 %v492, %v626
        %v649 = vadd.f32 %v493, %v631
        %v650 = vadd.f32 %v494, %v636
        %v651 = vadd.f32 %v495, %v641
        %s652 = scalar_lea.vmem [#allocation2], 384
        %v653 = vld [vmem:[%s652] sm:$0xff]
        %v654 = vld [vmem:[%s652 + $0x8] sm:$0xff]
        %v655 = vld [vmem:[%s652 + $0x10] sm:$0xff]
        %v656 = vld [vmem:[%s652 + $0x18] sm:$0xff]
        %v657 = vld [vmem:[%s652 + $0x20] sm:$0xff]
        %v658 = vld [vmem:[%s652 + $0x28] sm:$0xff]
        %v659 = vld [vmem:[%s652 + $0x30] sm:$0xff]
        %v660 = vld [vmem:[%s652 + $0x38] sm:$0xff]
        %v661 = vld [vmem:[%s652 + $0x40] sm:$0xff]
        %v662 = vld [vmem:[%s652 + $0x48] sm:$0xff]
        %v663 = vld [vmem:[%s652 + $0x50] sm:$0xff]
        %v664 = vld [vmem:[%s652 + $0x58] sm:$0xff]
        %v665 = vld [vmem:[%s652 + $0x60] sm:$0xff]
        %v666 = vld [vmem:[%s652 + $0x68] sm:$0xff]
        %v667 = vld [vmem:[%s652 + $0x70] sm:$0xff]
        %v668 = vld [vmem:[%s652 + $0x78] sm:$0xff]
        %vm669 = vcmask 1044480
        %v670 = vrot.slane %v186, 3
        %v671 = vrot.slane %v187, 3
        %v672 = vsel %vm669, %v670, %v671
        %v673 = vrot.slane %v188, 3
        %v674 = vsel %vm669, %v671, %v673
        %v675 = vrot.slane %v189, 3
        %v676 = vsel %vm669, %v673, %v675
        %v677 = vrot.slane %v190, 3
        %v678 = vsel %vm669, %v675, %v677
        %v679 = vrot.slane %v191, 3
        %v680 = vsel %vm669, %v677, %v679
        %v681 = vrot.slane %v192, 3
        %v682 = vsel %vm669, %v679, %v681
        %v683 = vrot.slane %v193, 3
        %v684 = vsel %vm669, %v681, %v683
        %v685 = vrot.slane %v194, 3
        %v686 = vsel %vm669, %v683, %v685
        %695 = vmatprep.subr.mxu0 0.0
        %696 = vmatpush1.msra.mxu0 %v668
        %697 = vmatprep.subr.mxu0 0.0
        %698 = vmatpush1.msra.mxu0 %v667
        %699 = vmatprep.subr.mxu0 0.0
        %700 = vmatpush1.msra.mxu0 %v666
        %701 = vmatprep.subr.mxu0 0.0
        %702 = vmatpush1.msra.mxu0 %v665
        %703 = vmatprep.subr.mxu0 0.0
        %704 = vmatpush1.msra.mxu0 %v664
        %705 = vmatprep.subr.mxu0 0.0
        %706 = vmatpush1.msra.mxu0 %v663
        %707 = vmatprep.subr.mxu0 0.0
        %708 = vmatpush1.msra.mxu0 %v662
        %709 = vmatprep.subr.mxu0 0.0
        %710 = vmatpush1.msra.mxu0 %v661
        %711 = vmatprep.subr.mxu0 0.0
        %712 = vmatpush1.msra.mxu0 %v660
        %713 = vmatprep.subr.mxu0 0.0
        %714 = vmatpush1.msra.mxu0 %v659
        %715 = vmatprep.subr.mxu0 0.0
        %716 = vmatpush1.msra.mxu0 %v658
        %717 = vmatprep.subr.mxu0 0.0
        %718 = vmatpush1.msra.mxu0 %v657
        %719 = vmatprep.subr.mxu0 0.0
        %720 = vmatpush1.msra.mxu0 %v656
        %721 = vmatprep.subr.mxu0 0.0
        %722 = vmatpush1.msra.mxu0 %v655
        %723 = vmatprep.subr.mxu0 0.0
        %724 = vmatpush1.msra.mxu0 %v654
        %725 = vmatprep.subr.mxu0 0.0
        %726 = vmatpush1.msra.mxu0 %v653
        %727 = vmatprep.subr.mxu0 0.0
        %728 = vmatpush2.msra.mxu0 0.0
        %729 = vmatprep.subr.mxu0 0.0
        %730 = vmatpush2.msra.mxu0 0.0
        %731 = vmatprep.subr.mxu0 0.0
        %732 = vmatpush2.msra.mxu0 0.0
        %733 = vmatprep.subr.mxu0 0.0
        %734 = vmatpush2.msra.mxu0 0.0
        %735 = vmatprep.subr.mxu0 0.0
        %736 = vmatpush2.msra.mxu0 0.0
        %737 = vmatprep.subr.mxu0 0.0
        %738 = vmatpush2.msra.mxu0 0.0
        %739 = vmatprep.subr.mxu0 0.0
        %740 = vmatpush2.msra.mxu0 0.0
        %741 = vmatprep.subr.mxu0 0.0
        %742 = vmatpush2.msra.mxu0 0.0
        %743 = vmatprep.subr.mxu0 0.0
        %744 = vmatpush2.msra.mxu0 0.0
        %745 = vmatprep.subr.mxu0 0.0
        %746 = vmatpush2.msra.mxu0 0.0
        %747 = vmatprep.subr.mxu0 0.0
        %748 = vmatpush2.msra.mxu0 0.0
        %749 = vmatprep.subr.mxu0 0.0
        %750 = vmatpush2.msra.mxu0 0.0
        %751 = vmatprep.subr.mxu0 0.0
        %752 = vmatpush2.msra.mxu0 0.0
        %753 = vmatprep.subr.mxu0 0.0
        %754 = vmatpush2.msra.mxu0 0.0
        %755 = vmatprep.subr.mxu0 0.0
        %756 = vmatpush2.msra.mxu0 0.0
        %757 = vmatprep.subr.mxu0 0.0
        %758 = vmatpush2.msra.mxu0 0.0
        %759 = vmatprep.mubr.f32.mxu0 0.0
        %760 = vmatmul.mubr.f32.gmra.mxu0 %v672
        %v761 = vpop.f32.mrf.mxu0
        %v762 = vadd.f32 0.0, %v761
        %v763 = vpop.f32.mrf.mxu0
        %764 = vmatprep.mubr.f32.mxu0 0.0
        %765 = vmatmul.mubr.f32.gmra.mxu0 %v674
        %v766 = vpop.f32.mrf.mxu0
        %v767 = vadd.f32 0.0, %v766
        %v768 = vpop.f32.mrf.mxu0
        %769 = vmatprep.mubr.f32.mxu0 0.0
        %770 = vmatmul.mubr.f32.gmra.mxu0 %v676
        %v771 = vpop.f32.mrf.mxu0
        %v772 = vadd.f32 0.0, %v771
        %v773 = vpop.f32.mrf.mxu0
        %774 = vmatprep.mubr.f32.mxu0 0.0
        %775 = vmatmul.mubr.f32.gmra.mxu0 %v678
        %v776 = vpop.f32.mrf.mxu0
        %v777 = vadd.f32 0.0, %v776
        %v778 = vpop.f32.mrf.mxu0
        %779 = vmatprep.mubr.f32.mxu0 0.0
        %780 = vmatmul.mubr.f32.gmra.mxu0 %v680
        %v781 = vpop.f32.mrf.mxu0
        %v782 = vadd.f32 0.0, %v781
        %v783 = vpop.f32.mrf.mxu0
        %784 = vmatprep.mubr.f32.mxu0 0.0
        %785 = vmatmul.mubr.f32.gmra.mxu0 %v682
        %v786 = vpop.f32.mrf.mxu0
        %v787 = vadd.f32 0.0, %v786
        %v788 = vpop.f32.mrf.mxu0
        %789 = vmatprep.mubr.f32.mxu0 0.0
        %790 = vmatmul.mubr.f32.gmra.mxu0 %v684
        %v791 = vpop.f32.mrf.mxu0
        %v792 = vadd.f32 0.0, %v791
        %v793 = vpop.f32.mrf.mxu0
        %794 = vmatprep.mubr.f32.mxu0 0.0
        %795 = vmatmul.mubr.f32.gmra.mxu0 %v686
        %v796 = vpop.f32.mrf.mxu0
        %v797 = vadd.f32 0.0, %v796
        %v798 = vpop.f32.mrf.mxu0
        %799 = vdwg.mxu0
        %v800 = vadd.f32 %v644, %v762
        %v801 = vadd.f32 %v645, %v767
        %v802 = vadd.f32 %v646, %v772
        %v803 = vadd.f32 %v647, %v777
        %v804 = vadd.f32 %v648, %v782
        %v805 = vadd.f32 %v649, %v787
        %v806 = vadd.f32 %v650, %v792
        %v807 = vadd.f32 %v651, %v797
        %s808 = scalar_lea.vmem [#allocation2], 512
        %v809 = vld [vmem:[%s808] sm:$0xff]
        %v810 = vld [vmem:[%s808 + $0x8] sm:$0xff]
        %v811 = vld [vmem:[%s808 + $0x10] sm:$0xff]
        %v812 = vld [vmem:[%s808 + $0x18] sm:$0xff]
        %v813 = vld [vmem:[%s808 + $0x20] sm:$0xff]
        %v814 = vld [vmem:[%s808 + $0x28] sm:$0xff]
        %v815 = vld [vmem:[%s808 + $0x30] sm:$0xff]
        %v816 = vld [vmem:[%s808 + $0x38] sm:$0xff]
        %v817 = vld [vmem:[%s808 + $0x40] sm:$0xff]
        %v818 = vld [vmem:[%s808 + $0x48] sm:$0xff]
        %v819 = vld [vmem:[%s808 + $0x50] sm:$0xff]
        %v820 = vld [vmem:[%s808 + $0x58] sm:$0xff]
        %v821 = vld [vmem:[%s808 + $0x60] sm:$0xff]
        %v822 = vld [vmem:[%s808 + $0x68] sm:$0xff]
        %v823 = vld [vmem:[%s808 + $0x70] sm:$0xff]
        %v824 = vld [vmem:[%s808 + $0x78] sm:$0xff]
        %vm825 = vcmask 1043456
        %v826 = vrot.slane %v186, 4
        %v827 = vrot.slane %v187, 4
        %v828 = vsel %vm825, %v826, %v827
        %v829 = vrot.slane %v188, 4
        %v830 = vsel %vm825, %v827, %v829
        %v831 = vrot.slane %v189, 4
        %v832 = vsel %vm825, %v829, %v831
        %v833 = vrot.slane %v190, 4
        %v834 = vsel %vm825, %v831, %v833
        %v835 = vrot.slane %v191, 4
        %v836 = vsel %vm825, %v833, %v835
        %v837 = vrot.slane %v192, 4
        %v838 = vsel %vm825, %v835, %v837
        %v839 = vrot.slane %v193, 4
        %v840 = vsel %vm825, %v837, %v839
        %v841 = vrot.slane %v194, 4
        %v842 = vsel %vm825, %v839, %v841
        %851 = vmatprep.subr.mxu0 0.0
        %852 = vmatpush1.msra.mxu0 %v824
        %853 = vmatprep.subr.mxu0 0.0
        %854 = vmatpush1.msra.mxu0 %v823
        %855 = vmatprep.subr.mxu0 0.0
        %856 = vmatpush1.msra.mxu0 %v822
        %857 = vmatprep.subr.mxu0 0.0
        %858 = vmatpush1.msra.mxu0 %v821
        %859 = vmatprep.subr.mxu0 0.0
        %860 = vmatpush1.msra.mxu0 %v820
        %861 = vmatprep.subr.mxu0 0.0
        %862 = vmatpush1.msra.mxu0 %v819
        %863 = vmatprep.subr.mxu0 0.0
        %864 = vmatpush1.msra.mxu0 %v818
        %865 = vmatprep.subr.mxu0 0.0
        %866 = vmatpush1.msra.mxu0 %v817
        %867 = vmatprep.subr.mxu0 0.0
        %868 = vmatpush1.msra.mxu0 %v816
        %869 = vmatprep.subr.mxu0 0.0
        %870 = vmatpush1.msra.mxu0 %v815
        %871 = vmatprep.subr.mxu0 0.0
        %872 = vmatpush1.msra.mxu0 %v814
        %873 = vmatprep.subr.mxu0 0.0
        %874 = vmatpush1.msra.mxu0 %v813
        %875 = vmatprep.subr.mxu0 0.0
        %876 = vmatpush1.msra.mxu0 %v812
        %877 = vmatprep.subr.mxu0 0.0
        %878 = vmatpush1.msra.mxu0 %v811
        %879 = vmatprep.subr.mxu0 0.0
        %880 = vmatpush1.msra.mxu0 %v810
        %881 = vmatprep.subr.mxu0 0.0
        %882 = vmatpush1.msra.mxu0 %v809
        %883 = vmatprep.subr.mxu0 0.0
        %884 = vmatpush2.msra.mxu0 0.0
        %885 = vmatprep.subr.mxu0 0.0
        %886 = vmatpush2.msra.mxu0 0.0
        %887 = vmatprep.subr.mxu0 0.0
        %888 = vmatpush2.msra.mxu0 0.0
        %889 = vmatprep.subr.mxu0 0.0
        %890 = vmatpush2.msra.mxu0 0.0
        %891 = vmatprep.subr.mxu0 0.0
        %892 = vmatpush2.msra.mxu0 0.0
        %893 = vmatprep.subr.mxu0 0.0
        %894 = vmatpush2.msra.mxu0 0.0
        %895 = vmatprep.subr.mxu0 0.0
        %896 = vmatpush2.msra.mxu0 0.0
        %897 = vmatprep.subr.mxu0 0.0
        %898 = vmatpush2.msra.mxu0 0.0
        %899 = vmatprep.subr.mxu0 0.0
        %900 = vmatpush2.msra.mxu0 0.0
        %901 = vmatprep.subr.mxu0 0.0
        %902 = vmatpush2.msra.mxu0 0.0
        %903 = vmatprep.subr.mxu0 0.0
        %904 = vmatpush2.msra.mxu0 0.0
        %905 = vmatprep.subr.mxu0 0.0
        %906 = vmatpush2.msra.mxu0 0.0
        %907 = vmatprep.subr.mxu0 0.0
        %908 = vmatpush2.msra.mxu0 0.0
        %909 = vmatprep.subr.mxu0 0.0
        %910 = vmatpush2.msra.mxu0 0.0
        %911 = vmatprep.subr.mxu0 0.0
        %912 = vmatpush2.msra.mxu0 0.0
        %913 = vmatprep.subr.mxu0 0.0
        %914 = vmatpush2.msra.mxu0 0.0
        %915 = vmatprep.mubr.f32.mxu0 0.0
        %916 = vmatmul.mubr.f32.gmra.mxu0 %v828
        %v917 = vpop.f32.mrf.mxu0
        %v918 = vadd.f32 0.0, %v917
        %v919 = vpop.f32.mrf.mxu0
        %920 = vmatprep.mubr.f32.mxu0 0.0
        %921 = vmatmul.mubr.f32.gmra.mxu0 %v830
        %v922 = vpop.f32.mrf.mxu0
        %v923 = vadd.f32 0.0, %v922
        %v924 = vpop.f32.mrf.mxu0
        %925 = vmatprep.mubr.f32.mxu0 0.0
        %926 = vmatmul.mubr.f32.gmra.mxu0 %v832
        %v927 = vpop.f32.mrf.mxu0
        %v928 = vadd.f32 0.0, %v927
        %v929 = vpop.f32.mrf.mxu0
        %930 = vmatprep.mubr.f32.mxu0 0.0
        %931 = vmatmul.mubr.f32.gmra.mxu0 %v834
        %v932 = vpop.f32.mrf.mxu0
        %v933 = vadd.f32 0.0, %v932
        %v934 = vpop.f32.mrf.mxu0
        %935 = vmatprep.mubr.f32.mxu0 0.0
        %936 = vmatmul.mubr.f32.gmra.mxu0 %v836
        %v937 = vpop.f32.mrf.mxu0
        %v938 = vadd.f32 0.0, %v937
        %v939 = vpop.f32.mrf.mxu0
        %940 = vmatprep.mubr.f32.mxu0 0.0
        %941 = vmatmul.mubr.f32.gmra.mxu0 %v838
        %v942 = vpop.f32.mrf.mxu0
        %v943 = vadd.f32 0.0, %v942
        %v944 = vpop.f32.mrf.mxu0
        %945 = vmatprep.mubr.f32.mxu0 0.0
        %946 = vmatmul.mubr.f32.gmra.mxu0 %v840
        %v947 = vpop.f32.mrf.mxu0
        %v948 = vadd.f32 0.0, %v947
        %v949 = vpop.f32.mrf.mxu0
        %950 = vmatprep.mubr.f32.mxu0 0.0
        %951 = vmatmul.mubr.f32.gmra.mxu0 %v842
        %v952 = vpop.f32.mrf.mxu0
        %v953 = vadd.f32 0.0, %v952
        %v954 = vpop.f32.mrf.mxu0
        %955 = vdwg.mxu0
        %v956 = vadd.f32 %v800, %v918
        %v957 = vadd.f32 %v801, %v923
        %v958 = vadd.f32 %v802, %v928
        %v959 = vadd.f32 %v803, %v933
        %v960 = vadd.f32 %v804, %v938
        %v961 = vadd.f32 %v805, %v943
        %v962 = vadd.f32 %v806, %v948
        %v963 = vadd.f32 %v807, %v953
        %s964 = scalar_lea.vmem [#allocation2], 640
        %v965 = vld [vmem:[%s964] sm:$0xff]
        %v966 = vld [vmem:[%s964 + $0x8] sm:$0xff]
        %v967 = vld [vmem:[%s964 + $0x10] sm:$0xff]
        %v968 = vld [vmem:[%s964 + $0x18] sm:$0xff]
        %v969 = vld [vmem:[%s964 + $0x20] sm:$0xff]
        %v970 = vld [vmem:[%s964 + $0x28] sm:$0xff]
        %v971 = vld [vmem:[%s964 + $0x30] sm:$0xff]
        %v972 = vld [vmem:[%s964 + $0x38] sm:$0xff]
        %v973 = vld [vmem:[%s964 + $0x40] sm:$0xff]
        %v974 = vld [vmem:[%s964 + $0x48] sm:$0xff]
        %v975 = vld [vmem:[%s964 + $0x50] sm:$0xff]
        %v976 = vld [vmem:[%s964 + $0x58] sm:$0xff]
        %v977 = vld [vmem:[%s964 + $0x60] sm:$0xff]
        %v978 = vld [vmem:[%s964 + $0x68] sm:$0xff]
        %v979 = vld [vmem:[%s964 + $0x70] sm:$0xff]
        %v980 = vld [vmem:[%s964 + $0x78] sm:$0xff]
        %vm981 = vcmask 1042432
        %v982 = vrot.slane %v186, 5
        %v983 = vrot.slane %v187, 5
        %v984 = vsel %vm981, %v982, %v983
        %v985 = vrot.slane %v188, 5
        %v986 = vsel %vm981, %v983, %v985
        %v987 = vrot.slane %v189, 5
        %v988 = vsel %vm981, %v985, %v987
        %v989 = vrot.slane %v190, 5
        %v990 = vsel %vm981, %v987, %v989
        %v991 = vrot.slane %v191, 5
        %v992 = vsel %vm981, %v989, %v991
        %v993 = vrot.slane %v192, 5
        %v994 = vsel %vm981, %v991, %v993
        %v995 = vrot.slane %v193, 5
        %v996 = vsel %vm981, %v993, %v995
        %v997 = vrot.slane %v194, 5
        %v998 = vsel %vm981, %v995, %v997
        %1007 = vmatprep.subr.mxu0 0.0
        %1008 = vmatpush1.msra.mxu0 %v980
        %1009 = vmatprep.subr.mxu0 0.0
        %1010 = vmatpush1.msra.mxu0 %v979
        %1011 = vmatprep.subr.mxu0 0.0
        %1012 = vmatpush1.msra.mxu0 %v978
        %1013 = vmatprep.subr.mxu0 0.0
        %1014 = vmatpush1.msra.mxu0 %v977
        %1015 = vmatprep.subr.mxu0 0.0
        %1016 = vmatpush1.msra.mxu0 %v976
        %1017 = vmatprep.subr.mxu0 0.0
        %1018 = vmatpush1.msra.mxu0 %v975
        %1019 = vmatprep.subr.mxu0 0.0
        %1020 = vmatpush1.msra.mxu0 %v974
        %1021 = vmatprep.subr.mxu0 0.0
        %1022 = vmatpush1.msra.mxu0 %v973
        %1023 = vmatprep.subr.mxu0 0.0
        %1024 = vmatpush1.msra.mxu0 %v972
        %1025 = vmatprep.subr.mxu0 0.0
        %1026 = vmatpush1.msra.mxu0 %v971
        %1027 = vmatprep.subr.mxu0 0.0
        %1028 = vmatpush1.msra.mxu0 %v970
        %1029 = vmatprep.subr.mxu0 0.0
        %1030 = vmatpush1.msra.mxu0 %v969
        %1031 = vmatprep.subr.mxu0 0.0
        %1032 = vmatpush1.msra.mxu0 %v968
        %1033 = vmatprep.subr.mxu0 0.0
        %1034 = vmatpush1.msra.mxu0 %v967
        %1035 = vmatprep.subr.mxu0 0.0
        %1036 = vmatpush1.msra.mxu0 %v966
        %1037 = vmatprep.subr.mxu0 0.0
        %1038 = vmatpush1.msra.mxu0 %v965
        %1039 = vmatprep.subr.mxu0 0.0
        %1040 = vmatpush2.msra.mxu0 0.0
        %1041 = vmatprep.subr.mxu0 0.0
        %1042 = vmatpush2.msra.mxu0 0.0
        %1043 = vmatprep.subr.mxu0 0.0
        %1044 = vmatpush2.msra.mxu0 0.0
        %1045 = vmatprep.subr.mxu0 0.0
        %1046 = vmatpush2.msra.mxu0 0.0
        %1047 = vmatprep.subr.mxu0 0.0
        %1048 = vmatpush2.msra.mxu0 0.0
        %1049 = vmatprep.subr.mxu0 0.0
        %1050 = vmatpush2.msra.mxu0 0.0
        %1051 = vmatprep.subr.mxu0 0.0
        %1052 = vmatpush2.msra.mxu0 0.0
        %1053 = vmatprep.subr.mxu0 0.0
        %1054 = vmatpush2.msra.mxu0 0.0
        %1055 = vmatprep.subr.mxu0 0.0
        %1056 = vmatpush2.msra.mxu0 0.0
        %1057 = vmatprep.subr.mxu0 0.0
        %1058 = vmatpush2.msra.mxu0 0.0
        %1059 = vmatprep.subr.mxu0 0.0
        %1060 = vmatpush2.msra.mxu0 0.0
        %1061 = vmatprep.subr.mxu0 0.0
        %1062 = vmatpush2.msra.mxu0 0.0
        %1063 = vmatprep.subr.mxu0 0.0
        %1064 = vmatpush2.msra.mxu0 0.0
        %1065 = vmatprep.subr.mxu0 0.0
        %1066 = vmatpush2.msra.mxu0 0.0
        %1067 = vmatprep.subr.mxu0 0.0
        %1068 = vmatpush2.msra.mxu0 0.0
        %1069 = vmatprep.subr.mxu0 0.0
        %1070 = vmatpush2.msra.mxu0 0.0
        %1071 = vmatprep.mubr.f32.mxu0 0.0
        %1072 = vmatmul.mubr.f32.gmra.mxu0 %v984
        %v1073 = vpop.f32.mrf.mxu0
        %v1074 = vadd.f32 0.0, %v1073
        %v1075 = vpop.f32.mrf.mxu0
        %1076 = vmatprep.mubr.f32.mxu0 0.0
        %1077 = vmatmul.mubr.f32.gmra.mxu0 %v986
        %v1078 = vpop.f32.mrf.mxu0
        %v1079 = vadd.f32 0.0, %v1078
        %v1080 = vpop.f32.mrf.mxu0
        %1081 = vmatprep.mubr.f32.mxu0 0.0
        %1082 = vmatmul.mubr.f32.gmra.mxu0 %v988
        %v1083 = vpop.f32.mrf.mxu0
        %v1084 = vadd.f32 0.0, %v1083
        %v1085 = vpop.f32.mrf.mxu0
        %1086 = vmatprep.mubr.f32.mxu0 0.0
        %1087 = vmatmul.mubr.f32.gmra.mxu0 %v990
        %v1088 = vpop.f32.mrf.mxu0
        %v1089 = vadd.f32 0.0, %v1088
        %v1090 = vpop.f32.mrf.mxu0
        %1091 = vmatprep.mubr.f32.mxu0 0.0
        %1092 = vmatmul.mubr.f32.gmra.mxu0 %v992
        %v1093 = vpop.f32.mrf.mxu0
        %v1094 = vadd.f32 0.0, %v1093
        %v1095 = vpop.f32.mrf.mxu0
        %1096 = vmatprep.mubr.f32.mxu0 0.0
        %1097 = vmatmul.mubr.f32.gmra.mxu0 %v994
        %v1098 = vpop.f32.mrf.mxu0
        %v1099 = vadd.f32 0.0, %v1098
        %v1100 = vpop.f32.mrf.mxu0
        %1101 = vmatprep.mubr.f32.mxu0 0.0
        %1102 = vmatmul.mubr.f32.gmra.mxu0 %v996
        %v1103 = vpop.f32.mrf.mxu0
        %v1104 = vadd.f32 0.0, %v1103
        %v1105 = vpop.f32.mrf.mxu0
        %1106 = vmatprep.mubr.f32.mxu0 0.0
        %1107 = vmatmul.mubr.f32.gmra.mxu0 %v998
        %v1108 = vpop.f32.mrf.mxu0
        %v1109 = vadd.f32 0.0, %v1108
        %v1110 = vpop.f32.mrf.mxu0
        %1111 = vdwg.mxu0
        %v1112 = vadd.f32 %v956, %v1074
        %v1113 = vadd.f32 %v957, %v1079
        %v1114 = vadd.f32 %v958, %v1084
        %v1115 = vadd.f32 %v959, %v1089
        %v1116 = vadd.f32 %v960, %v1094
        %v1117 = vadd.f32 %v961, %v1099
        %v1118 = vadd.f32 %v962, %v1104
        %v1119 = vadd.f32 %v963, %v1109
        %s1120 = scalar_lea.vmem [#allocation2], 768
        %v1121 = vld [vmem:[%s1120] sm:$0xff]
        %v1122 = vld [vmem:[%s1120 + $0x8] sm:$0xff]
        %v1123 = vld [vmem:[%s1120 + $0x10] sm:$0xff]
        %v1124 = vld [vmem:[%s1120 + $0x18] sm:$0xff]
        %v1125 = vld [vmem:[%s1120 + $0x20] sm:$0xff]
        %v1126 = vld [vmem:[%s1120 + $0x28] sm:$0xff]
        %v1127 = vld [vmem:[%s1120 + $0x30] sm:$0xff]
        %v1128 = vld [vmem:[%s1120 + $0x38] sm:$0xff]
        %v1129 = vld [vmem:[%s1120 + $0x40] sm:$0xff]
        %v1130 = vld [vmem:[%s1120 + $0x48] sm:$0xff]
        %v1131 = vld [vmem:[%s1120 + $0x50] sm:$0xff]
        %v1132 = vld [vmem:[%s1120 + $0x58] sm:$0xff]
        %v1133 = vld [vmem:[%s1120 + $0x60] sm:$0xff]
        %v1134 = vld [vmem:[%s1120 + $0x68] sm:$0xff]
        %v1135 = vld [vmem:[%s1120 + $0x70] sm:$0xff]
        %v1136 = vld [vmem:[%s1120 + $0x78] sm:$0xff]
        %vm1137 = vcmask 1041408
        %v1138 = vrot.slane %v186, 6
        %v1139 = vrot.slane %v187, 6
        %v1140 = vsel %vm1137, %v1138, %v1139
        %v1141 = vrot.slane %v188, 6
        %v1142 = vsel %vm1137, %v1139, %v1141
        %v1143 = vrot.slane %v189, 6
        %v1144 = vsel %vm1137, %v1141, %v1143
        %v1145 = vrot.slane %v190, 6
        %v1146 = vsel %vm1137, %v1143, %v1145
        %v1147 = vrot.slane %v191, 6
        %v1148 = vsel %vm1137, %v1145, %v1147
        %v1149 = vrot.slane %v192, 6
        %v1150 = vsel %vm1137, %v1147, %v1149
        %v1151 = vrot.slane %v193, 6
        %v1152 = vsel %vm1137, %v1149, %v1151
        %v1153 = vrot.slane %v194, 6
        %v1154 = vsel %vm1137, %v1151, %v1153
        %1163 = vmatprep.subr.mxu0 0.0
        %1164 = vmatpush1.msra.mxu0 %v1136
        %1165 = vmatprep.subr.mxu0 0.0
        %1166 = vmatpush1.msra.mxu0 %v1135
        %1167 = vmatprep.subr.mxu0 0.0
        %1168 = vmatpush1.msra.mxu0 %v1134
        %1169 = vmatprep.subr.mxu0 0.0
        %1170 = vmatpush1.msra.mxu0 %v1133
        %1171 = vmatprep.subr.mxu0 0.0
        %1172 = vmatpush1.msra.mxu0 %v1132
        %1173 = vmatprep.subr.mxu0 0.0
        %1174 = vmatpush1.msra.mxu0 %v1131
        %1175 = vmatprep.subr.mxu0 0.0
        %1176 = vmatpush1.msra.mxu0 %v1130
        %1177 = vmatprep.subr.mxu0 0.0
        %1178 = vmatpush1.msra.mxu0 %v1129
        %1179 = vmatprep.subr.mxu0 0.0
        %1180 = vmatpush1.msra.mxu0 %v1128
        %1181 = vmatprep.subr.mxu0 0.0
        %1182 = vmatpush1.msra.mxu0 %v1127
        %1183 = vmatprep.subr.mxu0 0.0
        %1184 = vmatpush1.msra.mxu0 %v1126
        %1185 = vmatprep.subr.mxu0 0.0
        %1186 = vmatpush1.msra.mxu0 %v1125
        %1187 = vmatprep.subr.mxu0 0.0
        %1188 = vmatpush1.msra.mxu0 %v1124
        %1189 = vmatprep.subr.mxu0 0.0
        %1190 = vmatpush1.msra.mxu0 %v1123
        %1191 = vmatprep.subr.mxu0 0.0
        %1192 = vmatpush1.msra.mxu0 %v1122
        %1193 = vmatprep.subr.mxu0 0.0
        %1194 = vmatpush1.msra.mxu0 %v1121
        %1195 = vmatprep.subr.mxu0 0.0
        %1196 = vmatpush2.msra.mxu0 0.0
        %1197 = vmatprep.subr.mxu0 0.0
        %1198 = vmatpush2.msra.mxu0 0.0
        %1199 = vmatprep.subr.mxu0 0.0
        %1200 = vmatpush2.msra.mxu0 0.0
        %1201 = vmatprep.subr.mxu0 0.0
        %1202 = vmatpush2.msra.mxu0 0.0
        %1203 = vmatprep.subr.mxu0 0.0
        %1204 = vmatpush2.msra.mxu0 0.0
        %1205 = vmatprep.subr.mxu0 0.0
        %1206 = vmatpush2.msra.mxu0 0.0
        %1207 = vmatprep.subr.mxu0 0.0
        %1208 = vmatpush2.msra.mxu0 0.0
        %1209 = vmatprep.subr.mxu0 0.0
        %1210 = vmatpush2.msra.mxu0 0.0
        %1211 = vmatprep.subr.mxu0 0.0
        %1212 = vmatpush2.msra.mxu0 0.0
        %1213 = vmatprep.subr.mxu0 0.0
        %1214 = vmatpush2.msra.mxu0 0.0
        %1215 = vmatprep.subr.mxu0 0.0
        %1216 = vmatpush2.msra.mxu0 0.0
        %1217 = vmatprep.subr.mxu0 0.0
        %1218 = vmatpush2.msra.mxu0 0.0
        %1219 = vmatprep.subr.mxu0 0.0
        %1220 = vmatpush2.msra.mxu0 0.0
        %1221 = vmatprep.subr.mxu0 0.0
        %1222 = vmatpush2.msra.mxu0 0.0
        %1223 = vmatprep.subr.mxu0 0.0
        %1224 = vmatpush2.msra.mxu0 0.0
        %1225 = vmatprep.subr.mxu0 0.0
        %1226 = vmatpush2.msra.mxu0 0.0
        %1227 = vmatprep.mubr.f32.mxu0 0.0
        %1228 = vmatmul.mubr.f32.gmra.mxu0 %v1140
        %v1229 = vpop.f32.mrf.mxu0
        %v1230 = vadd.f32 0.0, %v1229
        %v1231 = vpop.f32.mrf.mxu0
        %1232 = vmatprep.mubr.f32.mxu0 0.0
        %1233 = vmatmul.mubr.f32.gmra.mxu0 %v1142
        %v1234 = vpop.f32.mrf.mxu0
        %v1235 = vadd.f32 0.0, %v1234
        %v1236 = vpop.f32.mrf.mxu0
        %1237 = vmatprep.mubr.f32.mxu0 0.0
        %1238 = vmatmul.mubr.f32.gmra.mxu0 %v1144
        %v1239 = vpop.f32.mrf.mxu0
        %v1240 = vadd.f32 0.0, %v1239
        %v1241 = vpop.f32.mrf.mxu0
        %1242 = vmatprep.mubr.f32.mxu0 0.0
        %1243 = vmatmul.mubr.f32.gmra.mxu0 %v1146
        %v1244 = vpop.f32.mrf.mxu0
        %v1245 = vadd.f32 0.0, %v1244
        %v1246 = vpop.f32.mrf.mxu0
        %1247 = vmatprep.mubr.f32.mxu0 0.0
        %1248 = vmatmul.mubr.f32.gmra.mxu0 %v1148
        %v1249 = vpop.f32.mrf.mxu0
        %v1250 = vadd.f32 0.0, %v1249
        %v1251 = vpop.f32.mrf.mxu0
        %1252 = vmatprep.mubr.f32.mxu0 0.0
        %1253 = vmatmul.mubr.f32.gmra.mxu0 %v1150
        %v1254 = vpop.f32.mrf.mxu0
        %v1255 = vadd.f32 0.0, %v1254
        %v1256 = vpop.f32.mrf.mxu0
        %1257 = vmatprep.mubr.f32.mxu0 0.0
        %1258 = vmatmul.mubr.f32.gmra.mxu0 %v1152
        %v1259 = vpop.f32.mrf.mxu0
        %v1260 = vadd.f32 0.0, %v1259
        %v1261 = vpop.f32.mrf.mxu0
        %1262 = vmatprep.mubr.f32.mxu0 0.0
        %1263 = vmatmul.mubr.f32.gmra.mxu0 %v1154
        %v1264 = vpop.f32.mrf.mxu0
        %v1265 = vadd.f32 0.0, %v1264
        %v1266 = vpop.f32.mrf.mxu0
        %1267 = vdwg.mxu0
        %v1268 = vadd.f32 %v1112, %v1230
        %v1269 = vadd.f32 %v1113, %v1235
        %v1270 = vadd.f32 %v1114, %v1240
        %v1271 = vadd.f32 %v1115, %v1245
        %v1272 = vadd.f32 %v1116, %v1250
        %v1273 = vadd.f32 %v1117, %v1255
        %v1274 = vadd.f32 %v1118, %v1260
        %v1275 = vadd.f32 %v1119, %v1265
        %1276 = vst [vmem:[%s185] sm:$0xff] %v1268
        %1277 = vst [vmem:[%s185 + $0x8] sm:$0xff] %v1269
        %1278 = vst [vmem:[%s185 + $0x10] sm:$0xff] %v1270
        %1279 = vst [vmem:[%s185 + $0x18] sm:$0xff] %v1271
        %1280 = vst [vmem:[%s185 + $0x20] sm:$0xff] %v1272
        %1281 = vst [vmem:[%s185 + $0x28] sm:$0xff] %v1273
        %1282 = vst [vmem:[%s185 + $0x30] sm:$0xff] %v1274
        %1283 = vst [vmem:[%s185 + $0x38] sm:$0xff] %v1275
        %p1284 = scmp.lt.s32.totalorder %s15, 1
        %s1285 = scalar_select %p1284, %s15, 1
        %s1286 = smul.addr %s1285, 8
        %s1287 = smul.addr %s1286, 8
        %s1288 = scalar_lea.vmem %s3, %s1287
        // Predicated region
        $region37: #{seanet_encoder_forward.6} parent=31 // pred_check
          %p1289 = pneg %p101
        $region38: #{seanet_encoder_forward.6} parent=31 // pred_check_branch
          %1291 = sbr.rel (%p1289) target = $region40
        $region39: #{seanet_encoder_forward.6} parent=31 // pred_region
          _
        $region40: #{seanet_encoder_forward.6} parent=31 // pred_fallthru
          _
      $region32: #{seanet_encoder_forward.6} parent=5 // pred_fallthru
        _
      %p1292 = scmp.le.s32.totalorder 2, %s10
      // Predicated region
      $region41: #{seanet_encoder_forward.6} parent=5 // pred_check
        %p1293 = pneg %p1292
      $region42: #{seanet_encoder_forward.6} parent=5 // pred_check_branch
        %1295 = sbr.rel (%p1293) target = $region44
      $region43: #{seanet_encoder_forward.6} parent=5 // pred_region
        %s1296 = ssub.s32 %s10, 2
        // Predicated region
        $region45: #{seanet_encoder_forward.6} parent=43 // pred_check
          %p1297 = pneg %p107
        $region46: #{seanet_encoder_forward.6} parent=43 // pred_check_branch
          %1299 = sbr.rel (%p1297) target = $region48
        $region47: #{seanet_encoder_forward.6} parent=43 // pred_region
          %p1300 = scmp.lt.s32.totalorder %s16, 1
          %s1301 = scalar_select %p1300, %s16, 1
          %s1302 = smul.addr %s1301, 8
          %s1303 = smul.addr %s1302, 8
          %s1304 = scalar_lea.vmem %s3, %s1303
        $region48: #{seanet_encoder_forward.6} parent=43 // pred_fallthru
          _
      $region44: #{seanet_encoder_forward.6} parent=5 // pred_fallthru
        _
    $region6: #{seanet_encoder_forward.6} parent=1 // loop_footer
      %s14 = sadd.s32 1, %s10
    $region7: #{seanet_encoder_forward.6} parent=1 // loop_footer_branch
      %9 = sbr.rel target = $region3
    $region8: #{seanet_encoder_forward.6} parent=1 // loop_exit
      _
    %1305 = vsyncpa [#allocation3], 1
    %s1306 = scalar_lea.sflag [#allocation3], 1
    %1307 = vsyncpa %s1306, 1

// kernel: seanet_encoder_forward.10
$region0: #{seanet_encoder_forward.10}
  #allocation0 [shape = 'u32[]', space=smem, size = 0x4, offset = 0x4, fixed_abs, tag = 'smem constant byte address 0x4 - core index']
  #allocation1 [shape = 'u32[144,128]{1,0:T(1,128)}', space=vmem, size = 0x12000, scoped, tag = 'internal scratch']
  %s0 = inlined_call_operand.vmem [shape: f32[2,9,512], index: 0, kind: input, shape index: {}]
  %s1 = inlined_call_operand.vmem [shape: f32[2,512,128], index: 1, kind: input, shape index: {}]
  %s2 = inlined_call_operand.vmem [shape: f32[1,128], index: 2, kind: input, shape index: {}]
  %s3 = inlined_call_operand.vmem [shape: f32[2,8,128], index: 3, kind: output, shape index: {}]
  %s4 = sld [smem:[#allocation0]]
  $region45: #{seanet_encoder_forward.10} parent=0
    _
  %s6 = ssub.s32 1, %s4
  %s7 = scalar_select 0, %s6, %s4
  loop: start=0, step=1, limit=4
  $region2: #{seanet_encoder_forward.10} parent=0 // loop_pre_header
    _
  $region3: #{seanet_encoder_forward.10} parent=0 // loop_header
    %s9 = sphi 0, %s13
    %p10 = scmp.ge.s32.totalorder %s9, 4
    %s19 = sphi 0, %s21
    %s22 = sphi 0, %s19
    %s23 = sphi 0, %s22
    %s39 = sphi 0, %s23
    %s43 = sphi 0, %s43
    %s45 = sphi 0, %s43
    %s46 = sphi 0, %s45
    %s60 = sphi 0, %s46
    %s64 = sphi 0, %s64
    %s66 = sphi 0, %s64
    %s67 = sphi 0, %s66
    %s81 = sphi 0, %s67
    %s87 = sphi 0, %s89
    %s90 = sphi 0, %s87
    %s91 = sphi 0, %s90
    %s107 = sphi 0, %s91
  $region4: #{seanet_encoder_forward.10} parent=0 // loop_header_branch
    %12 = sbr.rel (%p10) target = $region8
  $region5: #{seanet_encoder_forward.10} parent=0 // loop_body
    %s14 = ssub.s32 %s9, 1
    %s15 = ssub.s32 %s9, 2
    %s16 = sadd.s32 %s9, 1
    %s17 = ssub.s32 %s9, %s16
    %p18 = scmp.eq.s32.totalorder %s17, 0
    %s20 = sadd.s32 %s19, 1
    %s21 = scalar_select %p18, %s19, %s20
    %p24 = pneg %p18
    %p25 = scmp.eq.s32.totalorder %s9, 1
    %p26 = por %p24, %p25
    %p27 = scmp.ne.s32.totalorder %s19, %s22
    %p28 = scmp.eq.s32.totalorder %s9, 0
    %p29 = por %p27, %p28
    %p30 = scmp.ne.s32.totalorder %s19, %s22
    %p31 = scmp.eq.s32.totalorder %s14, 1
    %p32 = por %p30, %p31
    %p33 = scmp.ne.s32.totalorder %s22, %s23
    %p34 = scmp.eq.s32.totalorder %s14, 0
    %p35 = por %p33, %p34
    %p36 = scmp.ne.s32.totalorder %s22, %s23
    %p37 = scmp.eq.s32.totalorder %s15, 1
    %p38 = por %p36, %p37
    %p40 = scmp.ne.s32.totalorder %s23, %s39
    %p41 = scmp.eq.s32.totalorder %s15, 0
    %p42 = por %p40, %p41
    %s44 = sadd.s32 %s43, 1
    %p47 = scmp.eq.s32.totalorder %s9, 1
    %p48 = scmp.ne.s32.totalorder %s43, %s45
    %p49 = scmp.eq.s32.totalorder %s9, 0
    %p50 = por %p48, %p49
    %p51 = scmp.ne.s32.totalorder %s43, %s45
    %p52 = scmp.eq.s32.totalorder %s14, 1
    %p53 = por %p51, %p52
    %p54 = scmp.ne.s32.totalorder %s45, %s46
    %p55 = scmp.eq.s32.totalorder %s14, 0
    %p56 = por %p54, %p55
    %p57 = scmp.ne.s32.totalorder %s45, %s46
    %p58 = scmp.eq.s32.totalorder %s15, 1
    %p59 = por %p57, %p58
    %p61 = scmp.ne.s32.totalorder %s46, %s60
    %p62 = scmp.eq.s32.totalorder %s15, 0
    %p63 = por %p61, %p62
    %s65 = sadd.s32 %s64, 1
    %p68 = scmp.eq.s32.totalorder %s9, 1
    %p69 = scmp.ne.s32.totalorder %s64, %s66
    %p70 = scmp.eq.s32.totalorder %s9, 0
    %p71 = por %p69, %p70
    %p72 = scmp.ne.s32.totalorder %s64, %s66
    %p73 = scmp.eq.s32.totalorder %s14, 1
    %p74 = por %p72, %p73
    %p75 = scmp.ne.s32.totalorder %s66, %s67
    %p76 = scmp.eq.s32.totalorder %s14, 0
    %p77 = por %p75, %p76
    %p78 = scmp.ne.s32.totalorder %s66, %s67
    %p79 = scmp.eq.s32.totalorder %s15, 1
    %p80 = por %p78, %p79
    %p82 = scmp.ne.s32.totalorder %s67, %s81
    %p83 = scmp.eq.s32.totalorder %s15, 0
    %p84 = por %p82, %p83
    %s85 = ssub.s32 %s9, %s16
    %p86 = scmp.eq.s32.totalorder %s85, 0
    %s88 = sadd.s32 %s87, 1
    %s89 = scalar_select %p86, %s87, %s88
    %p92 = pneg %p86
    %p93 = scmp.eq.s32.totalorder %s9, 1
    %p94 = por %p92, %p93
    %p95 = scmp.ne.s32.totalorder %s87, %s90
    %p96 = scmp.eq.s32.totalorder %s9, 0
    %p97 = por %p95, %p96
    %p98 = scmp.ne.s32.totalorder %s87, %s90
    %p99 = scmp.eq.s32.totalorder %s14, 1
    %p100 = por %p98, %p99
    %p101 = scmp.ne.s32.totalorder %s90, %s91
    %p102 = scmp.eq.s32.totalorder %s14, 0
    %p103 = por %p101, %p102
    %p104 = scmp.ne.s32.totalorder %s90, %s91
    %p105 = scmp.eq.s32.totalorder %s15, 1
    %p106 = por %p104, %p105
    %p108 = scmp.ne.s32.totalorder %s91, %s107
    %p109 = scmp.eq.s32.totalorder %s15, 0
    %p110 = por %p108, %p109
    %p111 = scmp.le.s32.totalorder 1, %s9
    %p112 = scmp.lt.s32.totalorder %s9, 3
    %p113 = pnand %p111, %p112
    %p114 = pneg %p113
    // Predicated region
    $region9: #{seanet_encoder_forward.10} parent=5 // pred_check
      _
    $region10: #{seanet_encoder_forward.10} parent=5 // pred_check_branch
      %116 = sbr.rel (%p113) target = $region12
    $region11: #{seanet_encoder_forward.10} parent=5 // pred_region
      %s117 = ssub.s32 %s9, 1
      // Predicated region
      $region13: #{seanet_encoder_forward.10} parent=11 // pred_check
        %p118 = pneg %p56
      $region14: #{seanet_encoder_forward.10} parent=11 // pred_check_branch
        %120 = sbr.rel (%p118) target = $region16
      $region15: #{seanet_encoder_forward.10} parent=11 // pred_region
        _
      $region16: #{seanet_encoder_forward.10} parent=11 // pred_fallthru
        _
      // Predicated region
      $region17: #{seanet_encoder_forward.10} parent=11 // pred_check
        %p121 = pneg %p77
      $region18: #{seanet_encoder_forward.10} parent=11 // pred_check_branch
        %123 = sbr.rel (%p121) target = $region20
      $region19: #{seanet_encoder_forward.10} parent=11 // pred_region
        _
      $region20: #{seanet_encoder_forward.10} parent=11 // pred_fallthru
        _
    $region12: #{seanet_encoder_forward.10} parent=5 // pred_fallthru
      _
    %p124 = scmp.lt.s32.totalorder %s9, 2
    // Predicated region
    $region21: #{seanet_encoder_forward.10} parent=5 // pred_check
      %p125 = pneg %p124
    $region22: #{seanet_encoder_forward.10} parent=5 // pred_check_branch
      %127 = sbr.rel (%p125) target = $region24
    $region23: #{seanet_encoder_forward.10} parent=5 // pred_region
      // Predicated region
      $region25: #{seanet_encoder_forward.10} parent=23 // pred_check
        %p128 = pneg %p29
      $region26: #{seanet_encoder_forward.10} parent=23 // pred_check_branch
        %130 = sbr.rel (%p128) target = $region28
      $region27: #{seanet_encoder_forward.10} parent=23 // pred_region
        %p131 = scmp.lt.s32.totalorder %s9, 1
        %s132 = scalar_select %p131, %s9, 1
        %s133 = smul.addr %s132, 8
        %s134 = smul.addr %s133, 8
        %s135 = scalar_lea.vmem %s0, %s134
      $region28: #{seanet_encoder_forward.10} parent=23 // pred_fallthru
        _
    $region24: #{seanet_encoder_forward.10} parent=5 // pred_fallthru
      _
    %p136 = scmp.le.s32.totalorder 1, %s9
    %p137 = scmp.lt.s32.totalorder %s9, 3
    %p138 = pnand %p136, %p137
    %p139 = pneg %p138
    // Predicated region
    $region29: #{seanet_encoder_forward.10} parent=5 // pred_check
      _
    $region30: #{seanet_encoder_forward.10} parent=5 // pred_check_branch
      %141 = sbr.rel (%p138) target = $region32
    $region31: #{seanet_encoder_forward.10} parent=5 // pred_region
      %s142 = ssub.s32 %s9, 1
      %p143 = scmp.lt.s32.totalorder %s14, 1
      %s144 = scalar_select %p143, %s14, 1
      %s145 = smul.addr %s144, 8
      %s146 = smul.addr %s145, 8
      %s147 = scalar_lea.vmem %s0, %s146
      %p148 = pneg %p35
      %p149 = pneg %p32
      %p150 = pneg %p56
      %p151 = pneg %p53
      %p152 = pneg %p77
      %p153 = pneg %p74
      %p154 = pneg %p103
      %p155 = pneg %p100
      %p156 = scmp.lt.s32.totalorder %s14, 1
      %s157 = scalar_select %p156, %s14, 1
      %s158 = smul.addr %s157, 8
      %s159 = scalar_lea.vmem %s3, %s158
      %p160 = scmp.lt.s32.totalorder %s14, 1
      %s161 = scalar_select %p160, %s14, 1
      %s162 = smul.addr %s161, 8
      %s163 = smul.addr %s162, 8
      %s164 = scalar_lea.vmem %s0, %s163
      %p165 = scmp.lt.s32.totalorder %s14, 1
      %s166 = scalar_select %p165, %s14, 1
      %s167 = smul.addr %s166, 8
      %s168 = scalar_lea.vmem %s3, %s167
      %v169 = vld [vmem:[%s164] sm:$0xff]
      %v170 = vld [vmem:[%s164 + $0x8] sm:$0xff]
      %v171 = vld [vmem:[%s164 + $0x10] sm:$0xff]
      %v172 = vld [vmem:[%s164 + $0x18] sm:$0xff]
      %v173 = vld [vmem:[%s164 + $0x20] sm:$0x1]
      %v174 = vld [vmem:[%s164 + $0x28] sm:$0x1]
      %v175 = vld [vmem:[%s164 + $0x30] sm:$0x1]
      %v176 = vld [vmem:[%s164 + $0x38] sm:$0x1]
      %vm177 = vcmp.gt.f32.partialorder %v169, 0.0
      %vm178 = vcmp.gt.f32.partialorder %v170, 0.0
      %vm179 = vcmp.gt.f32.partialorder %v171, 0.0
      %vm180 = vcmp.gt.f32.partialorder %v172, 0.0
      %vm181 = vcmp.gt.f32.partialorder %v173, 0.0
      %vm182 = vcmp.gt.f32.partialorder %v174, 0.0
      %vm183 = vcmp.gt.f32.partialorder %v175, 0.0
      %vm184 = vcmp.gt.f32.partialorder %v176, 0.0
      %v185 = vmin.f32 %v169, 0.0
      %v186 = vmin.f32 %v170, 0.0
      %v187 = vmin.f32 %v171, 0.0
      %v188 = vmin.f32 %v172, 0.0
      %v189 = vmin.f32 %v173, 0.0
      %v190 = vmin.f32 %v174, 0.0
      %v191 = vmin.f32 %v175, 0.0
      %v192 = vmin.f32 %v176, 0.0
      %v193 = vmul.f32 %v185, 1.442695
      %v194 = vpow.pop %v193
      %v195 = vmul.f32 %v186, 1.442695
      %v196 = vpow.pop %v195
      %v197 = vmul.f32 %v187, 1.442695
      %v198 = vpow.pop %v197
      %v199 = vmul.f32 %v188, 1.442695
      %v200 = vpow.pop %v199
      %v201 = vmul.f32 %v189, 1.442695
      %v202 = vpow.pop %v201
      %v203 = vmul.f32 %v190, 1.442695
      %v204 = vpow.pop %v203
      %v205 = vmul.f32 %v191, 1.442695
      %v206 = vpow.pop %v205
      %v207 = vmul.f32 %v192, 1.442695
      %v208 = vpow.pop %v207
      %v209 = vsub.f32 %v194, 1.0
      %v210 = vsub.f32 %v196, 1.0
      %v211 = vsub.f32 %v198, 1.0
      %v212 = vsub.f32 %v200, 1.0
      %v213 = vsub.f32 %v202, 1.0
      %v214 = vsub.f32 %v204, 1.0
      %v215 = vsub.f32 %v206, 1.0
      %v216 = vsub.f32 %v208, 1.0
      %v217 = vsel %vm177, %v169, %v209
      %v218 = vsel %vm178, %v170, %v210
      %v219 = vsel %vm179, %v171, %v211
      %v220 = vsel %vm180, %v172, %v212
      %v221 = vsel %vm181, %v173, %v213
      %v222 = vsel %vm182, %v174, %v214
      %v223 = vsel %vm183, %v175, %v215
      %v224 = vsel %vm184, %v176, %v216
      %v225 = vld [vmem:[%s2] sm:$0x1]
      %v227 = vlaneseq
      %v228 = vshrl.u32 %v227, 7
      %v229 = vsub.s32 0, %v228
      %v230 = vrot.slane %v225, %v229
      %v232 = vld [vmem:[%s1] sm:$0xff]
      %v233 = vld [vmem:[%s1 + $0x8] sm:$0xff]
      %v234 = vld [vmem:[%s1 + $0x10] sm:$0xff]
      %v235 = vld [vmem:[%s1 + $0x18] sm:$0xff]
      %v236 = vld [vmem:[%s1 + $0x20] sm:$0xff]
      %v237 = vld [vmem:[%s1 + $0x28] sm:$0xff]
      %v238 = vld [vmem:[%s1 + $0x30] sm:$0xff]
      %v239 = vld [vmem:[%s1 + $0x38] sm:$0xff]
      %v240 = vld [vmem:[%s1 + $0x40] sm:$0xff]
      %v241 = vld [vmem:[%s1 + $0x48] sm:$0xff]
      %v242 = vld [vmem:[%s1 + $0x50] sm:$0xff]
      %v243 = vld [vmem:[%s1 + $0x58] sm:$0xff]
      %v244 = vld [vmem:[%s1 + $0x60] sm:$0xff]
      %v245 = vld [vmem:[%s1 + $0x68] sm:$0xff]
      %v246 = vld [vmem:[%s1 + $0x70] sm:$0xff]
      %v247 = vld [vmem:[%s1 + $0x78] sm:$0xff]
      %v248 = vld [vmem:[%s1 + $0x80] sm:$0xff]
      %v249 = vld [vmem:[%s1 + $0x88] sm:$0xff]
      %v250 = vld [vmem:[%s1 + $0x90] sm:$0xff]
      %v251 = vld [vmem:[%s1 + $0x98] sm:$0xff]
      %v252 = vld [vmem:[%s1 + $0xa0] sm:$0xff]
      %v253 = vld [vmem:[%s1 + $0xa8] sm:$0xff]
      %v254 = vld [vmem:[%s1 + $0xb0] sm:$0xff]
      %v255 = vld [vmem:[%s1 + $0xb8] sm:$0xff]
      %v256 = vld [vmem:[%s1 + $0xc0] sm:$0xff]
      %v257 = vld [vmem:[%s1 + $0xc8] sm:$0xff]
      %v258 = vld [vmem:[%s1 + $0xd0] sm:$0xff]
      %v259 = vld [vmem:[%s1 + $0xd8] sm:$0xff]
      %v260 = vld [vmem:[%s1 + $0xe0] sm:$0xff]
      %v261 = vld [vmem:[%s1 + $0xe8] sm:$0xff]
      %v262 = vld [vmem:[%s1 + $0xf0] sm:$0xff]
      %v263 = vld [vmem:[%s1 + $0xf8] sm:$0xff]
      %v264 = vld [vmem:[%s1 + $0x100] sm:$0xff]
      %v265 = vld [vmem:[%s1 + $0x108] sm:$0xff]
      %v266 = vld [vmem:[%s1 + $0x110] sm:$0xff]
      %v267 = vld [vmem:[%s1 + $0x118] sm:$0xff]
      %v268 = vld [vmem:[%s1 + $0x120] sm:$0xff]
      %v269 = vld [vmem:[%s1 + $0x128] sm:$0xff]
      %v270 = vld [vmem:[%s1 + $0x130] sm:$0xff]
      %v271 = vld [vmem:[%s1 + $0x138] sm:$0xff]
      %v272 = vld [vmem:[%s1 + $0x140] sm:$0xff]
      %v273 = vld [vmem:[%s1 + $0x148] sm:$0xff]
      %v274 = vld [vmem:[%s1 + $0x150] sm:$0xff]
      %v275 = vld [vmem:[%s1 + $0x158] sm:$0xff]
      %v276 = vld [vmem:[%s1 + $0x160] sm:$0xff]
      %v277 = vld [vmem:[%s1 + $0x168] sm:$0xff]
      %v278 = vld [vmem:[%s1 + $0x170] sm:$0xff]
      %v279 = vld [vmem:[%s1 + $0x178] sm:$0xff]
      %v280 = vld [vmem:[%s1 + $0x180] sm:$0xff]
      %v281 = vld [vmem:[%s1 + $0x188] sm:$0xff]
      %v282 = vld [vmem:[%s1 + $0x190] sm:$0xff]
      %v283 = vld [vmem:[%s1 + $0x198] sm:$0xff]
      %v284 = vld [vmem:[%s1 + $0x1a0] sm:$0xff]
      %v285 = vld [vmem:[%s1 + $0x1a8] sm:$0xff]
      %v286 = vld [vmem:[%s1 + $0x1b0] sm:$0xff]
      %v287 = vld [vmem:[%s1 + $0x1b8] sm:$0xff]
      %v288 = vld [vmem:[%s1 + $0x1c0] sm:$0xff]
      %v289 = vld [vmem:[%s1 + $0x1c8] sm:$0xff]
      %v290 = vld [vmem:[%s1 + $0x1d0] sm:$0xff]
      %v291 = vld [vmem:[%s1 + $0x1d8] sm:$0xff]
      %v292 = vld [vmem:[%s1 + $0x1e0] sm:$0xff]
      %v293 = vld [vmem:[%s1 + $0x1e8] sm:$0xff]
      %v294 = vld [vmem:[%s1 + $0x1f0] sm:$0xff]
      %v295 = vld [vmem:[%s1 + $0x1f8] sm:$0xff]
      %296 = vmatprep.subr.mxu0 0.0
      %297 = vmatpush1.msra.mxu0 %v247
      %298 = vmatprep.subr.mxu0 0.0
      %299 = vmatpush1.msra.mxu0 %v246
      %300 = vmatprep.subr.mxu0 0.0
      %301 = vmatpush1.msra.mxu0 %v245
      %302 = vmatprep.subr.mxu0 0.0
      %303 = vmatpush1.msra.mxu0 %v244
      %304 = vmatprep.subr.mxu0 0.0
      %305 = vmatpush1.msra.mxu0 %v243
      %306 = vmatprep.subr.mxu0 0.0
      %307 = vmatpush1.msra.mxu0 %v242
      %308 = vmatprep.subr.mxu0 0.0
      %309 = vmatpush1.msra.mxu0 %v241
      %310 = vmatprep.subr.mxu0 0.0
      %311 = vmatpush1.msra.mxu0 %v240
      %312 = vmatprep.subr.mxu0 0.0
      %313 = vmatpush1.msra.mxu0 %v239
      %314 = vmatprep.subr.mxu0 0.0
      %315 = vmatpush1.msra.mxu0 %v238
      %316 = vmatprep.subr.mxu0 0.0
      %317 = vmatpush1.msra.mxu0 %v237
      %318 = vmatprep.subr.mxu0 0.0
      %319 = vmatpush1.msra.mxu0 %v236
      %320 = vmatprep.subr.mxu0 0.0
      %321 = vmatpush1.msra.mxu0 %v235
      %322 = vmatprep.subr.mxu0 0.0
      %323 = vmatpush1.msra.mxu0 %v234
      %324 = vmatprep.subr.mxu0 0.0
      %325 = vmatpush1.msra.mxu0 %v233
      %326 = vmatprep.subr.mxu0 0.0
      %327 = vmatpush1.msra.mxu0 %v232
      %328 = vmatprep.subr.mxu0 0.0
      %329 = vmatpush2.msra.mxu0 %v263
      %330 = vmatprep.subr.mxu0 0.0
      %331 = vmatpush2.msra.mxu0 %v262
      %332 = vmatprep.subr.mxu0 0.0
      %333 = vmatpush2.msra.mxu0 %v261
      %334 = vmatprep.subr.mxu0 0.0
      %335 = vmatpush2.msra.mxu0 %v260
      %336 = vmatprep.subr.mxu0 0.0
      %337 = vmatpush2.msra.mxu0 %v259
      %338 = vmatprep.subr.mxu0 0.0
      %339 = vmatpush2.msra.mxu0 %v258
      %340 = vmatprep.subr.mxu0 0.0
      %341 = vmatpush2.msra.mxu0 %v257
      %342 = vmatprep.subr.mxu0 0.0
      %343 = vmatpush2.msra.mxu0 %v256
      %344 = vmatprep.subr.mxu0 0.0
      %345 = vmatpush2.msra.mxu0 %v255
      %346 = vmatprep.subr.mxu0 0.0
      %347 = vmatpush2.msra.mxu0 %v254
      %348 = vmatprep.subr.mxu0 0.0
      %349 = vmatpush2.msra.mxu0 %v253
      %350 = vmatprep.subr.mxu0 0.0
      %351 = vmatpush2.msra.mxu0 %v252
      %352 = vmatprep.subr.mxu0 0.0
      %353 = vmatpush2.msra.mxu0 %v251
      %354 = vmatprep.subr.mxu0 0.0
      %355 = vmatpush2.msra.mxu0 %v250
      %356 = vmatprep.subr.mxu0 0.0
      %357 = vmatpush2.msra.mxu0 %v249
      %358 = vmatprep.subr.mxu0 0.0
      %359 = vmatpush2.msra.mxu0 %v248
      %360 = vmatprep.mubr.f32.mxu0 %v218
      %361 = vmatmul.mubr.f32.gmra.mxu0 %v217
      %v362 = vpop.f32.mrf.mxu0
      %v363 = vadd.f32 0.0, %v362
      %v364 = vpop.f32.mrf.mxu0
      %365 = vdwg.mxu0
      %366 = vmatprep.subr.mxu0 0.0
      %367 = vmatpush1.msra.mxu0 %v279
      %368 = vmatprep.subr.mxu0 0.0
      %369 = vmatpush1.msra.mxu0 %v278
      %370 = vmatprep.subr.mxu0 0.0
      %371 = vmatpush1.msra.mxu0 %v277
      %372 = vmatprep.subr.mxu0 0.0
      %373 = vmatpush1.msra.mxu0 %v276
      %374 = vmatprep.subr.mxu0 0.0
      %375 = vmatpush1.msra.mxu0 %v275
      %376 = vmatprep.subr.mxu0 0.0
      %377 = vmatpush1.msra.mxu0 %v274
      %378 = vmatprep.subr.mxu0 0.0
      %379 = vmatpush1.msra.mxu0 %v273
      %380 = vmatprep.subr.mxu0 0.0
      %381 = vmatpush1.msra.mxu0 %v272
      %382 = vmatprep.subr.mxu0 0.0
      %383 = vmatpush1.msra.mxu0 %v271
      %384 = vmatprep.subr.mxu0 0.0
      %385 = vmatpush1.msra.mxu0 %v270
      %386 = vmatprep.subr.mxu0 0.0
      %387 = vmatpush1.msra.mxu0 %v269
      %388 = vmatprep.subr.mxu0 0.0
      %389 = vmatpush1.msra.mxu0 %v268
      %390 = vmatprep.subr.mxu0 0.0
      %391 = vmatpush1.msra.mxu0 %v267
      %392 = vmatprep.subr.mxu0 0.0
      %393 = vmatpush1.msra.mxu0 %v266
      %394 = vmatprep.subr.mxu0 0.0
      %395 = vmatpush1.msra.mxu0 %v265
      %396 = vmatprep.subr.mxu0 0.0
      %397 = vmatpush1.msra.mxu0 %v264
      %398 = vmatprep.subr.mxu0 0.0
      %399 = vmatpush2.msra.mxu0 %v295
      %400 = vmatprep.subr.mxu0 0.0
      %401 = vmatpush2.msra.mxu0 %v294
      %402 = vmatprep.subr.mxu0 0.0
      %403 = vmatpush2.msra.mxu0 %v293
      %404 = vmatprep.subr.mxu0 0.0
      %405 = vmatpush2.msra.mxu0 %v292
      %406 = vmatprep.subr.mxu0 0.0
      %407 = vmatpush2.msra.mxu0 %v291
      %408 = vmatprep.subr.mxu0 0.0
      %409 = vmatpush2.msra.mxu0 %v290
      %410 = vmatprep.subr.mxu0 0.0
      %411 = vmatpush2.msra.mxu0 %v289
      %412 = vmatprep.subr.mxu0 0.0
      %413 = vmatpush2.msra.mxu0 %v288
      %414 = vmatprep.subr.mxu0 0.0
      %415 = vmatpush2.msra.mxu0 %v287
      %416 = vmatprep.subr.mxu0 0.0
      %417 = vmatpush2.msra.mxu0 %v286
      %418 = vmatprep.subr.mxu0 0.0
      %419 = vmatpush2.msra.mxu0 %v285
      %420 = vmatprep.subr.mxu0 0.0
      %421 = vmatpush2.msra.mxu0 %v284
      %422 = vmatprep.subr.mxu0 0.0
      %423 = vmatpush2.msra.mxu0 %v283
      %424 = vmatprep.subr.mxu0 0.0
      %425 = vmatpush2.msra.mxu0 %v282
      %426 = vmatprep.subr.mxu0 0.0
      %427 = vmatpush2.msra.mxu0 %v281
      %428 = vmatprep.subr.mxu0 0.0
      %429 = vmatpush2.msra.mxu0 %v280
      %430 = vmatprep.mubr.f32.mxu0 %v220
      %431 = vmatmul.mubr.f32.gmra.mxu0 %v219
      %v432 = vpop.f32.mrf.mxu0
      %v433 = vadd.f32 %v363, %v432
      %v434 = vpop.f32.mrf.mxu0
      %435 = vdwg.mxu0
      %v436 = vadd.f32 %v230, %v433
      %s437 = scalar_lea.vmem %s1, 512
      %v438 = vld [vmem:[%s437] sm:$0xff]
      %v439 = vld [vmem:[%s437 + $0x8] sm:$0xff]
      %v440 = vld [vmem:[%s437 + $0x10] sm:$0xff]
      %v441 = vld [vmem:[%s437 + $0x18] sm:$0xff]
      %v442 = vld [vmem:[%s437 + $0x20] sm:$0xff]
      %v443 = vld [vmem:[%s437 + $0x28] sm:$0xff]
      %v444 = vld [vmem:[%s437 + $0x30] sm:$0xff]
      %v445 = vld [vmem:[%s437 + $0x38] sm:$0xff]
      %v446 = vld [vmem:[%s437 + $0x40] sm:$0xff]
      %v447 = vld [vmem:[%s437 + $0x48] sm:$0xff]
      %v448 = vld [vmem:[%s437 + $0x50] sm:$0xff]
      %v449 = vld [vmem:[%s437 + $0x58] sm:$0xff]
      %v450 = vld [vmem:[%s437 + $0x60] sm:$0xff]
      %v451 = vld [vmem:[%s437 + $0x68] sm:$0xff]
      %v452 = vld [vmem:[%s437 + $0x70] sm:$0xff]
      %v453 = vld [vmem:[%s437 + $0x78] sm:$0xff]
      %v454 = vld [vmem:[%s437 + $0x80] sm:$0xff]
      %v455 = vld [vmem:[%s437 + $0x88] sm:$0xff]
      %v456 = vld [vmem:[%s437 + $0x90] sm:$0xff]
      %v457 = vld [vmem:[%s437 + $0x98] sm:$0xff]
      %v458 = vld [vmem:[%s437 + $0xa0] sm:$0xff]
      %v459 = vld [vmem:[%s437 + $0xa8] sm:$0xff]
      %v460 = vld [vmem:[%s437 + $0xb0] sm:$0xff]
      %v461 = vld [vmem:[%s437 + $0xb8] sm:$0xff]
      %v462 = vld [vmem:[%s437 + $0xc0] sm:$0xff]
      %v463 = vld [vmem:[%s437 + $0xc8] sm:$0xff]
      %v464 = vld [vmem:[%s437 + $0xd0] sm:$0xff]
      %v465 = vld [vmem:[%s437 + $0xd8] sm:$0xff]
      %v466 = vld [vmem:[%s437 + $0xe0] sm:$0xff]
      %v467 = vld [vmem:[%s437 + $0xe8] sm:$0xff]
      %v468 = vld [vmem:[%s437 + $0xf0] sm:$0xff]
      %v469 = vld [vmem:[%s437 + $0xf8] sm:$0xff]
      %v470 = vld [vmem:[%s437 + $0x100] sm:$0xff]
      %v471 = vld [vmem:[%s437 + $0x108] sm:$0xff]
      %v472 = vld [vmem:[%s437 + $0x110] sm:$0xff]
      %v473 = vld [vmem:[%s437 + $0x118] sm:$0xff]
      %v474 = vld [vmem:[%s437 + $0x120] sm:$0xff]
      %v475 = vld [vmem:[%s437 + $0x128] sm:$0xff]
      %v476 = vld [vmem:[%s437 + $0x130] sm:$0xff]
      %v477 = vld [vmem:[%s437 + $0x138] sm:$0xff]
      %v478 = vld [vmem:[%s437 + $0x140] sm:$0xff]
      %v479 = vld [vmem:[%s437 + $0x148] sm:$0xff]
      %v480 = vld [vmem:[%s437 + $0x150] sm:$0xff]
      %v481 = vld [vmem:[%s437 + $0x158] sm:$0xff]
      %v482 = vld [vmem:[%s437 + $0x160] sm:$0xff]
      %v483 = vld [vmem:[%s437 + $0x168] sm:$0xff]
      %v484 = vld [vmem:[%s437 + $0x170] sm:$0xff]
      %v485 = vld [vmem:[%s437 + $0x178] sm:$0xff]
      %v486 = vld [vmem:[%s437 + $0x180] sm:$0xff]
      %v487 = vld [vmem:[%s437 + $0x188] sm:$0xff]
      %v488 = vld [vmem:[%s437 + $0x190] sm:$0xff]
      %v489 = vld [vmem:[%s437 + $0x198] sm:$0xff]
      %v490 = vld [vmem:[%s437 + $0x1a0] sm:$0xff]
      %v491 = vld [vmem:[%s437 + $0x1a8] sm:$0xff]
      %v492 = vld [vmem:[%s437 + $0x1b0] sm:$0xff]
      %v493 = vld [vmem:[%s437 + $0x1b8] sm:$0xff]
      %v494 = vld [vmem:[%s437 + $0x1c0] sm:$0xff]
      %v495 = vld [vmem:[%s437 + $0x1c8] sm:$0xff]
      %v496 = vld [vmem:[%s437 + $0x1d0] sm:$0xff]
      %v497 = vld [vmem:[%s437 + $0x1d8] sm:$0xff]
      %v498 = vld [vmem:[%s437 + $0x1e0] sm:$0xff]
      %v499 = vld [vmem:[%s437 + $0x1e8] sm:$0xff]
      %v500 = vld [vmem:[%s437 + $0x1f0] sm:$0xff]
      %v501 = vld [vmem:[%s437 + $0x1f8] sm:$0xff]
      %vm510 = vcmask 1046528
      %v511 = vrot.slane %v217, 1
      %v512 = vrot.slane %v221, 1
      %v513 = vsel %vm510, %v511, %v512
      %v514 = vrot.slane %v218, 1
      %v515 = vrot.slane %v222, 1
      %v516 = vsel %vm510, %v514, %v515
      %v517 = vrot.slane %v219, 1
      %v518 = vrot.slane %v223, 1
      %v519 = vsel %vm510, %v517, %v518
      %v520 = vrot.slane %v220, 1
      %v521 = vrot.slane %v224, 1
      %v522 = vsel %vm510, %v520, %v521
      %527 = vmatprep.subr.mxu0 0.0
      %528 = vmatpush1.msra.mxu0 %v453
      %529 = vmatprep.subr.mxu0 0.0
      %530 = vmatpush1.msra.mxu0 %v452
      %531 = vmatprep.subr.mxu0 0.0
      %532 = vmatpush1.msra.mxu0 %v451
      %533 = vmatprep.subr.mxu0 0.0
      %534 = vmatpush1.msra.mxu0 %v450
      %535 = vmatprep.subr.mxu0 0.0
      %536 = vmatpush1.msra.mxu0 %v449
      %537 = vmatprep.subr.mxu0 0.0
      %538 = vmatpush1.msra.mxu0 %v448
      %539 = vmatprep.subr.mxu0 0.0
      %540 = vmatpush1.msra.mxu0 %v447
      %541 = vmatprep.subr.mxu0 0.0
      %542 = vmatpush1.msra.mxu0 %v446
      %543 = vmatprep.subr.mxu0 0.0
      %544 = vmatpush1.msra.mxu0 %v445
      %545 = vmatprep.subr.mxu0 0.0
      %546 = vmatpush1.msra.mxu0 %v444
      %547 = vmatprep.subr.mxu0 0.0
      %548 = vmatpush1.msra.mxu0 %v443
      %549 = vmatprep.subr.mxu0 0.0
      %550 = vmatpush1.msra.mxu0 %v442
      %551 = vmatprep.subr.mxu0 0.0
      %552 = vmatpush1.msra.mxu0 %v441
      %553 = vmatprep.subr.mxu0 0.0
      %554 = vmatpush1.msra.mxu0 %v440
      %555 = vmatprep.subr.mxu0 0.0
      %556 = vmatpush1.msra.mxu0 %v439
      %557 = vmatprep.subr.mxu0 0.0
      %558 = vmatpush1.msra.mxu0 %v438
      %559 = vmatprep.subr.mxu0 0.0
      %560 = vmatpush2.msra.mxu0 %v469
      %561 = vmatprep.subr.mxu0 0.0
      %562 = vmatpush2.msra.mxu0 %v468
      %563 = vmatprep.subr.mxu0 0.0
      %564 = vmatpush2.msra.mxu0 %v467
      %565 = vmatprep.subr.mxu0 0.0
      %566 = vmatpush2.msra.mxu0 %v466
      %567 = vmatprep.subr.mxu0 0.0
      %568 = vmatpush2.msra.mxu0 %v465
      %569 = vmatprep.subr.mxu0 0.0
      %570 = vmatpush2.msra.mxu0 %v464
      %571 = vmatprep.subr.mxu0 0.0
      %572 = vmatpush2.msra.mxu0 %v463
      %573 = vmatprep.subr.mxu0 0.0
      %574 = vmatpush2.msra.mxu0 %v462
      %575 = vmatprep.subr.mxu0 0.0
      %576 = vmatpush2.msra.mxu0 %v461
      %577 = vmatprep.subr.mxu0 0.0
      %578 = vmatpush2.msra.mxu0 %v460
      %579 = vmatprep.subr.mxu0 0.0
      %580 = vmatpush2.msra.mxu0 %v459
      %581 = vmatprep.subr.mxu0 0.0
      %582 = vmatpush2.msra.mxu0 %v458
      %583 = vmatprep.subr.mxu0 0.0
      %584 = vmatpush2.msra.mxu0 %v457
      %585 = vmatprep.subr.mxu0 0.0
      %586 = vmatpush2.msra.mxu0 %v456
      %587 = vmatprep.subr.mxu0 0.0
      %588 = vmatpush2.msra.mxu0 %v455
      %589 = vmatprep.subr.mxu0 0.0
      %590 = vmatpush2.msra.mxu0 %v454
      %591 = vmatprep.mubr.f32.mxu0 %v516
      %592 = vmatmul.mubr.f32.gmra.mxu0 %v513
      %v593 = vpop.f32.mrf.mxu0
      %v594 = vadd.f32 0.0, %v593
      %v595 = vpop.f32.mrf.mxu0
      %596 = vdwg.mxu0
      %597 = vmatprep.subr.mxu0 0.0
      %598 = vmatpush1.msra.mxu0 %v485
      %599 = vmatprep.subr.mxu0 0.0
      %600 = vmatpush1.msra.mxu0 %v484
      %601 = vmatprep.subr.mxu0 0.0
      %602 = vmatpush1.msra.mxu0 %v483
      %603 = vmatprep.subr.mxu0 0.0
      %604 = vmatpush1.msra.mxu0 %v482
      %605 = vmatprep.subr.mxu0 0.0
      %606 = vmatpush1.msra.mxu0 %v481
      %607 = vmatprep.subr.mxu0 0.0
      %608 = vmatpush1.msra.mxu0 %v480
      %609 = vmatprep.subr.mxu0 0.0
      %610 = vmatpush1.msra.mxu0 %v479
      %611 = vmatprep.subr.mxu0 0.0
      %612 = vmatpush1.msra.mxu0 %v478
      %613 = vmatprep.subr.mxu0 0.0
      %614 = vmatpush1.msra.mxu0 %v477
      %615 = vmatprep.subr.mxu0 0.0
      %616 = vmatpush1.msra.mxu0 %v476
      %617 = vmatprep.subr.mxu0 0.0
      %618 = vmatpush1.msra.mxu0 %v475
      %619 = vmatprep.subr.mxu0 0.0
      %620 = vmatpush1.msra.mxu0 %v474
      %621 = vmatprep.subr.mxu0 0.0
      %622 = vmatpush1.msra.mxu0 %v473
      %623 = vmatprep.subr.mxu0 0.0
      %624 = vmatpush1.msra.mxu0 %v472
      %625 = vmatprep.subr.mxu0 0.0
      %626 = vmatpush1.msra.mxu0 %v471
      %627 = vmatprep.subr.mxu0 0.0
      %628 = vmatpush1.msra.mxu0 %v470
      %629 = vmatprep.subr.mxu0 0.0
      %630 = vmatpush2.msra.mxu0 %v501
      %631 = vmatprep.subr.mxu0 0.0
      %632 = vmatpush2.msra.mxu0 %v500
      %633 = vmatprep.subr.mxu0 0.0
      %634 = vmatpush2.msra.mxu0 %v499
      %635 = vmatprep.subr.mxu0 0.0
      %636 = vmatpush2.msra.mxu0 %v498
      %637 = vmatprep.subr.mxu0 0.0
      %638 = vmatpush2.msra.mxu0 %v497
      %639 = vmatprep.subr.mxu0 0.0
      %640 = vmatpush2.msra.mxu0 %v496
      %641 = vmatprep.subr.mxu0 0.0
      %642 = vmatpush2.msra.mxu0 %v495
      %643 = vmatprep.subr.mxu0 0.0
      %644 = vmatpush2.msra.mxu0 %v494
      %645 = vmatprep.subr.mxu0 0.0
      %646 = vmatpush2.msra.mxu0 %v493
      %647 = vmatprep.subr.mxu0 0.0
      %648 = vmatpush2.msra.mxu0 %v492
      %649 = vmatprep.subr.mxu0 0.0
      %650 = vmatpush2.msra.mxu0 %v491
      %651 = vmatprep.subr.mxu0 0.0
      %652 = vmatpush2.msra.mxu0 %v490
      %653 = vmatprep.subr.mxu0 0.0
      %654 = vmatpush2.msra.mxu0 %v489
      %655 = vmatprep.subr.mxu0 0.0
      %656 = vmatpush2.msra.mxu0 %v488
      %657 = vmatprep.subr.mxu0 0.0
      %658 = vmatpush2.msra.mxu0 %v487
      %659 = vmatprep.subr.mxu0 0.0
      %660 = vmatpush2.msra.mxu0 %v486
      %661 = vmatprep.mubr.f32.mxu0 %v522
      %662 = vmatmul.mubr.f32.gmra.mxu0 %v519
      %v663 = vpop.f32.mrf.mxu0
      %v664 = vadd.f32 %v594, %v663
      %v665 = vpop.f32.mrf.mxu0
      %666 = vdwg.mxu0
      %v667 = vadd.f32 %v436, %v664
      %668 = vst [vmem:[%s168] sm:$0xff] %v667
      %p669 = scmp.lt.s32.totalorder %s14, 1
      %s670 = scalar_select %p669, %s14, 1
      %s671 = smul.addr %s670, 8
      %s672 = scalar_lea.vmem %s3, %s671
      // Predicated region
      $region33: #{seanet_encoder_forward.10} parent=31 // pred_check
        %p673 = pneg %p100
      $region34: #{seanet_encoder_forward.10} parent=31 // pred_check_branch
        %675 = sbr.rel (%p673) target = $region36
      $region35: #{seanet_encoder_forward.10} parent=31 // pred_region
        _
      $region36: #{seanet_encoder_forward.10} parent=31 // pred_fallthru
        _
    $region32: #{seanet_encoder_forward.10} parent=5 // pred_fallthru
      _
    %p676 = scmp.le.s32.totalorder 2, %s9
    // Predicated region
    $region37: #{seanet_encoder_forward.10} parent=5 // pred_check
      %p677 = pneg %p676
    $region38: #{seanet_encoder_forward.10} parent=5 // pred_check_branch
      %679 = sbr.rel (%p677) target = $region40
    $region39: #{seanet_encoder_forward.10} parent=5 // pred_region
      %s680 = ssub.s32 %s9, 2
      // Predicated region
      $region41: #{seanet_encoder_forward.10} parent=39 // pred_check
        %p681 = pneg %p106
      $region42: #{seanet_encoder_forward.10} parent=39 // pred_check_branch
        %683 = sbr.rel (%p681) target = $region44
      $region43: #{seanet_encoder_forward.10} parent=39 // pred_region
        %p684 = scmp.lt.s32.totalorder %s15, 1
        %s685 = scalar_select %p684, %s15, 1
        %s686 = smul.addr %s685, 8
        %s687 = scalar_lea.vmem %s3, %s686
      $region44: #{seanet_encoder_forward.10} parent=39 // pred_fallthru
        _
    $region40: #{seanet_encoder_forward.10} parent=5 // pred_fallthru
      _
  $region6: #{seanet_encoder_forward.10} parent=0 // loop_footer
    %s13 = sadd.s32 1, %s9
  $region7: #{seanet_encoder_forward.10} parent=0 // loop_footer_branch
    %8 = sbr.rel target = $region3
  $region8: #{seanet_encoder_forward.10} parent=0 // loop_exit
    _

// kernel: seanet_encoder_forward.11
$region0: #{seanet_encoder_forward.11}
  #allocation0 [shape = 'u32[]', space=smem, size = 0x4, offset = 0x4, fixed_abs, tag = 'smem constant byte address 0x4 - core index']
  #allocation1 [shape = 'u32[144,128]{1,0:T(1,128)}', space=vmem, size = 0x12000, scoped, tag = 'internal scratch']
  %s0 = inlined_call_operand.vmem [shape: f32[2,14,128], index: 0, kind: input, shape index: {}]
  %s1 = inlined_call_operand.vmem [shape: f32[7,128,128], index: 1, kind: input, shape index: {}]
  %s2 = inlined_call_operand.vmem [shape: f32[1,128], index: 2, kind: input, shape index: {}]
  %s3 = inlined_call_operand.vmem [shape: f32[2,8,128], index: 3, kind: output, shape index: {}]
  %s4 = sld [smem:[#allocation0]]
  $region45: #{seanet_encoder_forward.11} parent=0
    _
  %s6 = ssub.s32 1, %s4
  %s7 = scalar_select 0, %s6, %s4
  loop: start=0, step=1, limit=4
  $region2: #{seanet_encoder_forward.11} parent=0 // loop_pre_header
    _
  $region3: #{seanet_encoder_forward.11} parent=0 // loop_header
    %s9 = sphi 0, %s13
    %p10 = scmp.ge.s32.totalorder %s9, 4
    %s19 = sphi 0, %s21
    %s22 = sphi 0, %s19
    %s23 = sphi 0, %s22
    %s39 = sphi 0, %s23
    %s43 = sphi 0, %s43
    %s45 = sphi 0, %s43
    %s46 = sphi 0, %s45
    %s60 = sphi 0, %s46
    %s64 = sphi 0, %s64
    %s66 = sphi 0, %s64
    %s67 = sphi 0, %s66
    %s81 = sphi 0, %s67
    %s87 = sphi 0, %s89
    %s90 = sphi 0, %s87
    %s91 = sphi 0, %s90
    %s107 = sphi 0, %s91
  $region4: #{seanet_encoder_forward.11} parent=0 // loop_header_branch
    %12 = sbr.rel (%p10) target = $region8
  $region5: #{seanet_encoder_forward.11} parent=0 // loop_body
    %s14 = ssub.s32 %s9, 1
    %s15 = ssub.s32 %s9, 2
    %s16 = sadd.s32 %s9, 1
    %s17 = ssub.s32 %s9, %s16
    %p18 = scmp.eq.s32.totalorder %s17, 0
    %s20 = sadd.s32 %s19, 1
    %s21 = scalar_select %p18, %s19, %s20
    %p24 = pneg %p18
    %p25 = scmp.eq.s32.totalorder %s9, 1
    %p26 = por %p24, %p25
    %p27 = scmp.ne.s32.totalorder %s19, %s22
    %p28 = scmp.eq.s32.totalorder %s9, 0
    %p29 = por %p27, %p28
    %p30 = scmp.ne.s32.totalorder %s19, %s22
    %p31 = scmp.eq.s32.totalorder %s14, 1
    %p32 = por %p30, %p31
    %p33 = scmp.ne.s32.totalorder %s22, %s23
    %p34 = scmp.eq.s32.totalorder %s14, 0
    %p35 = por %p33, %p34
    %p36 = scmp.ne.s32.totalorder %s22, %s23
    %p37 = scmp.eq.s32.totalorder %s15, 1
    %p38 = por %p36, %p37
    %p40 = scmp.ne.s32.totalorder %s23, %s39
    %p41 = scmp.eq.s32.totalorder %s15, 0
    %p42 = por %p40, %p41
    %s44 = sadd.s32 %s43, 1
    %p47 = scmp.eq.s32.totalorder %s9, 1
    %p48 = scmp.ne.s32.totalorder %s43, %s45
    %p49 = scmp.eq.s32.totalorder %s9, 0
    %p50 = por %p48, %p49
    %p51 = scmp.ne.s32.totalorder %s43, %s45
    %p52 = scmp.eq.s32.totalorder %s14, 1
    %p53 = por %p51, %p52
    %p54 = scmp.ne.s32.totalorder %s45, %s46
    %p55 = scmp.eq.s32.totalorder %s14, 0
    %p56 = por %p54, %p55
    %p57 = scmp.ne.s32.totalorder %s45, %s46
    %p58 = scmp.eq.s32.totalorder %s15, 1
    %p59 = por %p57, %p58
    %p61 = scmp.ne.s32.totalorder %s46, %s60
    %p62 = scmp.eq.s32.totalorder %s15, 0
    %p63 = por %p61, %p62
    %s65 = sadd.s32 %s64, 1
    %p68 = scmp.eq.s32.totalorder %s9, 1
    %p69 = scmp.ne.s32.totalorder %s64, %s66
    %p70 = scmp.eq.s32.totalorder %s9, 0
    %p71 = por %p69, %p70
    %p72 = scmp.ne.s32.totalorder %s64, %s66
    %p73 = scmp.eq.s32.totalorder %s14, 1
    %p74 = por %p72, %p73
    %p75 = scmp.ne.s32.totalorder %s66, %s67
    %p76 = scmp.eq.s32.totalorder %s14, 0
    %p77 = por %p75, %p76
    %p78 = scmp.ne.s32.totalorder %s66, %s67
    %p79 = scmp.eq.s32.totalorder %s15, 1
    %p80 = por %p78, %p79
    %p82 = scmp.ne.s32.totalorder %s67, %s81
    %p83 = scmp.eq.s32.totalorder %s15, 0
    %p84 = por %p82, %p83
    %s85 = ssub.s32 %s9, %s16
    %p86 = scmp.eq.s32.totalorder %s85, 0
    %s88 = sadd.s32 %s87, 1
    %s89 = scalar_select %p86, %s87, %s88
    %p92 = pneg %p86
    %p93 = scmp.eq.s32.totalorder %s9, 1
    %p94 = por %p92, %p93
    %p95 = scmp.ne.s32.totalorder %s87, %s90
    %p96 = scmp.eq.s32.totalorder %s9, 0
    %p97 = por %p95, %p96
    %p98 = scmp.ne.s32.totalorder %s87, %s90
    %p99 = scmp.eq.s32.totalorder %s14, 1
    %p100 = por %p98, %p99
    %p101 = scmp.ne.s32.totalorder %s90, %s91
    %p102 = scmp.eq.s32.totalorder %s14, 0
    %p103 = por %p101, %p102
    %p104 = scmp.ne.s32.totalorder %s90, %s91
    %p105 = scmp.eq.s32.totalorder %s15, 1
    %p106 = por %p104, %p105
    %p108 = scmp.ne.s32.totalorder %s91, %s107
    %p109 = scmp.eq.s32.totalorder %s15, 0
    %p110 = por %p108, %p109
    %p111 = scmp.le.s32.totalorder 1, %s9
    %p112 = scmp.lt.s32.totalorder %s9, 3
    %p113 = pnand %p111, %p112
    %p114 = pneg %p113
    // Predicated region
    $region9: #{seanet_encoder_forward.11} parent=5 // pred_check
      _
    $region10: #{seanet_encoder_forward.11} parent=5 // pred_check_branch
      %116 = sbr.rel (%p113) target = $region12
    $region11: #{seanet_encoder_forward.11} parent=5 // pred_region
      %s117 = ssub.s32 %s9, 1
      // Predicated region
      $region13: #{seanet_encoder_forward.11} parent=11 // pred_check
        %p118 = pneg %p56
      $region14: #{seanet_encoder_forward.11} parent=11 // pred_check_branch
        %120 = sbr.rel (%p118) target = $region16
      $region15: #{seanet_encoder_forward.11} parent=11 // pred_region
        _
      $region16: #{seanet_encoder_forward.11} parent=11 // pred_fallthru
        _
      // Predicated region
      $region17: #{seanet_encoder_forward.11} parent=11 // pred_check
        %p121 = pneg %p77
      $region18: #{seanet_encoder_forward.11} parent=11 // pred_check_branch
        %123 = sbr.rel (%p121) target = $region20
      $region19: #{seanet_encoder_forward.11} parent=11 // pred_region
        _
      $region20: #{seanet_encoder_forward.11} parent=11 // pred_fallthru
        _
    $region12: #{seanet_encoder_forward.11} parent=5 // pred_fallthru
      _
    %p124 = scmp.lt.s32.totalorder %s9, 2
    // Predicated region
    $region21: #{seanet_encoder_forward.11} parent=5 // pred_check
      %p125 = pneg %p124
    $region22: #{seanet_encoder_forward.11} parent=5 // pred_check_branch
      %127 = sbr.rel (%p125) target = $region24
    $region23: #{seanet_encoder_forward.11} parent=5 // pred_region
      // Predicated region
      $region25: #{seanet_encoder_forward.11} parent=23 // pred_check
        %p128 = pneg %p29
      $region26: #{seanet_encoder_forward.11} parent=23 // pred_check_branch
        %130 = sbr.rel (%p128) target = $region28
      $region27: #{seanet_encoder_forward.11} parent=23 // pred_region
        %p131 = scmp.lt.s32.totalorder %s9, 1
        %s132 = scalar_select %p131, %s9, 1
        %s133 = smul.addr %s132, 2
        %s134 = smul.addr %s133, 8
        %s135 = scalar_lea.vmem %s0, %s134
      $region28: #{seanet_encoder_forward.11} parent=23 // pred_fallthru
        _
    $region24: #{seanet_encoder_forward.11} parent=5 // pred_fallthru
      _
    %p136 = scmp.le.s32.totalorder 1, %s9
    %p137 = scmp.lt.s32.totalorder %s9, 3
    %p138 = pnand %p136, %p137
    %p139 = pneg %p138
    // Predicated region
    $region29: #{seanet_encoder_forward.11} parent=5 // pred_check
      _
    $region30: #{seanet_encoder_forward.11} parent=5 // pred_check_branch
      %141 = sbr.rel (%p138) target = $region32
    $region31: #{seanet_encoder_forward.11} parent=5 // pred_region
      %s142 = ssub.s32 %s9, 1
      %p143 = scmp.lt.s32.totalorder %s14, 1
      %s144 = scalar_select %p143, %s14, 1
      %s145 = smul.addr %s144, 2
      %s146 = smul.addr %s145, 8
      %s147 = scalar_lea.vmem %s0, %s146
      %p148 = pneg %p35
      %p149 = pneg %p32
      %p150 = pneg %p56
      %p151 = pneg %p53
      %p152 = pneg %p77
      %p153 = pneg %p74
      %p154 = pneg %p103
      %p155 = pneg %p100
      %p156 = scmp.lt.s32.totalorder %s14, 1
      %s157 = scalar_select %p156, %s14, 1
      %s158 = smul.addr %s157, 8
      %s159 = scalar_lea.vmem %s3, %s158
      %p160 = scmp.lt.s32.totalorder %s14, 1
      %s161 = scalar_select %p160, %s14, 1
      %s162 = smul.addr %s161, 2
      %s163 = smul.addr %s162, 8
      %s164 = scalar_lea.vmem %s0, %s163
      %p165 = scmp.lt.s32.totalorder %s14, 1
      %s166 = scalar_select %p165, %s14, 1
      %s167 = smul.addr %s166, 8
      %s168 = scalar_lea.vmem %s3, %s167
      %v169 = vld [vmem:[%s164] sm:$0xff]
      %v170 = vld [vmem:[%s164 + $0x8] sm:$0x3f]
      %vm171 = vcmp.gt.f32.partialorder %v169, 0.0
      %vm172 = vcmp.gt.f32.partialorder %v170, 0.0
      %v173 = vmin.f32 %v169, 0.0
      %v174 = vmin.f32 %v170, 0.0
      %v175 = vmul.f32 %v173, 1.442695
      %v176 = vpow.pop %v175
      %v177 = vmul.f32 %v174, 1.442695
      %v178 = vpow.pop %v177
      %v179 = vsub.f32 %v176, 1.0
      %v180 = vsub.f32 %v178, 1.0
      %v181 = vsel %vm171, %v169, %v179
      %v182 = vsel %vm172, %v170, %v180
      %v183 = vld [vmem:[%s2] sm:$0x1]
      %v185 = vlaneseq
      %v186 = vshrl.u32 %v185, 7
      %v187 = vsub.s32 0, %v186
      %v188 = vrot.slane %v183, %v187
      %v190 = vld [vmem:[%s1] sm:$0xff]
      %v191 = vld [vmem:[%s1 + $0x8] sm:$0xff]
      %v192 = vld [vmem:[%s1 + $0x10] sm:$0xff]
      %v193 = vld [vmem:[%s1 + $0x18] sm:$0xff]
      %v194 = vld [vmem:[%s1 + $0x20] sm:$0xff]
      %v195 = vld [vmem:[%s1 + $0x28] sm:$0xff]
      %v196 = vld [vmem:[%s1 + $0x30] sm:$0xff]
      %v197 = vld [vmem:[%s1 + $0x38] sm:$0xff]
      %v198 = vld [vmem:[%s1 + $0x40] sm:$0xff]
      %v199 = vld [vmem:[%s1 + $0x48] sm:$0xff]
      %v200 = vld [vmem:[%s1 + $0x50] sm:$0xff]
      %v201 = vld [vmem:[%s1 + $0x58] sm:$0xff]
      %v202 = vld [vmem:[%s1 + $0x60] sm:$0xff]
      %v203 = vld [vmem:[%s1 + $0x68] sm:$0xff]
      %v204 = vld [vmem:[%s1 + $0x70] sm:$0xff]
      %v205 = vld [vmem:[%s1 + $0x78] sm:$0xff]
      %206 = vmatprep.subr.mxu0 0.0
      %207 = vmatpush1.msra.mxu0 %v205
      %208 = vmatprep.subr.mxu0 0.0
      %209 = vmatpush1.msra.mxu0 %v204
      %210 = vmatprep.subr.mxu0 0.0
      %211 = vmatpush1.msra.mxu0 %v203
      %212 = vmatprep.subr.mxu0 0.0
      %213 = vmatpush1.msra.mxu0 %v202
      %214 = vmatprep.subr.mxu0 0.0
      %215 = vmatpush1.msra.mxu0 %v201
      %216 = vmatprep.subr.mxu0 0.0
      %217 = vmatpush1.msra.mxu0 %v200
      %218 = vmatprep.subr.mxu0 0.0
      %219 = vmatpush1.msra.mxu0 %v199
      %220 = vmatprep.subr.mxu0 0.0
      %221 = vmatpush1.msra.mxu0 %v198
      %222 = vmatprep.subr.mxu0 0.0
      %223 = vmatpush1.msra.mxu0 %v197
      %224 = vmatprep.subr.mxu0 0.0
      %225 = vmatpush1.msra.mxu0 %v196
      %226 = vmatprep.subr.mxu0 0.0
      %227 = vmatpush1.msra.mxu0 %v195
      %228 = vmatprep.subr.mxu0 0.0
      %229 = vmatpush1.msra.mxu0 %v194
      %230 = vmatprep.subr.mxu0 0.0
      %231 = vmatpush1.msra.mxu0 %v193
      %232 = vmatprep.subr.mxu0 0.0
      %233 = vmatpush1.msra.mxu0 %v192
      %234 = vmatprep.subr.mxu0 0.0
      %235 = vmatpush1.msra.mxu0 %v191
      %236 = vmatprep.subr.mxu0 0.0
      %237 = vmatpush1.msra.mxu0 %v190
      %238 = vmatprep.subr.mxu0 0.0
      %239 = vmatpush2.msra.mxu0 0.0
      %240 = vmatprep.subr.mxu0 0.0
      %241 = vmatpush2.msra.mxu0 0.0
      %242 = vmatprep.subr.mxu0 0.0
      %243 = vmatpush2.msra.mxu0 0.0
      %244 = vmatprep.subr.mxu0 0.0
      %245 = vmatpush2.msra.mxu0 0.0
      %246 = vmatprep.subr.mxu0 0.0
      %247 = vmatpush2.msra.mxu0 0.0
      %248 = vmatprep.subr.mxu0 0.0
      %249 = vmatpush2.msra.mxu0 0.0
      %250 = vmatprep.subr.mxu0 0.0
      %251 = vmatpush2.msra.mxu0 0.0
      %252 = vmatprep.subr.mxu0 0.0
      %253 = vmatpush2.msra.mxu0 0.0
      %254 = vmatprep.subr.mxu0 0.0
      %255 = vmatpush2.msra.mxu0 0.0
      %256 = vmatprep.subr.mxu0 0.0
      %257 = vmatpush2.msra.mxu0 0.0
      %258 = vmatprep.subr.mxu0 0.0
      %259 = vmatpush2.msra.mxu0 0.0
      %260 = vmatprep.subr.mxu0 0.0
      %261 = vmatpush2.msra.mxu0 0.0
      %262 = vmatprep.subr.mxu0 0.0
      %263 = vmatpush2.msra.mxu0 0.0
      %264 = vmatprep.subr.mxu0 0.0
      %265 = vmatpush2.msra.mxu0 0.0
      %266 = vmatprep.subr.mxu0 0.0
      %267 = vmatpush2.msra.mxu0 0.0
      %268 = vmatprep.subr.mxu0 0.0
      %269 = vmatpush2.msra.mxu0 0.0
      %270 = vmatprep.mubr.f32.mxu0 0.0
      %271 = vmatmul.mubr.f32.gmra.mxu0 %v181
      %v272 = vpop.f32.mrf.mxu0
      %v273 = vadd.f32 0.0, %v272
      %v274 = vpop.f32.mrf.mxu0
      %275 = vdwg.mxu0
      %v276 = vadd.f32 %v188, %v273
      %s277 = scalar_lea.vmem %s1, 128
      %v278 = vld [vmem:[%s277] sm:$0xff]
      %v279 = vld [vmem:[%s277 + $0x8] sm:$0xff]
      %v280 = vld [vmem:[%s277 + $0x10] sm:$0xff]
      %v281 = vld [vmem:[%s277 + $0x18] sm:$0xff]
      %v282 = vld [vmem:[%s277 + $0x20] sm:$0xff]
      %v283 = vld [vmem:[%s277 + $0x28] sm:$0xff]
      %v284 = vld [vmem:[%s277 + $0x30] sm:$0xff]
      %v285 = vld [vmem:[%s277 + $0x38] sm:$0xff]
      %v286 = vld [vmem:[%s277 + $0x40] sm:$0xff]
      %v287 = vld [vmem:[%s277 + $0x48] sm:$0xff]
      %v288 = vld [vmem:[%s277 + $0x50] sm:$0xff]
      %v289 = vld [vmem:[%s277 + $0x58] sm:$0xff]
      %v290 = vld [vmem:[%s277 + $0x60] sm:$0xff]
      %v291 = vld [vmem:[%s277 + $0x68] sm:$0xff]
      %v292 = vld [vmem:[%s277 + $0x70] sm:$0xff]
      %v293 = vld [vmem:[%s277 + $0x78] sm:$0xff]
      %vm296 = vcmask 1046528
      %v297 = vrot.slane %v181, 1
      %v298 = vrot.slane %v182, 1
      %v299 = vsel %vm296, %v297, %v298
      %301 = vmatprep.subr.mxu0 0.0
      %302 = vmatpush1.msra.mxu0 %v293
      %303 = vmatprep.subr.mxu0 0.0
      %304 = vmatpush1.msra.mxu0 %v292
      %305 = vmatprep.subr.mxu0 0.0
      %306 = vmatpush1.msra.mxu0 %v291
      %307 = vmatprep.subr.mxu0 0.0
      %308 = vmatpush1.msra.mxu0 %v290
      %309 = vmatprep.subr.mxu0 0.0
      %310 = vmatpush1.msra.mxu0 %v289
      %311 = vmatprep.subr.mxu0 0.0
      %312 = vmatpush1.msra.mxu0 %v288
      %313 = vmatprep.subr.mxu0 0.0
      %314 = vmatpush1.msra.mxu0 %v287
      %315 = vmatprep.subr.mxu0 0.0
      %316 = vmatpush1.msra.mxu0 %v286
      %317 = vmatprep.subr.mxu0 0.0
      %318 = vmatpush1.msra.mxu0 %v285
      %319 = vmatprep.subr.mxu0 0.0
      %320 = vmatpush1.msra.mxu0 %v284
      %321 = vmatprep.subr.mxu0 0.0
      %322 = vmatpush1.msra.mxu0 %v283
      %323 = vmatprep.subr.mxu0 0.0
      %324 = vmatpush1.msra.mxu0 %v282
      %325 = vmatprep.subr.mxu0 0.0
      %326 = vmatpush1.msra.mxu0 %v281
      %327 = vmatprep.subr.mxu0 0.0
      %328 = vmatpush1.msra.mxu0 %v280
      %329 = vmatprep.subr.mxu0 0.0
      %330 = vmatpush1.msra.mxu0 %v279
      %331 = vmatprep.subr.mxu0 0.0
      %332 = vmatpush1.msra.mxu0 %v278
      %333 = vmatprep.subr.mxu0 0.0
      %334 = vmatpush2.msra.mxu0 0.0
      %335 = vmatprep.subr.mxu0 0.0
      %336 = vmatpush2.msra.mxu0 0.0
      %337 = vmatprep.subr.mxu0 0.0
      %338 = vmatpush2.msra.mxu0 0.0
      %339 = vmatprep.subr.mxu0 0.0
      %340 = vmatpush2.msra.mxu0 0.0
      %341 = vmatprep.subr.mxu0 0.0
      %342 = vmatpush2.msra.mxu0 0.0
      %343 = vmatprep.subr.mxu0 0.0
      %344 = vmatpush2.msra.mxu0 0.0
      %345 = vmatprep.subr.mxu0 0.0
      %346 = vmatpush2.msra.mxu0 0.0
      %347 = vmatprep.subr.mxu0 0.0
      %348 = vmatpush2.msra.mxu0 0.0
      %349 = vmatprep.subr.mxu0 0.0
      %350 = vmatpush2.msra.mxu0 0.0
      %351 = vmatprep.subr.mxu0 0.0
      %352 = vmatpush2.msra.mxu0 0.0
      %353 = vmatprep.subr.mxu0 0.0
      %354 = vmatpush2.msra.mxu0 0.0
      %355 = vmatprep.subr.mxu0 0.0
      %356 = vmatpush2.msra.mxu0 0.0
      %357 = vmatprep.subr.mxu0 0.0
      %358 = vmatpush2.msra.mxu0 0.0
      %359 = vmatprep.subr.mxu0 0.0
      %360 = vmatpush2.msra.mxu0 0.0
      %361 = vmatprep.subr.mxu0 0.0
      %362 = vmatpush2.msra.mxu0 0.0
      %363 = vmatprep.subr.mxu0 0.0
      %364 = vmatpush2.msra.mxu0 0.0
      %365 = vmatprep.mubr.f32.mxu0 0.0
      %366 = vmatmul.mubr.f32.gmra.mxu0 %v299
      %v367 = vpop.f32.mrf.mxu0
      %v368 = vadd.f32 0.0, %v367
      %v369 = vpop.f32.mrf.mxu0
      %370 = vdwg.mxu0
      %v371 = vadd.f32 %v276, %v368
      %s372 = scalar_lea.vmem %s1, 256
      %v373 = vld [vmem:[%s372] sm:$0xff]
      %v374 = vld [vmem:[%s372 + $0x8] sm:$0xff]
      %v375 = vld [vmem:[%s372 + $0x10] sm:$0xff]
      %v376 = vld [vmem:[%s372 + $0x18] sm:$0xff]
      %v377 = vld [vmem:[%s372 + $0x20] sm:$0xff]
      %v378 = vld [vmem:[%s372 + $0x28] sm:$0xff]
      %v379 = vld [vmem:[%s372 + $0x30] sm:$0xff]
      %v380 = vld [vmem:[%s372 + $0x38] sm:$0xff]
      %v381 = vld [vmem:[%s372 + $0x40] sm:$0xff]
      %v382 = vld [vmem:[%s372 + $0x48] sm:$0xff]
      %v383 = vld [vmem:[%s372 + $0x50] sm:$0xff]
      %v384 = vld [vmem:[%s372 + $0x58] sm:$0xff]
      %v385 = vld [vmem:[%s372 + $0x60] sm:$0xff]
      %v386 = vld [vmem:[%s372 + $0x68] sm:$0xff]
      %v387 = vld [vmem:[%s372 + $0x70] sm:$0xff]
      %v388 = vld [vmem:[%s372 + $0x78] sm:$0xff]
      %vm389 = vcmask 1045504
      %v390 = vrot.slane %v181, 2
      %v391 = vrot.slane %v182, 2
      %v392 = vsel %vm389, %v390, %v391
      %394 = vmatprep.subr.mxu0 0.0
      %395 = vmatpush1.msra.mxu0 %v388
      %396 = vmatprep.subr.mxu0 0.0
      %397 = vmatpush1.msra.mxu0 %v387
      %398 = vmatprep.subr.mxu0 0.0
      %399 = vmatpush1.msra.mxu0 %v386
      %400 = vmatprep.subr.mxu0 0.0
      %401 = vmatpush1.msra.mxu0 %v385
      %402 = vmatprep.subr.mxu0 0.0
      %403 = vmatpush1.msra.mxu0 %v384
      %404 = vmatprep.subr.mxu0 0.0
      %405 = vmatpush1.msra.mxu0 %v383
      %406 = vmatprep.subr.mxu0 0.0
      %407 = vmatpush1.msra.mxu0 %v382
      %408 = vmatprep.subr.mxu0 0.0
      %409 = vmatpush1.msra.mxu0 %v381
      %410 = vmatprep.subr.mxu0 0.0
      %411 = vmatpush1.msra.mxu0 %v380
      %412 = vmatprep.subr.mxu0 0.0
      %413 = vmatpush1.msra.mxu0 %v379
      %414 = vmatprep.subr.mxu0 0.0
      %415 = vmatpush1.msra.mxu0 %v378
      %416 = vmatprep.subr.mxu0 0.0
      %417 = vmatpush1.msra.mxu0 %v377
      %418 = vmatprep.subr.mxu0 0.0
      %419 = vmatpush1.msra.mxu0 %v376
      %420 = vmatprep.subr.mxu0 0.0
      %421 = vmatpush1.msra.mxu0 %v375
      %422 = vmatprep.subr.mxu0 0.0
      %423 = vmatpush1.msra.mxu0 %v374
      %424 = vmatprep.subr.mxu0 0.0
      %425 = vmatpush1.msra.mxu0 %v373
      %426 = vmatprep.subr.mxu0 0.0
      %427 = vmatpush2.msra.mxu0 0.0
      %428 = vmatprep.subr.mxu0 0.0
      %429 = vmatpush2.msra.mxu0 0.0
      %430 = vmatprep.subr.mxu0 0.0
      %431 = vmatpush2.msra.mxu0 0.0
      %432 = vmatprep.subr.mxu0 0.0
      %433 = vmatpush2.msra.mxu0 0.0
      %434 = vmatprep.subr.mxu0 0.0
      %435 = vmatpush2.msra.mxu0 0.0
      %436 = vmatprep.subr.mxu0 0.0
      %437 = vmatpush2.msra.mxu0 0.0
      %438 = vmatprep.subr.mxu0 0.0
      %439 = vmatpush2.msra.mxu0 0.0
      %440 = vmatprep.subr.mxu0 0.0
      %441 = vmatpush2.msra.mxu0 0.0
      %442 = vmatprep.subr.mxu0 0.0
      %443 = vmatpush2.msra.mxu0 0.0
      %444 = vmatprep.subr.mxu0 0.0
      %445 = vmatpush2.msra.mxu0 0.0
      %446 = vmatprep.subr.mxu0 0.0
      %447 = vmatpush2.msra.mxu0 0.0
      %448 = vmatprep.subr.mxu0 0.0
      %449 = vmatpush2.msra.mxu0 0.0
      %450 = vmatprep.subr.mxu0 0.0
      %451 = vmatpush2.msra.mxu0 0.0
      %452 = vmatprep.subr.mxu0 0.0
      %453 = vmatpush2.msra.mxu0 0.0
      %454 = vmatprep.subr.mxu0 0.0
      %455 = vmatpush2.msra.mxu0 0.0
      %456 = vmatprep.subr.mxu0 0.0
      %457 = vmatpush2.msra.mxu0 0.0
      %458 = vmatprep.mubr.f32.mxu0 0.0
      %459 = vmatmul.mubr.f32.gmra.mxu0 %v392
      %v460 = vpop.f32.mrf.mxu0
      %v461 = vadd.f32 0.0, %v460
      %v462 = vpop.f32.mrf.mxu0
      %463 = vdwg.mxu0
      %v464 = vadd.f32 %v371, %v461
      %s465 = scalar_lea.vmem %s1, 384
      %v466 = vld [vmem:[%s465] sm:$0xff]
      %v467 = vld [vmem:[%s465 + $0x8] sm:$0xff]
      %v468 = vld [vmem:[%s465 + $0x10] sm:$0xff]
      %v469 = vld [vmem:[%s465 + $0x18] sm:$0xff]
      %v470 = vld [vmem:[%s465 + $0x20] sm:$0xff]
      %v471 = vld [vmem:[%s465 + $0x28] sm:$0xff]
      %v472 = vld [vmem:[%s465 + $0x30] sm:$0xff]
      %v473 = vld [vmem:[%s465 + $0x38] sm:$0xff]
      %v474 = vld [vmem:[%s465 + $0x40] sm:$0xff]
      %v475 = vld [vmem:[%s465 + $0x48] sm:$0xff]
      %v476 = vld [vmem:[%s465 + $0x50] sm:$0xff]
      %v477 = vld [vmem:[%s465 + $0x58] sm:$0xff]
      %v478 = vld [vmem:[%s465 + $0x60] sm:$0xff]
      %v479 = vld [vmem:[%s465 + $0x68] sm:$0xff]
      %v480 = vld [vmem:[%s465 + $0x70] sm:$0xff]
      %v481 = vld [vmem:[%s465 + $0x78] sm:$0xff]
      %vm482 = vcmask 1044480
      %v483 = vrot.slane %v181, 3
      %v484 = vrot.slane %v182, 3
      %v485 = vsel %vm482, %v483, %v484
      %487 = vmatprep.subr.mxu0 0.0
      %488 = vmatpush1.msra.mxu0 %v481
      %489 = vmatprep.subr.mxu0 0.0
      %490 = vmatpush1.msra.mxu0 %v480
      %491 = vmatprep.subr.mxu0 0.0
      %492 = vmatpush1.msra.mxu0 %v479
      %493 = vmatprep.subr.mxu0 0.0
      %494 = vmatpush1.msra.mxu0 %v478
      %495 = vmatprep.subr.mxu0 0.0
      %496 = vmatpush1.msra.mxu0 %v477
      %497 = vmatprep.subr.mxu0 0.0
      %498 = vmatpush1.msra.mxu0 %v476
      %499 = vmatprep.subr.mxu0 0.0
      %500 = vmatpush1.msra.mxu0 %v475
      %501 = vmatprep.subr.mxu0 0.0
      %502 = vmatpush1.msra.mxu0 %v474
      %503 = vmatprep.subr.mxu0 0.0
      %504 = vmatpush1.msra.mxu0 %v473
      %505 = vmatprep.subr.mxu0 0.0
      %506 = vmatpush1.msra.mxu0 %v472
      %507 = vmatprep.subr.mxu0 0.0
      %508 = vmatpush1.msra.mxu0 %v471
      %509 = vmatprep.subr.mxu0 0.0
      %510 = vmatpush1.msra.mxu0 %v470
      %511 = vmatprep.subr.mxu0 0.0
      %512 = vmatpush1.msra.mxu0 %v469
      %513 = vmatprep.subr.mxu0 0.0
      %514 = vmatpush1.msra.mxu0 %v468
      %515 = vmatprep.subr.mxu0 0.0
      %516 = vmatpush1.msra.mxu0 %v467
      %517 = vmatprep.subr.mxu0 0.0
      %518 = vmatpush1.msra.mxu0 %v466
      %519 = vmatprep.subr.mxu0 0.0
      %520 = vmatpush2.msra.mxu0 0.0
      %521 = vmatprep.subr.mxu0 0.0
      %522 = vmatpush2.msra.mxu0 0.0
      %523 = vmatprep.subr.mxu0 0.0
      %524 = vmatpush2.msra.mxu0 0.0
      %525 = vmatprep.subr.mxu0 0.0
      %526 = vmatpush2.msra.mxu0 0.0
      %527 = vmatprep.subr.mxu0 0.0
      %528 = vmatpush2.msra.mxu0 0.0
      %529 = vmatprep.subr.mxu0 0.0
      %530 = vmatpush2.msra.mxu0 0.0
      %531 = vmatprep.subr.mxu0 0.0
      %532 = vmatpush2.msra.mxu0 0.0
      %533 = vmatprep.subr.mxu0 0.0
      %534 = vmatpush2.msra.mxu0 0.0
      %535 = vmatprep.subr.mxu0 0.0
      %536 = vmatpush2.msra.mxu0 0.0
      %537 = vmatprep.subr.mxu0 0.0
      %538 = vmatpush2.msra.mxu0 0.0
      %539 = vmatprep.subr.mxu0 0.0
      %540 = vmatpush2.msra.mxu0 0.0
      %541 = vmatprep.subr.mxu0 0.0
      %542 = vmatpush2.msra.mxu0 0.0
      %543 = vmatprep.subr.mxu0 0.0
      %544 = vmatpush2.msra.mxu0 0.0
      %545 = vmatprep.subr.mxu0 0.0
      %546 = vmatpush2.msra.mxu0 0.0
      %547 = vmatprep.subr.mxu0 0.0
      %548 = vmatpush2.msra.mxu0 0.0
      %549 = vmatprep.subr.mxu0 0.0
      %550 = vmatpush2.msra.mxu0 0.0
      %551 = vmatprep.mubr.f32.mxu0 0.0
      %552 = vmatmul.mubr.f32.gmra.mxu0 %v485
      %v553 = vpop.f32.mrf.mxu0
      %v554 = vadd.f32 0.0, %v553
      %v555 = vpop.f32.mrf.mxu0
      %556 = vdwg.mxu0
      %v557 = vadd.f32 %v464, %v554
      %s558 = scalar_lea.vmem %s1, 512
      %v559 = vld [vmem:[%s558] sm:$0xff]
      %v560 = vld [vmem:[%s558 + $0x8] sm:$0xff]
      %v561 = vld [vmem:[%s558 + $0x10] sm:$0xff]
      %v562 = vld [vmem:[%s558 + $0x18] sm:$0xff]
      %v563 = vld [vmem:[%s558 + $0x20] sm:$0xff]
      %v564 = vld [vmem:[%s558 + $0x28] sm:$0xff]
      %v565 = vld [vmem:[%s558 + $0x30] sm:$0xff]
      %v566 = vld [vmem:[%s558 + $0x38] sm:$0xff]
      %v567 = vld [vmem:[%s558 + $0x40] sm:$0xff]
      %v568 = vld [vmem:[%s558 + $0x48] sm:$0xff]
      %v569 = vld [vmem:[%s558 + $0x50] sm:$0xff]
      %v570 = vld [vmem:[%s558 + $0x58] sm:$0xff]
      %v571 = vld [vmem:[%s558 + $0x60] sm:$0xff]
      %v572 = vld [vmem:[%s558 + $0x68] sm:$0xff]
      %v573 = vld [vmem:[%s558 + $0x70] sm:$0xff]
      %v574 = vld [vmem:[%s558 + $0x78] sm:$0xff]
      %vm575 = vcmask 1043456
      %v576 = vrot.slane %v181, 4
      %v577 = vrot.slane %v182, 4
      %v578 = vsel %vm575, %v576, %v577
      %580 = vmatprep.subr.mxu0 0.0
      %581 = vmatpush1.msra.mxu0 %v574
      %582 = vmatprep.subr.mxu0 0.0
      %583 = vmatpush1.msra.mxu0 %v573
      %584 = vmatprep.subr.mxu0 0.0
      %585 = vmatpush1.msra.mxu0 %v572
      %586 = vmatprep.subr.mxu0 0.0
      %587 = vmatpush1.msra.mxu0 %v571
      %588 = vmatprep.subr.mxu0 0.0
      %589 = vmatpush1.msra.mxu0 %v570
      %590 = vmatprep.subr.mxu0 0.0
      %591 = vmatpush1.msra.mxu0 %v569
      %592 = vmatprep.subr.mxu0 0.0
      %593 = vmatpush1.msra.mxu0 %v568
      %594 = vmatprep.subr.mxu0 0.0
      %595 = vmatpush1.msra.mxu0 %v567
      %596 = vmatprep.subr.mxu0 0.0
      %597 = vmatpush1.msra.mxu0 %v566
      %598 = vmatprep.subr.mxu0 0.0
      %599 = vmatpush1.msra.mxu0 %v565
      %600 = vmatprep.subr.mxu0 0.0
      %601 = vmatpush1.msra.mxu0 %v564
      %602 = vmatprep.subr.mxu0 0.0
      %603 = vmatpush1.msra.mxu0 %v563
      %604 = vmatprep.subr.mxu0 0.0
      %605 = vmatpush1.msra.mxu0 %v562
      %606 = vmatprep.subr.mxu0 0.0
      %607 = vmatpush1.msra.mxu0 %v561
      %608 = vmatprep.subr.mxu0 0.0
      %609 = vmatpush1.msra.mxu0 %v560
      %610 = vmatprep.subr.mxu0 0.0
      %611 = vmatpush1.msra.mxu0 %v559
      %612 = vmatprep.subr.mxu0 0.0
      %613 = vmatpush2.msra.mxu0 0.0
      %614 = vmatprep.subr.mxu0 0.0
      %615 = vmatpush2.msra.mxu0 0.0
      %616 = vmatprep.subr.mxu0 0.0
      %617 = vmatpush2.msra.mxu0 0.0
      %618 = vmatprep.subr.mxu0 0.0
      %619 = vmatpush2.msra.mxu0 0.0
      %620 = vmatprep.subr.mxu0 0.0
      %621 = vmatpush2.msra.mxu0 0.0
      %622 = vmatprep.subr.mxu0 0.0
      %623 = vmatpush2.msra.mxu0 0.0
      %624 = vmatprep.subr.mxu0 0.0
      %625 = vmatpush2.msra.mxu0 0.0
      %626 = vmatprep.subr.mxu0 0.0
      %627 = vmatpush2.msra.mxu0 0.0
      %628 = vmatprep.subr.mxu0 0.0
      %629 = vmatpush2.msra.mxu0 0.0
      %630 = vmatprep.subr.mxu0 0.0
      %631 = vmatpush2.msra.mxu0 0.0
      %632 = vmatprep.subr.mxu0 0.0
      %633 = vmatpush2.msra.mxu0 0.0
      %634 = vmatprep.subr.mxu0 0.0
      %635 = vmatpush2.msra.mxu0 0.0
      %636 = vmatprep.subr.mxu0 0.0
      %637 = vmatpush2.msra.mxu0 0.0
      %638 = vmatprep.subr.mxu0 0.0
      %639 = vmatpush2.msra.mxu0 0.0
      %640 = vmatprep.subr.mxu0 0.0
      %641 = vmatpush2.msra.mxu0 0.0
      %642 = vmatprep.subr.mxu0 0.0
      %643 = vmatpush2.msra.mxu0 0.0
      %644 = vmatprep.mubr.f32.mxu0 0.0
      %645 = vmatmul.mubr.f32.gmra.mxu0 %v578
      %v646 = vpop.f32.mrf.mxu0
      %v647 = vadd.f32 0.0, %v646
      %v648 = vpop.f32.mrf.mxu0
      %649 = vdwg.mxu0
      %v650 = vadd.f32 %v557, %v647
      %s651 = scalar_lea.vmem %s1, 640
      %v652 = vld [vmem:[%s651] sm:$0xff]
      %v653 = vld [vmem:[%s651 + $0x8] sm:$0xff]
      %v654 = vld [vmem:[%s651 + $0x10] sm:$0xff]
      %v655 = vld [vmem:[%s651 + $0x18] sm:$0xff]
      %v656 = vld [vmem:[%s651 + $0x20] sm:$0xff]
      %v657 = vld [vmem:[%s651 + $0x28] sm:$0xff]
      %v658 = vld [vmem:[%s651 + $0x30] sm:$0xff]
      %v659 = vld [vmem:[%s651 + $0x38] sm:$0xff]
      %v660 = vld [vmem:[%s651 + $0x40] sm:$0xff]
      %v661 = vld [vmem:[%s651 + $0x48] sm:$0xff]
      %v662 = vld [vmem:[%s651 + $0x50] sm:$0xff]
      %v663 = vld [vmem:[%s651 + $0x58] sm:$0xff]
      %v664 = vld [vmem:[%s651 + $0x60] sm:$0xff]
      %v665 = vld [vmem:[%s651 + $0x68] sm:$0xff]
      %v666 = vld [vmem:[%s651 + $0x70] sm:$0xff]
      %v667 = vld [vmem:[%s651 + $0x78] sm:$0xff]
      %vm668 = vcmask 1042432
      %v669 = vrot.slane %v181, 5
      %v670 = vrot.slane %v182, 5
      %v671 = vsel %vm668, %v669, %v670
      %673 = vmatprep.subr.mxu0 0.0
      %674 = vmatpush1.msra.mxu0 %v667
      %675 = vmatprep.subr.mxu0 0.0
      %676 = vmatpush1.msra.mxu0 %v666
      %677 = vmatprep.subr.mxu0 0.0
      %678 = vmatpush1.msra.mxu0 %v665
      %679 = vmatprep.subr.mxu0 0.0
      %680 = vmatpush1.msra.mxu0 %v664
      %681 = vmatprep.subr.mxu0 0.0
      %682 = vmatpush1.msra.mxu0 %v663
      %683 = vmatprep.subr.mxu0 0.0
      %684 = vmatpush1.msra.mxu0 %v662
      %685 = vmatprep.subr.mxu0 0.0
      %686 = vmatpush1.msra.mxu0 %v661
      %687 = vmatprep.subr.mxu0 0.0
      %688 = vmatpush1.msra.mxu0 %v660
      %689 = vmatprep.subr.mxu0 0.0
      %690 = vmatpush1.msra.mxu0 %v659
      %691 = vmatprep.subr.mxu0 0.0
      %692 = vmatpush1.msra.mxu0 %v658
      %693 = vmatprep.subr.mxu0 0.0
      %694 = vmatpush1.msra.mxu0 %v657
      %695 = vmatprep.subr.mxu0 0.0
      %696 = vmatpush1.msra.mxu0 %v656
      %697 = vmatprep.subr.mxu0 0.0
      %698 = vmatpush1.msra.mxu0 %v655
      %699 = vmatprep.subr.mxu0 0.0
      %700 = vmatpush1.msra.mxu0 %v654
      %701 = vmatprep.subr.mxu0 0.0
      %702 = vmatpush1.msra.mxu0 %v653
      %703 = vmatprep.subr.mxu0 0.0
      %704 = vmatpush1.msra.mxu0 %v652
      %705 = vmatprep.subr.mxu0 0.0
      %706 = vmatpush2.msra.mxu0 0.0
      %707 = vmatprep.subr.mxu0 0.0
      %708 = vmatpush2.msra.mxu0 0.0
      %709 = vmatprep.subr.mxu0 0.0
      %710 = vmatpush2.msra.mxu0 0.0
      %711 = vmatprep.subr.mxu0 0.0
      %712 = vmatpush2.msra.mxu0 0.0
      %713 = vmatprep.subr.mxu0 0.0
      %714 = vmatpush2.msra.mxu0 0.0
      %715 = vmatprep.subr.mxu0 0.0
      %716 = vmatpush2.msra.mxu0 0.0
      %717 = vmatprep.subr.mxu0 0.0
      %718 = vmatpush2.msra.mxu0 0.0
      %719 = vmatprep.subr.mxu0 0.0
      %720 = vmatpush2.msra.mxu0 0.0
      %721 = vmatprep.subr.mxu0 0.0
      %722 = vmatpush2.msra.mxu0 0.0
      %723 = vmatprep.subr.mxu0 0.0
      %724 = vmatpush2.msra.mxu0 0.0
      %725 = vmatprep.subr.mxu0 0.0
      %726 = vmatpush2.msra.mxu0 0.0
      %727 = vmatprep.subr.mxu0 0.0
      %728 = vmatpush2.msra.mxu0 0.0
      %729 = vmatprep.subr.mxu0 0.0
      %730 = vmatpush2.msra.mxu0 0.0
      %731 = vmatprep.subr.mxu0 0.0
      %732 = vmatpush2.msra.mxu0 0.0
      %733 = vmatprep.subr.mxu0 0.0
      %734 = vmatpush2.msra.mxu0 0.0
      %735 = vmatprep.subr.mxu0 0.0
      %736 = vmatpush2.msra.mxu0 0.0
      %737 = vmatprep.mubr.f32.mxu0 0.0
      %738 = vmatmul.mubr.f32.gmra.mxu0 %v671
      %v739 = vpop.f32.mrf.mxu0
      %v740 = vadd.f32 0.0, %v739
      %v741 = vpop.f32.mrf.mxu0
      %742 = vdwg.mxu0
      %v743 = vadd.f32 %v650, %v740
      %s744 = scalar_lea.vmem %s1, 768
      %v745 = vld [vmem:[%s744] sm:$0xff]
      %v746 = vld [vmem:[%s744 + $0x8] sm:$0xff]
      %v747 = vld [vmem:[%s744 + $0x10] sm:$0xff]
      %v748 = vld [vmem:[%s744 + $0x18] sm:$0xff]
      %v749 = vld [vmem:[%s744 + $0x20] sm:$0xff]
      %v750 = vld [vmem:[%s744 + $0x28] sm:$0xff]
      %v751 = vld [vmem:[%s744 + $0x30] sm:$0xff]
      %v752 = vld [vmem:[%s744 + $0x38] sm:$0xff]
      %v753 = vld [vmem:[%s744 + $0x40] sm:$0xff]
      %v754 = vld [vmem:[%s744 + $0x48] sm:$0xff]
      %v755 = vld [vmem:[%s744 + $0x50] sm:$0xff]
      %v756 = vld [vmem:[%s744 + $0x58] sm:$0xff]
      %v757 = vld [vmem:[%s744 + $0x60] sm:$0xff]
      %v758 = vld [vmem:[%s744 + $0x68] sm:$0xff]
      %v759 = vld [vmem:[%s744 + $0x70] sm:$0xff]
      %v760 = vld [vmem:[%s744 + $0x78] sm:$0xff]
      %vm761 = vcmask 1041408
      %v762 = vrot.slane %v181, 6
      %v763 = vrot.slane %v182, 6
      %v764 = vsel %vm761, %v762, %v763
      %766 = vmatprep.subr.mxu0 0.0
      %767 = vmatpush1.msra.mxu0 %v760
      %768 = vmatprep.subr.mxu0 0.0
      %769 = vmatpush1.msra.mxu0 %v759
      %770 = vmatprep.subr.mxu0 0.0
      %771 = vmatpush1.msra.mxu0 %v758
      %772 = vmatprep.subr.mxu0 0.0
      %773 = vmatpush1.msra.mxu0 %v757
      %774 = vmatprep.subr.mxu0 0.0
      %775 = vmatpush1.msra.mxu0 %v756
      %776 = vmatprep.subr.mxu0 0.0
      %777 = vmatpush1.msra.mxu0 %v755
      %778 = vmatprep.subr.mxu0 0.0
      %779 = vmatpush1.msra.mxu0 %v754
      %780 = vmatprep.subr.mxu0 0.0
      %781 = vmatpush1.msra.mxu0 %v753
      %782 = vmatprep.subr.mxu0 0.0
      %783 = vmatpush1.msra.mxu0 %v752
      %784 = vmatprep.subr.mxu0 0.0
      %785 = vmatpush1.msra.mxu0 %v751
      %786 = vmatprep.subr.mxu0 0.0
      %787 = vmatpush1.msra.mxu0 %v750
      %788 = vmatprep.subr.mxu0 0.0
      %789 = vmatpush1.msra.mxu0 %v749
      %790 = vmatprep.subr.mxu0 0.0
      %791 = vmatpush1.msra.mxu0 %v748
      %792 = vmatprep.subr.mxu0 0.0
      %793 = vmatpush1.msra.mxu0 %v747
      %794 = vmatprep.subr.mxu0 0.0
      %795 = vmatpush1.msra.mxu0 %v746
      %796 = vmatprep.subr.mxu0 0.0
      %797 = vmatpush1.msra.mxu0 %v745
      %798 = vmatprep.subr.mxu0 0.0
      %799 = vmatpush2.msra.mxu0 0.0
      %800 = vmatprep.subr.mxu0 0.0
      %801 = vmatpush2.msra.mxu0 0.0
      %802 = vmatprep.subr.mxu0 0.0
      %803 = vmatpush2.msra.mxu0 0.0
      %804 = vmatprep.subr.mxu0 0.0
      %805 = vmatpush2.msra.mxu0 0.0
      %806 = vmatprep.subr.mxu0 0.0
      %807 = vmatpush2.msra.mxu0 0.0
      %808 = vmatprep.subr.mxu0 0.0
      %809 = vmatpush2.msra.mxu0 0.0
      %810 = vmatprep.subr.mxu0 0.0
      %811 = vmatpush2.msra.mxu0 0.0
      %812 = vmatprep.subr.mxu0 0.0
      %813 = vmatpush2.msra.mxu0 0.0
      %814 = vmatprep.subr.mxu0 0.0
      %815 = vmatpush2.msra.mxu0 0.0
      %816 = vmatprep.subr.mxu0 0.0
      %817 = vmatpush2.msra.mxu0 0.0
      %818 = vmatprep.subr.mxu0 0.0
      %819 = vmatpush2.msra.mxu0 0.0
      %820 = vmatprep.subr.mxu0 0.0
      %821 = vmatpush2.msra.mxu0 0.0
      %822 = vmatprep.subr.mxu0 0.0
      %823 = vmatpush2.msra.mxu0 0.0
      %824 = vmatprep.subr.mxu0 0.0
      %825 = vmatpush2.msra.mxu0 0.0
      %826 = vmatprep.subr.mxu0 0.0
      %827 = vmatpush2.msra.mxu0 0.0
      %828 = vmatprep.subr.mxu0 0.0
      %829 = vmatpush2.msra.mxu0 0.0
      %830 = vmatprep.mubr.f32.mxu0 0.0
      %831 = vmatmul.mubr.f32.gmra.mxu0 %v764
      %v832 = vpop.f32.mrf.mxu0
      %v833 = vadd.f32 0.0, %v832
      %v834 = vpop.f32.mrf.mxu0
      %835 = vdwg.mxu0
      %v836 = vadd.f32 %v743, %v833
      %837 = vst [vmem:[%s168] sm:$0xff] %v836
      %p838 = scmp.lt.s32.totalorder %s14, 1
      %s839 = scalar_select %p838, %s14, 1
      %s840 = smul.addr %s839, 8
      %s841 = scalar_lea.vmem %s3, %s840
      // Predicated region
      $region33: #{seanet_encoder_forward.11} parent=31 // pred_check
        %p842 = pneg %p100
      $region34: #{seanet_encoder_forward.11} parent=31 // pred_check_branch
        %844 = sbr.rel (%p842) target = $region36
      $region35: #{seanet_encoder_forward.11} parent=31 // pred_region
        _
      $region36: #{seanet_encoder_forward.11} parent=31 // pred_fallthru
        _
    $region32: #{seanet_encoder_forward.11} parent=5 // pred_fallthru
      _
    %p845 = scmp.le.s32.totalorder 2, %s9
    // Predicated region
    $region37: #{seanet_encoder_forward.11} parent=5 // pred_check
      %p846 = pneg %p845
    $region38: #{seanet_encoder_forward.11} parent=5 // pred_check_branch
      %848 = sbr.rel (%p846) target = $region40
    $region39: #{seanet_encoder_forward.11} parent=5 // pred_region
      %s849 = ssub.s32 %s9, 2
      // Predicated region
      $region41: #{seanet_encoder_forward.11} parent=39 // pred_check
        %p850 = pneg %p106
      $region42: #{seanet_encoder_forward.11} parent=39 // pred_check_branch
        %852 = sbr.rel (%p850) target = $region44
      $region43: #{seanet_encoder_forward.11} parent=39 // pred_region
        %p853 = scmp.lt.s32.totalorder %s15, 1
        %s854 = scalar_select %p853, %s15, 1
        %s855 = smul.addr %s854, 8
        %s856 = scalar_lea.vmem %s3, %s855
      $region44: #{seanet_encoder_forward.11} parent=39 // pred_fallthru
        _
    $region40: #{seanet_encoder_forward.11} parent=5 // pred_fallthru
      _
  $region6: #{seanet_encoder_forward.11} parent=0 // loop_footer
    %s13 = sadd.s32 1, %s9
  $region7: #{seanet_encoder_forward.11} parent=0 // loop_footer_branch
    %8 = sbr.rel target = $region3
  $region8: #{seanet_encoder_forward.11} parent=0 // loop_exit
    _

</llo_original>
